<compile_context>
chip_gen: v6e
topology: v6e:2x2x1
jax: 0.10.0
libtpu: 0.0.40
codegen_flags: <defaults>
</compile_context>

<pallas_src>
import functools

import jax
import jax.numpy as jnp
from jax.experimental import pallas as pl
from jax.experimental.pallas import tpu as pltpu


# ----------------------------- Pallas kernel ------------------------------- #

_EPS = 1e-5
# Layer widths from the PyTorch module: input_dim -> 1000 -> 500 -> 100 -> 100
#                                        -> 100 -> 75 -> 50 -> output_dim
_HIDDEN = [1000, 500, 100, 100, 100, 75, 50]
_LANE = 128
_MAX_BATCH_TILE = 128   # rows of the batch processed per grid step


def _round_up(n, m):
    return ((n + m - 1) // m) * m


def _fused_mlp_kernel(*refs, num_layers):
    """One grid step: 7x (bf16 matmul -> +shift -> ReLU) then fc matmul + bias.

    refs layout: x, [w_i, shift_i] * num_layers, w_fc, b_fc, out
    Weights/shifts use constant index_maps so they stay VMEM-resident across
    grid steps; activations never leave VMEM/vregs.
    """
    x_ref = refs[0]
    layer_refs = refs[1:1 + 2 * num_layers]
    wfc_ref = refs[1 + 2 * num_layers]
    bfc_ref = refs[2 + 2 * num_layers]
    o_ref = refs[3 + 2 * num_layers]

    x = x_ref[...].astype(jnp.bfloat16)          # [TB, D0p] bf16
    for i in range(num_layers):                  # statically unrolled
        w = layer_refs[2 * i][...]               # bf16 [Kp, Np] (BN scale folded in)
        t = layer_refs[2 * i + 1][...]           # f32  [1, Np]  (BN shift)
        y = jnp.dot(x, w, preferred_element_type=jnp.float32)
        x = jnp.maximum(y + t, 0.0).astype(jnp.bfloat16)   # f32 epilogue, bf16 carry
    y = jnp.dot(x, wfc_ref[...], preferred_element_type=jnp.float32)
    o_ref[...] = y + bfc_ref[...]                # final fc: dot + bias only


def fused_mlp(qs_pad, kernel_params, tb):
    """Run the padded MLP: grid over batch tiles, weights resident in VMEM."""
    bp, in_pad = qs_pad.shape
    out_pad = kernel_params["fc_w"].shape[1]
    n_layers = len(kernel_params["layers"])

    const_map = lambda i: (0, 0)                 # weights: fetched once, stay resident

    args = [qs_pad]
    in_specs = [pl.BlockSpec((tb, in_pad), lambda i: (i, 0))]
    flops = 0
    weight_bytes = 0
    for (w, t) in kernel_params["layers"]:
        args.extend([w, t])
        in_specs.append(pl.BlockSpec(w.shape, const_map))
        in_specs.append(pl.BlockSpec(t.shape, const_map))
        flops += 2 * bp * w.shape[0] * w.shape[1]
        weight_bytes += w.size * w.dtype.itemsize + t.size * 4
    wfc, bfc = kernel_params["fc_w"], kernel_params["fc_b"]
    args.extend([wfc, bfc])
    in_specs.append(pl.BlockSpec(wfc.shape, const_map))
    in_specs.append(pl.BlockSpec(bfc.shape, const_map))
    flops += 2 * bp * wfc.shape[0] * wfc.shape[1]
    weight_bytes += wfc.size * wfc.dtype.itemsize + bfc.size * 4

    bytes_accessed = bp * in_pad * 4 + weight_bytes + bp * out_pad * 4

    kern = functools.partial(_fused_mlp_kernel, num_layers=n_layers)
    return pl.pallas_call(
        kern,
        out_shape=jax.ShapeDtypeStruct((bp, out_pad), jnp.float32),
        grid=(bp // tb,),
        in_specs=in_specs,
        out_specs=pl.BlockSpec((tb, out_pad), lambda i: (i, 0)),
        compiler_params=pltpu.CompilerParams(
            dimension_semantics=("parallel",),
            vmem_limit_bytes=32 * 1024 * 1024),
        cost_estimate=pl.CostEstimate(
            flops=flops, transcendentals=0, bytes_accessed=bytes_accessed),
    )(*args)


# ------------------------------ Model glue --------------------------------- #

def init_raw_params(key, input_dim, output_dim, vocab_size):
    """Deterministic synthetic parameters matching the PyTorch module shapes."""
    dims = [input_dim] + _HIDDEN
    keys = jax.random.split(key, len(_HIDDEN) + 2)
    layers = []
    for i, (din, dout) in enumerate(zip(dims[:-1], dims[1:])):
        k_w, k_b, k_g, k_be, k_m, k_v = jax.random.split(keys[i], 6)
        layers.append(dict(
            w=jax.random.normal(k_w, (din, dout), jnp.float32) / jnp.sqrt(din),
            b=0.01 * jax.random.normal(k_b, (dout,), jnp.float32),
            gamma=1.0 + 0.1 * jax.random.normal(k_g, (dout,), jnp.float32),
            beta=0.1 * jax.random.normal(k_be, (dout,), jnp.float32),
            mean=0.1 * jax.random.normal(k_m, (dout,), jnp.float32),
            var=jnp.abs(1.0 + 0.1 * jax.random.normal(k_v, (dout,), jnp.float32)),
        ))
    k_w, k_b = jax.random.split(keys[-2])
    w_fc = jax.random.normal(k_w, (_HIDDEN[-1], output_dim), jnp.float32) / jnp.sqrt(_HIDDEN[-1])
    b_fc = 0.01 * jax.random.normal(k_b, (output_dim,), jnp.float32)
    # Synthetic stand-in for model_tags.wv.vectors (vocab_size x output_dim).
    tag_table = jax.random.normal(keys[-1], (vocab_size, output_dim), jnp.float32)
    return dict(layers=layers, fc=(w_fc, b_fc), tag_table=tag_table)


def fold_and_pad(raw, input_dim, output_dim):
    """Fold eval-mode BN into the weights (+shift), cast to bf16, pad to 128 lanes."""
    dims = [input_dim] + _HIDDEN
    pdims = [_round_up(d, _LANE) for d in dims]
    layers = []
    for i, lyr in enumerate(raw["layers"]):
        din, dout = dims[i], dims[i + 1]
        pin, pout = pdims[i], pdims[i + 1]
        scale = lyr["gamma"] / jnp.sqrt(lyr["var"] + _EPS)
        shift = lyr["beta"] + (lyr["b"] - lyr["mean"]) * scale
        w_folded = lyr["w"] * scale[None, :]     # BN scale folded into the weight
        w_pad = jnp.zeros((pin, pout), jnp.float32).at[:din, :dout].set(w_folded)
        t_pad = jnp.zeros((1, pout), jnp.float32).at[0, :dout].set(shift)
        layers.append((w_pad.astype(jnp.bfloat16), t_pad))

    w_fc, b_fc = raw["fc"]
    pin, pout = pdims[-1], _round_up(output_dim, _LANE)
    w_fc_pad = (jnp.zeros((pin, pout), jnp.float32)
                .at[:_HIDDEN[-1], :output_dim].set(w_fc))
    b_fc_pad = jnp.zeros((1, pout), jnp.float32).at[0, :output_dim].set(b_fc)
    return dict(layers=layers,
                fc_w=w_fc_pad.astype(jnp.bfloat16),
                fc_b=b_fc_pad,
                in_pad=pdims[0],
                out_dim=output_dim)


def predict(kernel_params, qs):
    """self.predict(qs): whole L1 + fc in one fused Pallas kernel."""
    b, d = qs.shape
    tb = min(_MAX_BATCH_TILE, _round_up(b, 16))   # bf16 sublane-aligned batch tile
    bp = _round_up(b, tb)
    qs_pad = jnp.pad(qs, ((0, bp - b), (0, kernel_params["in_pad"] - d)))
    out_pad = fused_mlp(qs_pad, kernel_params, tb)
    return out_pad[:b, :kernel_params["out_dim"]]


def forward(kernel_params, raw_params, qs, tag_indices):
    """DNN.forward(qs, tags) -> (tag_model_op, tag_op)."""
    tag_model_op = predict(kernel_params, qs)
    # TODO(synk): gensim string-key lookup has no Pallas equivalent; tags are
    # integer indices gathered from a synthetic embedding table in plain JAX.
    tag_op = raw_params["tag_table"][tag_indices]
    return tag_model_op, tag_op


def reference_predict(raw, qs):
    """Pure-JAX mirror of the kernel math (BN folded, bf16 weights/activations)."""
    x = qs.astype(jnp.bfloat16)
    for lyr in raw["layers"]:
        scale = lyr["gamma"] / jnp.sqrt(lyr["var"] + _EPS)
        shift = lyr["beta"] + (lyr["b"] - lyr["mean"]) * scale
        w = (lyr["w"] * scale[None, :]).astype(jnp.bfloat16)
        y = jnp.dot(x, w, preferred_element_type=jnp.float32)
        x = jnp.maximum(y + shift, 0.0).astype(jnp.bfloat16)
    w_fc, b_fc = raw["fc"]
    y = jnp.dot(x, w_fc.astype(jnp.bfloat16), preferred_element_type=jnp.float32)
    return y + b_fc


# --------------------------------- Main ------------------------------------ #

if __name__ == "__main__":
    INPUT_DIM = 32
    OUTPUT_DIM = 16
    BATCH = 8
    VOCAB = 20

    key = jax.random.PRNGKey(0)
    k_params, k_qs, k_tags = jax.random.split(key, 3)

    raw_params = init_raw_params(k_params, INPUT_DIM, OUTPUT_DIM, VOCAB)
    kernel_params = fold_and_pad(raw_params, INPUT_DIM, OUTPUT_DIM)

    qs = jax.random.normal(k_qs, (BATCH, INPUT_DIM), jnp.float32)
    tag_indices = jax.random.randint(k_tags, (BATCH,), 0, VOCAB)

    tag_model_op, tag_op = forward(kernel_params, raw_params, qs, tag_indices)
    jax.block_until_ready((tag_model_op, tag_op))

    assert tag_model_op.shape == (BATCH, OUTPUT_DIM)
    assert tag_op.shape == (BATCH, OUTPUT_DIM)
    assert bool(jnp.all(jnp.isfinite(tag_model_op)))

    ref = reference_predict(raw_params, qs)
    rel_err = float(jnp.max(jnp.abs(tag_model_op - ref)) /
                    (jnp.max(jnp.abs(ref)) + 1e-6))
    assert rel_err < 2e-2, f"mismatch vs reference: rel_err={rel_err}"

    print("KERNEL_OK")
</pallas_src>

<mosaic_0001>
module attributes {stable_mosaic.version = 11 : i64} {
  func.func @_fused_mlp_kernel(%arg0: i32, %arg1: memref<16x128xf32, #tpu.memory_space<vmem>>, %arg2: memref<128x1024xbf16, #tpu.memory_space<vmem>>, %arg3: memref<1x1024xf32, #tpu.memory_space<vmem>>, %arg4: memref<1024x512xbf16, #tpu.memory_space<vmem>>, %arg5: memref<1x512xf32, #tpu.memory_space<vmem>>, %arg6: memref<512x128xbf16, #tpu.memory_space<vmem>>, %arg7: memref<1x128xf32, #tpu.memory_space<vmem>>, %arg8: memref<128x128xbf16, #tpu.memory_space<vmem>>, %arg9: memref<1x128xf32, #tpu.memory_space<vmem>>, %arg10: memref<128x128xbf16, #tpu.memory_space<vmem>>, %arg11: memref<1x128xf32, #tpu.memory_space<vmem>>, %arg12: memref<128x128xbf16, #tpu.memory_space<vmem>>, %arg13: memref<1x128xf32, #tpu.memory_space<vmem>>, %arg14: memref<128x128xbf16, #tpu.memory_space<vmem>>, %arg15: memref<1x128xf32, #tpu.memory_space<vmem>>, %arg16: memref<128x128xbf16, #tpu.memory_space<vmem>>, %arg17: memref<1x128xf32, #tpu.memory_space<vmem>>, %arg18: memref<16x128xf32, #tpu.memory_space<vmem>>) attributes {dimension_semantics = [#tpu.dimension_semantics<parallel>], iteration_bounds = array<i64: 1>, scalar_prefetch = 0 : i64, scratch_operands = 0 : i64, tpu.core_type = #tpu.core_type<tc>, window_params = [{transform_indices = @transform_0, window_bounds = array<i64: 16, 128>}, {pipeline_mode = #tpu.pipeline_mode<synchronous>, transform_indices = @transform_1, window_bounds = array<i64: 128, 1024>}, {pipeline_mode = #tpu.pipeline_mode<synchronous>, transform_indices = @transform_2, window_bounds = array<i64: 1, 1024>}, {pipeline_mode = #tpu.pipeline_mode<synchronous>, transform_indices = @transform_3, window_bounds = array<i64: 1024, 512>}, {pipeline_mode = #tpu.pipeline_mode<synchronous>, transform_indices = @transform_4, window_bounds = array<i64: 1, 512>}, {pipeline_mode = #tpu.pipeline_mode<synchronous>, transform_indices = @transform_5, window_bounds = array<i64: 512, 128>}, {pipeline_mode = #tpu.pipeline_mode<synchronous>, transform_indices = @transform_6, window_bounds = array<i64: 1, 128>}, {pipeline_mode = #tpu.pipeline_mode<synchronous>, transform_indices = @transform_7, window_bounds = array<i64: 128, 128>}, {pipeline_mode = #tpu.pipeline_mode<synchronous>, transform_indices = @transform_8, window_bounds = array<i64: 1, 128>}, {pipeline_mode = #tpu.pipeline_mode<synchronous>, transform_indices = @transform_9, window_bounds = array<i64: 128, 128>}, {pipeline_mode = #tpu.pipeline_mode<synchronous>, transform_indices = @transform_10, window_bounds = array<i64: 1, 128>}, {pipeline_mode = #tpu.pipeline_mode<synchronous>, transform_indices = @transform_11, window_bounds = array<i64: 128, 128>}, {pipeline_mode = #tpu.pipeline_mode<synchronous>, transform_indices = @transform_12, window_bounds = array<i64: 1, 128>}, {pipeline_mode = #tpu.pipeline_mode<synchronous>, transform_indices = @transform_13, window_bounds = array<i64: 128, 128>}, {pipeline_mode = #tpu.pipeline_mode<synchronous>, transform_indices = @transform_14, window_bounds = array<i64: 1, 128>}, {pipeline_mode = #tpu.pipeline_mode<synchronous>, transform_indices = @transform_15, window_bounds = array<i64: 128, 128>}, {pipeline_mode = #tpu.pipeline_mode<synchronous>, transform_indices = @transform_16, window_bounds = array<i64: 1, 128>}, {transform_indices = @transform_17, window_bounds = array<i64: 16, 128>}]} {
    %c0 = arith.constant 0 : index
    %c0_0 = arith.constant 0 : index
    %0 = vector.load %arg1[%c0, %c0_0] : memref<16x128xf32, #tpu.memory_space<vmem>>, vector<16x128xf32>
    %1 = arith.truncf %0 : vector<16x128xf32> to vector<16x128xbf16>
    %c0_1 = arith.constant 0 : index
    %c0_2 = arith.constant 0 : index
    %2 = vector.load %arg2[%c0_1, %c0_2] : memref<128x1024xbf16, #tpu.memory_space<vmem>>, vector<128x1024xbf16>
    %c0_3 = arith.constant 0 : index
    %c0_4 = arith.constant 0 : index
    %3 = vector.load %arg3[%c0_3, %c0_4] : memref<1x1024xf32, #tpu.memory_space<vmem>>, vector<1x1024xf32>
    %cst = arith.constant dense<0.000000e+00> : vector<16x1024xf32>
    %4 = tpu.matmul %1, %2, %cst {dimension_numbers = #tpu.dot_dimension_numbers<[1], [0], [0], [1], [0, 0, 1, 1], [], []>} : vector<16x128xbf16>, vector<128x1024xbf16>, vector<16x1024xf32> -> vector<16x1024xf32>
    %5 = vector.broadcast %3 : vector<1x1024xf32> to vector<16x1024xf32>
    %6 = arith.addf %4, %5 : vector<16x1024xf32>
    %cst_5 = arith.constant 0.000000e+00 : f32
    %7 = vector.broadcast %cst_5 : f32 to vector<16x1024xf32>
    %8 = arith.maximumf %6, %7 : vector<16x1024xf32>
    %9 = arith.truncf %8 : vector<16x1024xf32> to vector<16x1024xbf16>
    %c0_6 = arith.constant 0 : index
    %c0_7 = arith.constant 0 : index
    %10 = vector.load %arg4[%c0_6, %c0_7] : memref<1024x512xbf16, #tpu.memory_space<vmem>>, vector<1024x512xbf16>
    %c0_8 = arith.constant 0 : index
    %c0_9 = arith.constant 0 : index
    %11 = vector.load %arg5[%c0_8, %c0_9] : memref<1x512xf32, #tpu.memory_space<vmem>>, vector<1x512xf32>
    %cst_10 = arith.constant dense<0.000000e+00> : vector<16x512xf32>
    %12 = tpu.matmul %9, %10, %cst_10 {dimension_numbers = #tpu.dot_dimension_numbers<[1], [0], [0], [1], [0, 0, 1, 1], [], []>} : vector<16x1024xbf16>, vector<1024x512xbf16>, vector<16x512xf32> -> vector<16x512xf32>
    %13 = vector.broadcast %11 : vector<1x512xf32> to vector<16x512xf32>
    %14 = arith.addf %12, %13 : vector<16x512xf32>
    %cst_11 = arith.constant 0.000000e+00 : f32
    %15 = vector.broadcast %cst_11 : f32 to vector<16x512xf32>
    %16 = arith.maximumf %14, %15 : vector<16x512xf32>
    %17 = arith.truncf %16 : vector<16x512xf32> to vector<16x512xbf16>
    %c0_12 = arith.constant 0 : index
    %c0_13 = arith.constant 0 : index
    %18 = vector.load %arg6[%c0_12, %c0_13] : memref<512x128xbf16, #tpu.memory_space<vmem>>, vector<512x128xbf16>
    %c0_14 = arith.constant 0 : index
    %c0_15 = arith.constant 0 : index
    %19 = vector.load %arg7[%c0_14, %c0_15] : memref<1x128xf32, #tpu.memory_space<vmem>>, vector<1x128xf32>
    %cst_16 = arith.constant dense<0.000000e+00> : vector<16x128xf32>
    %20 = tpu.matmul %17, %18, %cst_16 {dimension_numbers = #tpu.dot_dimension_numbers<[1], [0], [0], [1], [0, 0, 1, 1], [], []>} : vector<16x512xbf16>, vector<512x128xbf16>, vector<16x128xf32> -> vector<16x128xf32>
    %21 = vector.broadcast %19 : vector<1x128xf32> to vector<16x128xf32>
    %22 = arith.addf %20, %21 : vector<16x128xf32>
    %cst_17 = arith.constant 0.000000e+00 : f32
    %23 = vector.broadcast %cst_17 : f32 to vector<16x128xf32>
    %24 = arith.maximumf %22, %23 : vector<16x128xf32>
    %25 = arith.truncf %24 : vector<16x128xf32> to vector<16x128xbf16>
    %c0_18 = arith.constant 0 : index
    %c0_19 = arith.constant 0 : index
    %26 = vector.load %arg8[%c0_18, %c0_19] : memref<128x128xbf16, #tpu.memory_space<vmem>>, vector<128x128xbf16>
    %c0_20 = arith.constant 0 : index
    %c0_21 = arith.constant 0 : index
    %27 = vector.load %arg9[%c0_20, %c0_21] : memref<1x128xf32, #tpu.memory_space<vmem>>, vector<1x128xf32>
    %cst_22 = arith.constant dense<0.000000e+00> : vector<16x128xf32>
    %28 = tpu.matmul %25, %26, %cst_22 {dimension_numbers = #tpu.dot_dimension_numbers<[1], [0], [0], [1], [0, 0, 1, 1], [], []>} : vector<16x128xbf16>, vector<128x128xbf16>, vector<16x128xf32> -> vector<16x128xf32>
    %29 = vector.broadcast %27 : vector<1x128xf32> to vector<16x128xf32>
    %30 = arith.addf %28, %29 : vector<16x128xf32>
    %cst_23 = arith.constant 0.000000e+00 : f32
    %31 = vector.broadcast %cst_23 : f32 to vector<16x128xf32>
    %32 = arith.maximumf %30, %31 : vector<16x128xf32>
    %33 = arith.truncf %32 : vector<16x128xf32> to vector<16x128xbf16>
    %c0_24 = arith.constant 0 : index
    %c0_25 = arith.constant 0 : index
    %34 = vector.load %arg10[%c0_24, %c0_25] : memref<128x128xbf16, #tpu.memory_space<vmem>>, vector<128x128xbf16>
    %c0_26 = arith.constant 0 : index
    %c0_27 = arith.constant 0 : index
    %35 = vector.load %arg11[%c0_26, %c0_27] : memref<1x128xf32, #tpu.memory_space<vmem>>, vector<1x128xf32>
    %cst_28 = arith.constant dense<0.000000e+00> : vector<16x128xf32>
    %36 = tpu.matmul %33, %34, %cst_28 {dimension_numbers = #tpu.dot_dimension_numbers<[1], [0], [0], [1], [0, 0, 1, 1], [], []>} : vector<16x128xbf16>, vector<128x128xbf16>, vector<16x128xf32> -> vector<16x128xf32>
    %37 = vector.broadcast %35 : vector<1x128xf32> to vector<16x128xf32>
    %38 = arith.addf %36, %37 : vector<16x128xf32>
    %cst_29 = arith.constant 0.000000e+00 : f32
    %39 = vector.broadcast %cst_29 : f32 to vector<16x128xf32>
    %40 = arith.maximumf %38, %39 : vector<16x128xf32>
    %41 = arith.truncf %40 : vector<16x128xf32> to vector<16x128xbf16>
    %c0_30 = arith.constant 0 : index
    %c0_31 = arith.constant 0 : index
    %42 = vector.load %arg12[%c0_30, %c0_31] : memref<128x128xbf16, #tpu.memory_space<vmem>>, vector<128x128xbf16>
    %c0_32 = arith.constant 0 : index
    %c0_33 = arith.constant 0 : index
    %43 = vector.load %arg13[%c0_32, %c0_33] : memref<1x128xf32, #tpu.memory_space<vmem>>, vector<1x128xf32>
    %cst_34 = arith.constant dense<0.000000e+00> : vector<16x128xf32>
    %44 = tpu.matmul %41, %42, %cst_34 {dimension_numbers = #tpu.dot_dimension_numbers<[1], [0], [0], [1], [0, 0, 1, 1], [], []>} : vector<16x128xbf16>, vector<128x128xbf16>, vector<16x128xf32> -> vector<16x128xf32>
    %45 = vector.broadcast %43 : vector<1x128xf32> to vector<16x128xf32>
    %46 = arith.addf %44, %45 : vector<16x128xf32>
    %cst_35 = arith.constant 0.000000e+00 : f32
    %47 = vector.broadcast %cst_35 : f32 to vector<16x128xf32>
    %48 = arith.maximumf %46, %47 : vector<16x128xf32>
    %49 = arith.truncf %48 : vector<16x128xf32> to vector<16x128xbf16>
    %c0_36 = arith.constant 0 : index
    %c0_37 = arith.constant 0 : index
    %50 = vector.load %arg14[%c0_36, %c0_37] : memref<128x128xbf16, #tpu.memory_space<vmem>>, vector<128x128xbf16>
    %c0_38 = arith.constant 0 : index
    %c0_39 = arith.constant 0 : index
    %51 = vector.load %arg15[%c0_38, %c0_39] : memref<1x128xf32, #tpu.memory_space<vmem>>, vector<1x128xf32>
    %cst_40 = arith.constant dense<0.000000e+00> : vector<16x128xf32>
    %52 = tpu.matmul %49, %50, %cst_40 {dimension_numbers = #tpu.dot_dimension_numbers<[1], [0], [0], [1], [0, 0, 1, 1], [], []>} : vector<16x128xbf16>, vector<128x128xbf16>, vector<16x128xf32> -> vector<16x128xf32>
    %53 = vector.broadcast %51 : vector<1x128xf32> to vector<16x128xf32>
    %54 = arith.addf %52, %53 : vector<16x128xf32>
    %cst_41 = arith.constant 0.000000e+00 : f32
    %55 = vector.broadcast %cst_41 : f32 to vector<16x128xf32>
    %56 = arith.maximumf %54, %55 : vector<16x128xf32>
    %57 = arith.truncf %56 : vector<16x128xf32> to vector<16x128xbf16>
    %c0_42 = arith.constant 0 : index
    %c0_43 = arith.constant 0 : index
    %58 = vector.load %arg16[%c0_42, %c0_43] : memref<128x128xbf16, #tpu.memory_space<vmem>>, vector<128x128xbf16>
    %cst_44 = arith.constant dense<0.000000e+00> : vector<16x128xf32>
    %59 = tpu.matmul %57, %58, %cst_44 {dimension_numbers = #tpu.dot_dimension_numbers<[1], [0], [0], [1], [0, 0, 1, 1], [], []>} : vector<16x128xbf16>, vector<128x128xbf16>, vector<16x128xf32> -> vector<16x128xf32>
    %c0_45 = arith.constant 0 : index
    %c0_46 = arith.constant 0 : index
    %60 = vector.load %arg17[%c0_45, %c0_46] : memref<1x128xf32, #tpu.memory_space<vmem>>, vector<1x128xf32>
    %61 = vector.broadcast %60 : vector<1x128xf32> to vector<16x128xf32>
    %62 = arith.addf %59, %61 : vector<16x128xf32>
    %c0_47 = arith.constant 0 : index
    %c0_48 = arith.constant 0 : index
    %63 = vector.load %arg18[%c0_47, %c0_48] : memref<16x128xf32, #tpu.memory_space<vmem>>, vector<16x128xf32>
    tpu.vector_store %arg18[%c0_47, %c0_48], %62 {strides = array<i32>} : memref<16x128xf32, #tpu.memory_space<vmem>>, vector<16x128xf32>,
    return
  }
  func.func @transform_0(%arg0: i32) -> (i32, i32) {
    %c0_i32 = arith.constant 0 : i32
    %c0_i32_0 = arith.constant 0 : i32
    return %arg0, %c0_i32 : i32, i32
  }
  func.func @transform_1(%arg0: i32) -> (i32, i32) {
    %c0_i32 = arith.constant 0 : i32
    %c0_i32_0 = arith.constant 0 : i32
    %c0_i32_1 = arith.constant 0 : i32
    return %c0_i32, %c0_i32_0 : i32, i32
  }
  func.func @transform_2(%arg0: i32) -> (i32, i32) {
    %c0_i32 = arith.constant 0 : i32
    %c0_i32_0 = arith.constant 0 : i32
    %c0_i32_1 = arith.constant 0 : i32
    return %c0_i32, %c0_i32_0 : i32, i32
  }
  func.func @transform_3(%arg0: i32) -> (i32, i32) {
    %c0_i32 = arith.constant 0 : i32
    %c0_i32_0 = arith.constant 0 : i32
    %c0_i32_1 = arith.constant 0 : i32
    return %c0_i32, %c0_i32_0 : i32, i32
  }
  func.func @transform_4(%arg0: i32) -> (i32, i32) {
    %c0_i32 = arith.constant 0 : i32
    %c0_i32_0 = arith.constant 0 : i32
    %c0_i32_1 = arith.constant 0 : i32
    return %c0_i32, %c0_i32_0 : i32, i32
  }
  func.func @transform_5(%arg0: i32) -> (i32, i32) {
    %c0_i32 = arith.constant 0 : i32
    %c0_i32_0 = arith.constant 0 : i32
    %c0_i32_1 = arith.constant 0 : i32
    return %c0_i32, %c0_i32_0 : i32, i32
  }
  func.func @transform_6(%arg0: i32) -> (i32, i32) {
    %c0_i32 = arith.constant 0 : i32
    %c0_i32_0 = arith.constant 0 : i32
    %c0_i32_1 = arith.constant 0 : i32
    return %c0_i32, %c0_i32_0 : i32, i32
  }
  func.func @transform_7(%arg0: i32) -> (i32, i32) {
    %c0_i32 = arith.constant 0 : i32
    %c0_i32_0 = arith.constant 0 : i32
    %c0_i32_1 = arith.constant 0 : i32
    return %c0_i32, %c0_i32_0 : i32, i32
  }
  func.func @transform_8(%arg0: i32) -> (i32, i32) {
    %c0_i32 = arith.constant 0 : i32
    %c0_i32_0 = arith.constant 0 : i32
    %c0_i32_1 = arith.constant 0 : i32
    return %c0_i32, %c0_i32_0 : i32, i32
  }
  func.func @transform_9(%arg0: i32) -> (i32, i32) {
    %c0_i32 = arith.constant 0 : i32
    %c0_i32_0 = arith.constant 0 : i32
    %c0_i32_1 = arith.constant 0 : i32
    return %c0_i32, %c0_i32_0 : i32, i32
  }
  func.func @transform_10(%arg0: i32) -> (i32, i32) {
    %c0_i32 = arith.constant 0 : i32
    %c0_i32_0 = arith.constant 0 : i32
    %c0_i32_1 = arith.constant 0 : i32
    return %c0_i32, %c0_i32_0 : i32, i32
  }
  func.func @transform_11(%arg0: i32) -> (i32, i32) {
    %c0_i32 = arith.constant 0 : i32
    %c0_i32_0 = arith.constant 0 : i32
    %c0_i32_1 = arith.constant 0 : i32
    return %c0_i32, %c0_i32_0 : i32, i32
  }
  func.func @transform_12(%arg0: i32) -> (i32, i32) {
    %c0_i32 = arith.constant 0 : i32
    %c0_i32_0 = arith.constant 0 : i32
    %c0_i32_1 = arith.constant 0 : i32
    return %c0_i32, %c0_i32_0 : i32, i32
  }
  func.func @transform_13(%arg0: i32) -> (i32, i32) {
    %c0_i32 = arith.constant 0 : i32
    %c0_i32_0 = arith.constant 0 : i32
    %c0_i32_1 = arith.constant 0 : i32
    return %c0_i32, %c0_i32_0 : i32, i32
  }
  func.func @transform_14(%arg0: i32) -> (i32, i32) {
    %c0_i32 = arith.constant 0 : i32
    %c0_i32_0 = arith.constant 0 : i32
    %c0_i32_1 = arith.constant 0 : i32
    return %c0_i32, %c0_i32_0 : i32, i32
  }
  func.func @transform_15(%arg0: i32) -> (i32, i32) {
    %c0_i32 = arith.constant 0 : i32
    %c0_i32_0 = arith.constant 0 : i32
    %c0_i32_1 = arith.constant 0 : i32
    return %c0_i32, %c0_i32_0 : i32, i32
  }
  func.func @transform_16(%arg0: i32) -> (i32, i32) {
    %c0_i32 = arith.constant 0 : i32
    %c0_i32_0 = arith.constant 0 : i32
    %c0_i32_1 = arith.constant 0 : i32
    return %c0_i32, %c0_i32_0 : i32, i32
  }
  func.func @transform_17(%arg0: i32) -> (i32, i32) {
    %c0_i32 = arith.constant 0 : i32
    %c0_i32_0 = arith.constant 0 : i32
    return %arg0, %c0_i32 : i32, i32
  }
}

</mosaic_0001>

<llo_original>
// kernel: tpu_custom_call.1
$region0: #{tpu_custom_call.1}
  #allocation0 [shape = 'u32[]', space=smem, size = 0x4, offset = 0x4, fixed_abs, tag = 'smem constant byte address 0x4 - core index']
  #allocation1 [shape = 'u32[144,128]{1,0:T(1,128)}', space=vmem, size = 0x12000, scoped, tag = 'internal scratch']
  %s0 = inlined_call_operand.hbm [shape: f32[16,128], index: 0, kind: input, shape index: {}]
  %s1 = inlined_call_operand.hbm [shape: bf16[128,1024], index: 1, kind: input, shape index: {}]
  %s2 = inlined_call_operand.hbm [shape: f32[1,1024], index: 2, kind: input, shape index: {}]
  %s3 = inlined_call_operand.hbm [shape: bf16[1024,512], index: 3, kind: input, shape index: {}]
  %s4 = inlined_call_operand.vmem [shape: f32[1,512], index: 4, kind: input, shape index: {}]
  %s5 = inlined_call_operand.hbm [shape: bf16[512,128], index: 5, kind: input, shape index: {}]
  %s6 = inlined_call_operand.vmem [shape: f32[1,128], index: 6, kind: input, shape index: {}]
  %s7 = inlined_call_operand.hbm [shape: bf16[128,128], index: 7, kind: input, shape index: {}]
  %s8 = inlined_call_operand.vmem [shape: f32[1,128], index: 8, kind: input, shape index: {}]
  %s9 = inlined_call_operand.hbm [shape: bf16[128,128], index: 9, kind: input, shape index: {}]
  %s10 = inlined_call_operand.vmem [shape: f32[1,128], index: 10, kind: input, shape index: {}]
  %s11 = inlined_call_operand.hbm [shape: bf16[128,128], index: 11, kind: input, shape index: {}]
  %s12 = inlined_call_operand.vmem [shape: f32[1,128], index: 12, kind: input, shape index: {}]
  %s13 = inlined_call_operand.hbm [shape: bf16[128,128], index: 13, kind: input, shape index: {}]
  %s14 = inlined_call_operand.vmem [shape: f32[1,128], index: 14, kind: input, shape index: {}]
  %s15 = inlined_call_operand.hbm [shape: bf16[128,128], index: 15, kind: input, shape index: {}]
  %s16 = inlined_call_operand.vmem [shape: f32[1,128], index: 16, kind: input, shape index: {}]
  %s17 = inlined_call_operand.hbm [shape: f32[16,128], index: 17, kind: output, shape index: {}]
  %s18 = sld [smem:[#allocation0]]
  $region118: #{tpu_custom_call.1} parent=0
    _
  %s20 = ssub.s32 1, %s18
  %s21 = scalar_select 0, %s20, %s18
  $region1: #{tpu_custom_call.1} parent=0
    #allocation2 [shape = 'u8[8192]{0}', space=vmem, size = 0x2000, scoped, tag = 'input window, operand 0, single buffered']
    #allocation3 [shape = 's32[1]{0}', space=sflag, size = 0x4, scoped, tag = 'scoped memory for tpu_custom_call.1']
    #allocation4 [shape = 's32[1]{0}', space=sflag, size = 0x4, scoped, tag = 'scoped memory for tpu_custom_call.1']
    #allocation5 [shape = 'u8[262144]{0}', space=vmem, size = 0x40000, scoped, tag = 'input window, operand 1, single buffered']
    #allocation6 [shape = 's32[1]{0}', space=sflag, size = 0x4, scoped, tag = 'scoped memory for tpu_custom_call.1']
    #allocation7 [shape = 'u8[4096]{0}', space=vmem, size = 0x1000, scoped, tag = 'input window, operand 2, single buffered']
    #allocation8 [shape = 'u8[1048576]{0}', space=vmem, size = 0x100000, scoped, tag = 'input window, operand 3, single buffered']
    #allocation9 [shape = 's32[1]{0}', space=sflag, size = 0x4, scoped, tag = 'scoped memory for tpu_custom_call.1']
    #allocation10 [shape = 'u8[131072]{0}', space=vmem, size = 0x20000, scoped, tag = 'input window, operand 5, single buffered']
    #allocation11 [shape = 'u8[32768]{0}', space=vmem, size = 0x8000, scoped, tag = 'input window, operand 7, single buffered']
    #allocation12 [shape = 's32[1]{0}', space=sflag, size = 0x4, scoped, tag = 'scoped memory for tpu_custom_call.1']
    #allocation13 [shape = 'u8[32768]{0}', space=vmem, size = 0x8000, scoped, tag = 'input window, operand 9, single buffered']
    #allocation14 [shape = 'u8[32768]{0}', space=vmem, size = 0x8000, scoped, tag = 'input window, operand 11, single buffered']
    #allocation15 [shape = 's32[1]{0}', space=sflag, size = 0x4, scoped, tag = 'scoped memory for tpu_custom_call.1']
    #allocation16 [shape = 'u8[32768]{0}', space=vmem, size = 0x8000, scoped, tag = 'input window, operand 13, single buffered']
    #allocation17 [shape = 'u8[32768]{0}', space=vmem, size = 0x8000, scoped, tag = 'input window, operand 15, single buffered']
    #allocation18 [shape = 's32[1]{0}', space=sflag, size = 0x4, scoped, tag = 'scoped memory for tpu_custom_call.1']
    #allocation19 [shape = 'u8[8192]{0}', space=vmem, size = 0x2000, scoped, tag = 'output window, operand 0, single buffered']
    %22 = vsyncpa [#allocation3], 0
    %23 = vsyncpa [#allocation6], 0
    %24 = vsyncpa [#allocation9], 0
    %25 = vsyncpa [#allocation12], 0
    %26 = vsyncpa [#allocation15], 0
    %27 = vsyncpa [#allocation18], 0
    %28 = vsyncpa [#allocation4], 0
    // Predicated region
    $region2: #{tpu_custom_call.1} parent=1 // pred_check
      _
    $region3: #{tpu_custom_call.1} parent=1 // pred_check_branch
      %30 = sbr.rel (0) target = $region5
    $region4: #{tpu_custom_call.1} parent=1 // pred_region
      %s32 = ssub.s32 256, 256
      %33 = vsyncadd [#allocation3], %s32
      %s34 = sshll.u32 [#allocation2], 4
      %s35 = int_to_ptr.vmem [resolvable:$true] %s34
      %40 = dma.hbm_to_vmem [thread:$0]  %s0, 256, %s35, [#allocation3], 128, 128, 8
    $region5: #{tpu_custom_call.1} parent=1 // pred_fallthru
      _
    // Predicated region
    $region6: #{tpu_custom_call.1} parent=1 // pred_check
      _
    $region7: #{tpu_custom_call.1} parent=1 // pred_check_branch
      %42 = sbr.rel (0) target = $region9
    $region8: #{tpu_custom_call.1} parent=1 // pred_region
      %s44 = ssub.s32 8192, 8192
      %45 = vsyncadd [#allocation6], %s44
      %s46 = sshll.u32 [#allocation5], 4
      %s47 = int_to_ptr.vmem [resolvable:$true] %s46
      %52 = dma.hbm_to_vmem [thread:$0]  %s1, 8192, %s47, [#allocation6], 512, 512, 32
    $region9: #{tpu_custom_call.1} parent=1 // pred_fallthru
      _
    // Predicated region
    $region10: #{tpu_custom_call.1} parent=1 // pred_check
      _
    $region11: #{tpu_custom_call.1} parent=1 // pred_check_branch
      %54 = sbr.rel (0) target = $region13
    $region12: #{tpu_custom_call.1} parent=1 // pred_region
      %s56 = ssub.s32 128, 128
      %57 = vsyncadd [#allocation6], %s56
      %s59 = sshll.u32 [#allocation7], 4
      %s60 = int_to_ptr.vmem [resolvable:$true] %s59
      %62 = dma.hbm_to_vmem [thread:$0]  %s2, 128, %s60, [#allocation6]
    $region13: #{tpu_custom_call.1} parent=1 // pred_fallthru
      _
    // Predicated region
    $region14: #{tpu_custom_call.1} parent=1 // pred_check
      _
    $region15: #{tpu_custom_call.1} parent=1 // pred_check_branch
      %64 = sbr.rel (0) target = $region17
    $region16: #{tpu_custom_call.1} parent=1 // pred_region
      %s66 = ssub.s32 32768, 32768
      %67 = vsyncadd [#allocation9], %s66
      %s68 = sshll.u32 [#allocation8], 4
      %s69 = int_to_ptr.vmem [resolvable:$true] %s68
      %74 = dma.hbm_to_vmem [thread:$0]  %s3, 32768, %s69, [#allocation9], 256, 256, 16
    $region17: #{tpu_custom_call.1} parent=1 // pred_fallthru
      _
    // Predicated region
    $region18: #{tpu_custom_call.1} parent=1 // pred_check
      _
    $region19: #{tpu_custom_call.1} parent=1 // pred_check_branch
      %76 = sbr.rel (0) target = $region21
    $region20: #{tpu_custom_call.1} parent=1 // pred_region
      _
    $region21: #{tpu_custom_call.1} parent=1 // pred_fallthru
      _
    // Predicated region
    $region22: #{tpu_custom_call.1} parent=1 // pred_check
      _
    $region23: #{tpu_custom_call.1} parent=1 // pred_check_branch
      %78 = sbr.rel (0) target = $region25
    $region24: #{tpu_custom_call.1} parent=1 // pred_region
      %s80 = ssub.s32 4096, 4096
      %81 = vsyncadd [#allocation9], %s80
      %s82 = sshll.u32 [#allocation10], 4
      %s83 = int_to_ptr.vmem [resolvable:$true] %s82
      %88 = dma.hbm_to_vmem [thread:$0]  %s5, 4096, %s83, [#allocation9], 64, 64, 4
    $region25: #{tpu_custom_call.1} parent=1 // pred_fallthru
      _
    // Predicated region
    $region26: #{tpu_custom_call.1} parent=1 // pred_check
      _
    $region27: #{tpu_custom_call.1} parent=1 // pred_check_branch
      %90 = sbr.rel (0) target = $region29
    $region28: #{tpu_custom_call.1} parent=1 // pred_region
      _
    $region29: #{tpu_custom_call.1} parent=1 // pred_fallthru
      _
    // Predicated region
    $region30: #{tpu_custom_call.1} parent=1 // pred_check
      _
    $region31: #{tpu_custom_call.1} parent=1 // pred_check_branch
      %92 = sbr.rel (0) target = $region33
    $region32: #{tpu_custom_call.1} parent=1 // pred_region
      %s94 = ssub.s32 1024, 1024
      %95 = vsyncadd [#allocation12], %s94
      %s96 = sshll.u32 [#allocation11], 4
      %s97 = int_to_ptr.vmem [resolvable:$true] %s96
      %102 = dma.hbm_to_vmem [thread:$0]  %s7, 1024, %s97, [#allocation12], 64, 64, 4
    $region33: #{tpu_custom_call.1} parent=1 // pred_fallthru
      _
    // Predicated region
    $region34: #{tpu_custom_call.1} parent=1 // pred_check
      _
    $region35: #{tpu_custom_call.1} parent=1 // pred_check_branch
      %104 = sbr.rel (0) target = $region37
    $region36: #{tpu_custom_call.1} parent=1 // pred_region
      _
    $region37: #{tpu_custom_call.1} parent=1 // pred_fallthru
      _
    // Predicated region
    $region38: #{tpu_custom_call.1} parent=1 // pred_check
      _
    $region39: #{tpu_custom_call.1} parent=1 // pred_check_branch
      %106 = sbr.rel (0) target = $region41
    $region40: #{tpu_custom_call.1} parent=1 // pred_region
      %s108 = ssub.s32 1024, 1024
      %109 = vsyncadd [#allocation12], %s108
      %s110 = sshll.u32 [#allocation13], 4
      %s111 = int_to_ptr.vmem [resolvable:$true] %s110
      %116 = dma.hbm_to_vmem [thread:$0]  %s9, 1024, %s111, [#allocation12], 64, 64, 4
    $region41: #{tpu_custom_call.1} parent=1 // pred_fallthru
      _
    // Predicated region
    $region42: #{tpu_custom_call.1} parent=1 // pred_check
      _
    $region43: #{tpu_custom_call.1} parent=1 // pred_check_branch
      %118 = sbr.rel (0) target = $region45
    $region44: #{tpu_custom_call.1} parent=1 // pred_region
      _
    $region45: #{tpu_custom_call.1} parent=1 // pred_fallthru
      _
    // Predicated region
    $region46: #{tpu_custom_call.1} parent=1 // pred_check
      _
    $region47: #{tpu_custom_call.1} parent=1 // pred_check_branch
      %120 = sbr.rel (0) target = $region49
    $region48: #{tpu_custom_call.1} parent=1 // pred_region
      %s122 = ssub.s32 1024, 1024
      %123 = vsyncadd [#allocation15], %s122
      %s124 = sshll.u32 [#allocation14], 4
      %s125 = int_to_ptr.vmem [resolvable:$true] %s124
      %130 = dma.hbm_to_vmem [thread:$0]  %s11, 1024, %s125, [#allocation15], 64, 64, 4
    $region49: #{tpu_custom_call.1} parent=1 // pred_fallthru
      _
    // Predicated region
    $region50: #{tpu_custom_call.1} parent=1 // pred_check
      _
    $region51: #{tpu_custom_call.1} parent=1 // pred_check_branch
      %132 = sbr.rel (0) target = $region53
    $region52: #{tpu_custom_call.1} parent=1 // pred_region
      _
    $region53: #{tpu_custom_call.1} parent=1 // pred_fallthru
      _
    // Predicated region
    $region54: #{tpu_custom_call.1} parent=1 // pred_check
      _
    $region55: #{tpu_custom_call.1} parent=1 // pred_check_branch
      %134 = sbr.rel (0) target = $region57
    $region56: #{tpu_custom_call.1} parent=1 // pred_region
      %s136 = ssub.s32 1024, 1024
      %137 = vsyncadd [#allocation15], %s136
      %s138 = sshll.u32 [#allocation16], 4
      %s139 = int_to_ptr.vmem [resolvable:$true] %s138
      %144 = dma.hbm_to_vmem [thread:$0]  %s13, 1024, %s139, [#allocation15], 64, 64, 4
    $region57: #{tpu_custom_call.1} parent=1 // pred_fallthru
      _
    // Predicated region
    $region58: #{tpu_custom_call.1} parent=1 // pred_check
      _
    $region59: #{tpu_custom_call.1} parent=1 // pred_check_branch
      %146 = sbr.rel (0) target = $region61
    $region60: #{tpu_custom_call.1} parent=1 // pred_region
      _
    $region61: #{tpu_custom_call.1} parent=1 // pred_fallthru
      _
    // Predicated region
    $region62: #{tpu_custom_call.1} parent=1 // pred_check
      _
    $region63: #{tpu_custom_call.1} parent=1 // pred_check_branch
      %148 = sbr.rel (0) target = $region65
    $region64: #{tpu_custom_call.1} parent=1 // pred_region
      %s150 = ssub.s32 1024, 1024
      %151 = vsyncadd [#allocation18], %s150
      %s152 = sshll.u32 [#allocation17], 4
      %s153 = int_to_ptr.vmem [resolvable:$true] %s152
      %158 = dma.hbm_to_vmem [thread:$0]  %s15, 1024, %s153, [#allocation18], 64, 64, 4
    $region65: #{tpu_custom_call.1} parent=1 // pred_fallthru
      _
    // Predicated region
    $region66: #{tpu_custom_call.1} parent=1 // pred_check
      _
    $region67: #{tpu_custom_call.1} parent=1 // pred_check_branch
      %160 = sbr.rel (0) target = $region69
    $region68: #{tpu_custom_call.1} parent=1 // pred_region
      _
    $region69: #{tpu_custom_call.1} parent=1 // pred_fallthru
      _
    // Predicated region
    $region70: #{tpu_custom_call.1} parent=1 // pred_check
      _
    $region71: #{tpu_custom_call.1} parent=1 // pred_check_branch
      %162 = sbr.rel (0) target = $region73
    $region72: #{tpu_custom_call.1} parent=1 // pred_region
      %163 = dma.done [#allocation3], 256
    $region73: #{tpu_custom_call.1} parent=1 // pred_fallthru
      _
    // Predicated region
    $region74: #{tpu_custom_call.1} parent=1 // pred_check
      _
    $region75: #{tpu_custom_call.1} parent=1 // pred_check_branch
      %165 = sbr.rel (0) target = $region77
    $region76: #{tpu_custom_call.1} parent=1 // pred_region
      %166 = dma.done [#allocation6], 8192
    $region77: #{tpu_custom_call.1} parent=1 // pred_fallthru
      _
    // Predicated region
    $region78: #{tpu_custom_call.1} parent=1 // pred_check
      _
    $region79: #{tpu_custom_call.1} parent=1 // pred_check_branch
      %168 = sbr.rel (0) target = $region81
    $region80: #{tpu_custom_call.1} parent=1 // pred_region
      %169 = dma.done [#allocation6], 128
    $region81: #{tpu_custom_call.1} parent=1 // pred_fallthru
      _
    // Predicated region
    $region82: #{tpu_custom_call.1} parent=1 // pred_check
      _
    $region83: #{tpu_custom_call.1} parent=1 // pred_check_branch
      %171 = sbr.rel (0) target = $region85
    $region84: #{tpu_custom_call.1} parent=1 // pred_region
      %172 = dma.done [#allocation9], 32768
    $region85: #{tpu_custom_call.1} parent=1 // pred_fallthru
      _
    // Predicated region
    $region86: #{tpu_custom_call.1} parent=1 // pred_check
      _
    $region87: #{tpu_custom_call.1} parent=1 // pred_check_branch
      %174 = sbr.rel (0) target = $region89
    $region88: #{tpu_custom_call.1} parent=1 // pred_region
      %175 = dma.done [#allocation9], 4096
    $region89: #{tpu_custom_call.1} parent=1 // pred_fallthru
      _
    // Predicated region
    $region90: #{tpu_custom_call.1} parent=1 // pred_check
      _
    $region91: #{tpu_custom_call.1} parent=1 // pred_check_branch
      %177 = sbr.rel (0) target = $region93
    $region92: #{tpu_custom_call.1} parent=1 // pred_region
      %178 = dma.done [#allocation12], 1024
    $region93: #{tpu_custom_call.1} parent=1 // pred_fallthru
      _
    // Predicated region
    $region94: #{tpu_custom_call.1} parent=1 // pred_check
      _
    $region95: #{tpu_custom_call.1} parent=1 // pred_check_branch
      %180 = sbr.rel (0) target = $region97
    $region96: #{tpu_custom_call.1} parent=1 // pred_region
      %181 = dma.done [#allocation12], 1024
    $region97: #{tpu_custom_call.1} parent=1 // pred_fallthru
      _
    // Predicated region
    $region98: #{tpu_custom_call.1} parent=1 // pred_check
      _
    $region99: #{tpu_custom_call.1} parent=1 // pred_check_branch
      %183 = sbr.rel (0) target = $region101
    $region100: #{tpu_custom_call.1} parent=1 // pred_region
      %184 = dma.done [#allocation15], 1024
    $region101: #{tpu_custom_call.1} parent=1 // pred_fallthru
      _
    // Predicated region
    $region102: #{tpu_custom_call.1} parent=1 // pred_check
      _
    $region103: #{tpu_custom_call.1} parent=1 // pred_check_branch
      %186 = sbr.rel (0) target = $region105
    $region104: #{tpu_custom_call.1} parent=1 // pred_region
      %187 = dma.done [#allocation15], 1024
    $region105: #{tpu_custom_call.1} parent=1 // pred_fallthru
      _
    // Predicated region
    $region106: #{tpu_custom_call.1} parent=1 // pred_check
      _
    $region107: #{tpu_custom_call.1} parent=1 // pred_check_branch
      %189 = sbr.rel (0) target = $region109
    $region108: #{tpu_custom_call.1} parent=1 // pred_region
      %190 = dma.done [#allocation18], 1024
    $region109: #{tpu_custom_call.1} parent=1 // pred_fallthru
      _
    %v192 = vld [vmem:[#allocation2] sm:$0xff]
    %v193 = vld [vmem:[#allocation2 + $0x8] sm:$0xff]
    %v194 = vpack.c.bf16 %v193, %v192
    %v195 = vld [vmem:[#allocation5] sm:$0xff]
    %v196 = vld [vmem:[#allocation5 + $0x8] sm:$0xff]
    %v197 = vld [vmem:[#allocation5 + $0x10] sm:$0xff]
    %v198 = vld [vmem:[#allocation5 + $0x18] sm:$0xff]
    %v199 = vld [vmem:[#allocation5 + $0x20] sm:$0xff]
    %v200 = vld [vmem:[#allocation5 + $0x28] sm:$0xff]
    %v201 = vld [vmem:[#allocation5 + $0x30] sm:$0xff]
    %v202 = vld [vmem:[#allocation5 + $0x38] sm:$0xff]
    %v203 = vld [vmem:[#allocation5 + $0x40] sm:$0xff]
    %v204 = vld [vmem:[#allocation5 + $0x48] sm:$0xff]
    %v205 = vld [vmem:[#allocation5 + $0x50] sm:$0xff]
    %v206 = vld [vmem:[#allocation5 + $0x58] sm:$0xff]
    %v207 = vld [vmem:[#allocation5 + $0x60] sm:$0xff]
    %v208 = vld [vmem:[#allocation5 + $0x68] sm:$0xff]
    %v209 = vld [vmem:[#allocation5 + $0x70] sm:$0xff]
    %v210 = vld [vmem:[#allocation5 + $0x78] sm:$0xff]
    %v211 = vld [vmem:[#allocation5 + $0x80] sm:$0xff]
    %v212 = vld [vmem:[#allocation5 + $0x88] sm:$0xff]
    %v213 = vld [vmem:[#allocation5 + $0x90] sm:$0xff]
    %v214 = vld [vmem:[#allocation5 + $0x98] sm:$0xff]
    %v215 = vld [vmem:[#allocation5 + $0xa0] sm:$0xff]
    %v216 = vld [vmem:[#allocation5 + $0xa8] sm:$0xff]
    %v217 = vld [vmem:[#allocation5 + $0xb0] sm:$0xff]
    %v218 = vld [vmem:[#allocation5 + $0xb8] sm:$0xff]
    %v219 = vld [vmem:[#allocation5 + $0xc0] sm:$0xff]
    %v220 = vld [vmem:[#allocation5 + $0xc8] sm:$0xff]
    %v221 = vld [vmem:[#allocation5 + $0xd0] sm:$0xff]
    %v222 = vld [vmem:[#allocation5 + $0xd8] sm:$0xff]
    %v223 = vld [vmem:[#allocation5 + $0xe0] sm:$0xff]
    %v224 = vld [vmem:[#allocation5 + $0xe8] sm:$0xff]
    %v225 = vld [vmem:[#allocation5 + $0xf0] sm:$0xff]
    %v226 = vld [vmem:[#allocation5 + $0xf8] sm:$0xff]
    %v227 = vld [vmem:[#allocation5 + $0x100] sm:$0xff]
    %v228 = vld [vmem:[#allocation5 + $0x108] sm:$0xff]
    %v229 = vld [vmem:[#allocation5 + $0x110] sm:$0xff]
    %v230 = vld [vmem:[#allocation5 + $0x118] sm:$0xff]
    %v231 = vld [vmem:[#allocation5 + $0x120] sm:$0xff]
    %v232 = vld [vmem:[#allocation5 + $0x128] sm:$0xff]
    %v233 = vld [vmem:[#allocation5 + $0x130] sm:$0xff]
    %v234 = vld [vmem:[#allocation5 + $0x138] sm:$0xff]
    %v235 = vld [vmem:[#allocation5 + $0x140] sm:$0xff]
    %v236 = vld [vmem:[#allocation5 + $0x148] sm:$0xff]
    %v237 = vld [vmem:[#allocation5 + $0x150] sm:$0xff]
    %v238 = vld [vmem:[#allocation5 + $0x158] sm:$0xff]
    %v239 = vld [vmem:[#allocation5 + $0x160] sm:$0xff]
    %v240 = vld [vmem:[#allocation5 + $0x168] sm:$0xff]
    %v241 = vld [vmem:[#allocation5 + $0x170] sm:$0xff]
    %v242 = vld [vmem:[#allocation5 + $0x178] sm:$0xff]
    %v243 = vld [vmem:[#allocation5 + $0x180] sm:$0xff]
    %v244 = vld [vmem:[#allocation5 + $0x188] sm:$0xff]
    %v245 = vld [vmem:[#allocation5 + $0x190] sm:$0xff]
    %v246 = vld [vmem:[#allocation5 + $0x198] sm:$0xff]
    %v247 = vld [vmem:[#allocation5 + $0x1a0] sm:$0xff]
    %v248 = vld [vmem:[#allocation5 + $0x1a8] sm:$0xff]
    %v249 = vld [vmem:[#allocation5 + $0x1b0] sm:$0xff]
    %v250 = vld [vmem:[#allocation5 + $0x1b8] sm:$0xff]
    %v251 = vld [vmem:[#allocation5 + $0x1c0] sm:$0xff]
    %v252 = vld [vmem:[#allocation5 + $0x1c8] sm:$0xff]
    %v253 = vld [vmem:[#allocation5 + $0x1d0] sm:$0xff]
    %v254 = vld [vmem:[#allocation5 + $0x1d8] sm:$0xff]
    %v255 = vld [vmem:[#allocation5 + $0x1e0] sm:$0xff]
    %v256 = vld [vmem:[#allocation5 + $0x1e8] sm:$0xff]
    %v257 = vld [vmem:[#allocation5 + $0x1f0] sm:$0xff]
    %v258 = vld [vmem:[#allocation5 + $0x1f8] sm:$0xff]
    %v259 = vld [vmem:[#allocation7] sm:$0xff]
    %v261 = vlaneseq
    %v262 = vshrl.u32 %v261, 7
    %v263 = vsub.s32 0, %v262
    %v264 = vrot.slane %v259, %v263
    %v265 = vlaneseq
    %v266 = vshrl.u32 %v265, 7
    %v267 = vsub.s32 1, %v266
    %v268 = vrot.slane %v259, %v267
    %v269 = vlaneseq
    %v270 = vshrl.u32 %v269, 7
    %v271 = vsub.s32 2, %v270
    %v272 = vrot.slane %v259, %v271
    %v273 = vlaneseq
    %v274 = vshrl.u32 %v273, 7
    %v275 = vsub.s32 3, %v274
    %v276 = vrot.slane %v259, %v275
    %v277 = vlaneseq
    %v278 = vshrl.u32 %v277, 7
    %v279 = vsub.s32 4, %v278
    %v280 = vrot.slane %v259, %v279
    %v281 = vlaneseq
    %v282 = vshrl.u32 %v281, 7
    %v283 = vsub.s32 5, %v282
    %v284 = vrot.slane %v259, %v283
    %v285 = vlaneseq
    %v286 = vshrl.u32 %v285, 7
    %v287 = vsub.s32 6, %v286
    %v288 = vrot.slane %v259, %v287
    %v289 = vlaneseq
    %v290 = vshrl.u32 %v289, 7
    %v291 = vsub.s32 7, %v290
    %v292 = vrot.slane %v259, %v291
    %v365 = vunpack.c.l.b16 %v195
    %v366 = vunpack.c.h.b16 %v195
    %v367 = vunpack.c.l.b16 %v196
    %v368 = vunpack.c.h.b16 %v196
    %v369 = vunpack.c.l.b16 %v197
    %v370 = vunpack.c.h.b16 %v197
    %v371 = vunpack.c.l.b16 %v198
    %v372 = vunpack.c.h.b16 %v198
    %v373 = vunpack.c.l.b16 %v199
    %v374 = vunpack.c.h.b16 %v199
    %v375 = vunpack.c.l.b16 %v200
    %v376 = vunpack.c.h.b16 %v200
    %v377 = vunpack.c.l.b16 %v201
    %v378 = vunpack.c.h.b16 %v201
    %v379 = vunpack.c.l.b16 %v202
    %v380 = vunpack.c.h.b16 %v202
    %v381 = vunpack.c.l.b16 %v203
    %v382 = vunpack.c.h.b16 %v203
    %v383 = vunpack.c.l.b16 %v204
    %v384 = vunpack.c.h.b16 %v204
    %v385 = vunpack.c.l.b16 %v205
    %v386 = vunpack.c.h.b16 %v205
    %v387 = vunpack.c.l.b16 %v206
    %v388 = vunpack.c.h.b16 %v206
    %v389 = vunpack.c.l.b16 %v207
    %v390 = vunpack.c.h.b16 %v207
    %v391 = vunpack.c.l.b16 %v208
    %v392 = vunpack.c.h.b16 %v208
    %v393 = vunpack.c.l.b16 %v209
    %v394 = vunpack.c.h.b16 %v209
    %v395 = vunpack.c.l.b16 %v210
    %v396 = vunpack.c.h.b16 %v210
    %v397 = vunpack.c.l.b16 %v211
    %v398 = vunpack.c.h.b16 %v211
    %v399 = vunpack.c.l.b16 %v212
    %v400 = vunpack.c.h.b16 %v212
    %v401 = vunpack.c.l.b16 %v213
    %v402 = vunpack.c.h.b16 %v213
    %v403 = vunpack.c.l.b16 %v214
    %v404 = vunpack.c.h.b16 %v214
    %v405 = vunpack.c.l.b16 %v215
    %v406 = vunpack.c.h.b16 %v215
    %v407 = vunpack.c.l.b16 %v216
    %v408 = vunpack.c.h.b16 %v216
    %v409 = vunpack.c.l.b16 %v217
    %v410 = vunpack.c.h.b16 %v217
    %v411 = vunpack.c.l.b16 %v218
    %v412 = vunpack.c.h.b16 %v218
    %v413 = vunpack.c.l.b16 %v219
    %v414 = vunpack.c.h.b16 %v219
    %v415 = vunpack.c.l.b16 %v220
    %v416 = vunpack.c.h.b16 %v220
    %v417 = vunpack.c.l.b16 %v221
    %v418 = vunpack.c.h.b16 %v221
    %v419 = vunpack.c.l.b16 %v222
    %v420 = vunpack.c.h.b16 %v222
    %v421 = vunpack.c.l.b16 %v223
    %v422 = vunpack.c.h.b16 %v223
    %v423 = vunpack.c.l.b16 %v224
    %v424 = vunpack.c.h.b16 %v224
    %v425 = vunpack.c.l.b16 %v225
    %v426 = vunpack.c.h.b16 %v225
    %v427 = vunpack.c.l.b16 %v226
    %v428 = vunpack.c.h.b16 %v226
    %v429 = vunpack.c.l.b16 %v227
    %v430 = vunpack.c.h.b16 %v227
    %v431 = vunpack.c.l.b16 %v228
    %v432 = vunpack.c.h.b16 %v228
    %v433 = vunpack.c.l.b16 %v229
    %v434 = vunpack.c.h.b16 %v229
    %v435 = vunpack.c.l.b16 %v230
    %v436 = vunpack.c.h.b16 %v230
    %v437 = vunpack.c.l.b16 %v231
    %v438 = vunpack.c.h.b16 %v231
    %v439 = vunpack.c.l.b16 %v232
    %v440 = vunpack.c.h.b16 %v232
    %v441 = vunpack.c.l.b16 %v233
    %v442 = vunpack.c.h.b16 %v233
    %v443 = vunpack.c.l.b16 %v234
    %v444 = vunpack.c.h.b16 %v234
    %v445 = vunpack.c.l.b16 %v235
    %v446 = vunpack.c.h.b16 %v235
    %v447 = vunpack.c.l.b16 %v236
    %v448 = vunpack.c.h.b16 %v236
    %v449 = vunpack.c.l.b16 %v237
    %v450 = vunpack.c.h.b16 %v237
    %v451 = vunpack.c.l.b16 %v238
    %v452 = vunpack.c.h.b16 %v238
    %v453 = vunpack.c.l.b16 %v239
    %v454 = vunpack.c.h.b16 %v239
    %v455 = vunpack.c.l.b16 %v240
    %v456 = vunpack.c.h.b16 %v240
    %v457 = vunpack.c.l.b16 %v241
    %v458 = vunpack.c.h.b16 %v241
    %v459 = vunpack.c.l.b16 %v242
    %v460 = vunpack.c.h.b16 %v242
    %v461 = vunpack.c.l.b16 %v243
    %v462 = vunpack.c.h.b16 %v243
    %v463 = vunpack.c.l.b16 %v244
    %v464 = vunpack.c.h.b16 %v244
    %v465 = vunpack.c.l.b16 %v245
    %v466 = vunpack.c.h.b16 %v245
    %v467 = vunpack.c.l.b16 %v246
    %v468 = vunpack.c.h.b16 %v246
    %v469 = vunpack.c.l.b16 %v247
    %v470 = vunpack.c.h.b16 %v247
    %v471 = vunpack.c.l.b16 %v248
    %v472 = vunpack.c.h.b16 %v248
    %v473 = vunpack.c.l.b16 %v249
    %v474 = vunpack.c.h.b16 %v249
    %v475 = vunpack.c.l.b16 %v250
    %v476 = vunpack.c.h.b16 %v250
    %v477 = vunpack.c.l.b16 %v251
    %v478 = vunpack.c.h.b16 %v251
    %v479 = vunpack.c.l.b16 %v252
    %v480 = vunpack.c.h.b16 %v252
    %v481 = vunpack.c.l.b16 %v253
    %v482 = vunpack.c.h.b16 %v253
    %v483 = vunpack.c.l.b16 %v254
    %v484 = vunpack.c.h.b16 %v254
    %v485 = vunpack.c.l.b16 %v255
    %v486 = vunpack.c.h.b16 %v255
    %v487 = vunpack.c.l.b16 %v256
    %v488 = vunpack.c.h.b16 %v256
    %v489 = vunpack.c.l.b16 %v257
    %v490 = vunpack.c.h.b16 %v257
    %v491 = vunpack.c.l.b16 %v258
    %v492 = vunpack.c.h.b16 %v258
    %v493 = vpack.c.b16 %v373, %v365
    %v494 = vpack.c.b16 %v374, %v366
    %v495 = vpack.c.b16 %v375, %v367
    %v496 = vpack.c.b16 %v376, %v368
    %v497 = vpack.c.b16 %v377, %v369
    %v498 = vpack.c.b16 %v378, %v370
    %v499 = vpack.c.b16 %v379, %v371
    %v500 = vpack.c.b16 %v380, %v372
    %v501 = vpack.c.b16 %v389, %v381
    %v502 = vpack.c.b16 %v390, %v382
    %v503 = vpack.c.b16 %v391, %v383
    %v504 = vpack.c.b16 %v392, %v384
    %v505 = vpack.c.b16 %v393, %v385
    %v506 = vpack.c.b16 %v394, %v386
    %v507 = vpack.c.b16 %v395, %v387
    %v508 = vpack.c.b16 %v396, %v388
    %v509 = vpack.c.b16 %v405, %v397
    %v510 = vpack.c.b16 %v406, %v398
    %v511 = vpack.c.b16 %v407, %v399
    %v512 = vpack.c.b16 %v408, %v400
    %v513 = vpack.c.b16 %v409, %v401
    %v514 = vpack.c.b16 %v410, %v402
    %v515 = vpack.c.b16 %v411, %v403
    %v516 = vpack.c.b16 %v412, %v404
    %v517 = vpack.c.b16 %v421, %v413
    %v518 = vpack.c.b16 %v422, %v414
    %v519 = vpack.c.b16 %v423, %v415
    %v520 = vpack.c.b16 %v424, %v416
    %v521 = vpack.c.b16 %v425, %v417
    %v522 = vpack.c.b16 %v426, %v418
    %v523 = vpack.c.b16 %v427, %v419
    %v524 = vpack.c.b16 %v428, %v420
    %v525 = vpack.c.b16 %v437, %v429
    %v526 = vpack.c.b16 %v438, %v430
    %v527 = vpack.c.b16 %v439, %v431
    %v528 = vpack.c.b16 %v440, %v432
    %v529 = vpack.c.b16 %v441, %v433
    %v530 = vpack.c.b16 %v442, %v434
    %v531 = vpack.c.b16 %v443, %v435
    %v532 = vpack.c.b16 %v444, %v436
    %v533 = vpack.c.b16 %v453, %v445
    %v534 = vpack.c.b16 %v454, %v446
    %v535 = vpack.c.b16 %v455, %v447
    %v536 = vpack.c.b16 %v456, %v448
    %v537 = vpack.c.b16 %v457, %v449
    %v538 = vpack.c.b16 %v458, %v450
    %v539 = vpack.c.b16 %v459, %v451
    %v540 = vpack.c.b16 %v460, %v452
    %v541 = vpack.c.b16 %v469, %v461
    %v542 = vpack.c.b16 %v470, %v462
    %v543 = vpack.c.b16 %v471, %v463
    %v544 = vpack.c.b16 %v472, %v464
    %v545 = vpack.c.b16 %v473, %v465
    %v546 = vpack.c.b16 %v474, %v466
    %v547 = vpack.c.b16 %v475, %v467
    %v548 = vpack.c.b16 %v476, %v468
    %v549 = vpack.c.b16 %v485, %v477
    %v550 = vpack.c.b16 %v486, %v478
    %v551 = vpack.c.b16 %v487, %v479
    %v552 = vpack.c.b16 %v488, %v480
    %v553 = vpack.c.b16 %v489, %v481
    %v554 = vpack.c.b16 %v490, %v482
    %v555 = vpack.c.b16 %v491, %v483
    %v556 = vpack.c.b16 %v492, %v484
    %621 = vmatprep.subr.bf16.mxu0 %v550
    %622 = vmatpush1.bf16.msra.mxu0 %v549
    %623 = vmatprep.subr.bf16.mxu0 %v542
    %624 = vmatpush1.bf16.msra.mxu0 %v541
    %625 = vmatprep.subr.bf16.mxu0 %v534
    %626 = vmatpush1.bf16.msra.mxu0 %v533
    %627 = vmatprep.subr.bf16.mxu0 %v526
    %628 = vmatpush1.bf16.msra.mxu0 %v525
    %629 = vmatprep.subr.bf16.mxu0 %v518
    %630 = vmatpush1.bf16.msra.mxu0 %v517
    %631 = vmatprep.subr.bf16.mxu0 %v510
    %632 = vmatpush1.bf16.msra.mxu0 %v509
    %633 = vmatprep.subr.bf16.mxu0 %v502
    %634 = vmatpush1.bf16.msra.mxu0 %v501
    %635 = vmatprep.subr.bf16.mxu0 %v494
    %636 = vmatpush1.bf16.msra.mxu0 %v493
    %637 = vmatprep.subr.bf16.mxu0 0
    %638 = vmatpush2.bf16.msra.mxu0 0
    %639 = vmatprep.subr.bf16.mxu0 0
    %640 = vmatpush2.bf16.msra.mxu0 0
    %641 = vmatprep.subr.bf16.mxu0 0
    %642 = vmatpush2.bf16.msra.mxu0 0
    %643 = vmatprep.subr.bf16.mxu0 0
    %644 = vmatpush2.bf16.msra.mxu0 0
    %645 = vmatprep.subr.bf16.mxu0 0
    %646 = vmatpush2.bf16.msra.mxu0 0
    %647 = vmatprep.subr.bf16.mxu0 0
    %648 = vmatpush2.bf16.msra.mxu0 0
    %649 = vmatprep.subr.bf16.mxu0 0
    %650 = vmatpush2.bf16.msra.mxu0 0
    %651 = vmatprep.subr.bf16.mxu0 0
    %652 = vmatpush2.bf16.msra.mxu0 0
    %653 = vmatprep.mubr.bf16.mxu0 0
    %654 = vmatmul.mubr.bf16.gmra.mxu0 %v194
    %v655 = vpop.f32.mrf.mxu0
    %v656 = vadd.f32 %v264, %v655
    %v657 = vpop.f32.mrf.mxu0
    %v658 = vadd.f32 %v268, %v657
    %v659 = vpop.f32.mrf.mxu0
    %v660 = vadd.f32 %v264, %v659
    %v661 = vpop.f32.mrf.mxu0
    %v662 = vadd.f32 %v268, %v661
    %663 = vdwg.mxu0
    %664 = vmatprep.subr.bf16.mxu0 %v552
    %665 = vmatpush1.bf16.msra.mxu0 %v551
    %666 = vmatprep.subr.bf16.mxu0 %v544
    %667 = vmatpush1.bf16.msra.mxu0 %v543
    %668 = vmatprep.subr.bf16.mxu0 %v536
    %669 = vmatpush1.bf16.msra.mxu0 %v535
    %670 = vmatprep.subr.bf16.mxu0 %v528
    %671 = vmatpush1.bf16.msra.mxu0 %v527
    %672 = vmatprep.subr.bf16.mxu0 %v520
    %673 = vmatpush1.bf16.msra.mxu0 %v519
    %674 = vmatprep.subr.bf16.mxu0 %v512
    %675 = vmatpush1.bf16.msra.mxu0 %v511
    %676 = vmatprep.subr.bf16.mxu0 %v504
    %677 = vmatpush1.bf16.msra.mxu0 %v503
    %678 = vmatprep.subr.bf16.mxu0 %v496
    %679 = vmatpush1.bf16.msra.mxu0 %v495
    %680 = vmatprep.subr.bf16.mxu0 0
    %681 = vmatpush2.bf16.msra.mxu0 0
    %682 = vmatprep.subr.bf16.mxu0 0
    %683 = vmatpush2.bf16.msra.mxu0 0
    %684 = vmatprep.subr.bf16.mxu0 0
    %685 = vmatpush2.bf16.msra.mxu0 0
    %686 = vmatprep.subr.bf16.mxu0 0
    %687 = vmatpush2.bf16.msra.mxu0 0
    %688 = vmatprep.subr.bf16.mxu0 0
    %689 = vmatpush2.bf16.msra.mxu0 0
    %690 = vmatprep.subr.bf16.mxu0 0
    %691 = vmatpush2.bf16.msra.mxu0 0
    %692 = vmatprep.subr.bf16.mxu0 0
    %693 = vmatpush2.bf16.msra.mxu0 0
    %694 = vmatprep.subr.bf16.mxu0 0
    %695 = vmatpush2.bf16.msra.mxu0 0
    %696 = vmatprep.mubr.bf16.mxu0 0
    %697 = vmatmul.mubr.bf16.gmra.mxu0 %v194
    %v698 = vpop.f32.mrf.mxu0
    %v699 = vadd.f32 %v272, %v698
    %v700 = vpop.f32.mrf.mxu0
    %v701 = vadd.f32 %v276, %v700
    %v702 = vpop.f32.mrf.mxu0
    %v703 = vadd.f32 %v272, %v702
    %v704 = vpop.f32.mrf.mxu0
    %v705 = vadd.f32 %v276, %v704
    %706 = vdwg.mxu0
    %707 = vmatprep.subr.bf16.mxu0 %v554
    %708 = vmatpush1.bf16.msra.mxu0 %v553
    %709 = vmatprep.subr.bf16.mxu0 %v546
    %710 = vmatpush1.bf16.msra.mxu0 %v545
    %711 = vmatprep.subr.bf16.mxu0 %v538
    %712 = vmatpush1.bf16.msra.mxu0 %v537
    %713 = vmatprep.subr.bf16.mxu0 %v530
    %714 = vmatpush1.bf16.msra.mxu0 %v529
    %715 = vmatprep.subr.bf16.mxu0 %v522
    %716 = vmatpush1.bf16.msra.mxu0 %v521
    %717 = vmatprep.subr.bf16.mxu0 %v514
    %718 = vmatpush1.bf16.msra.mxu0 %v513
    %719 = vmatprep.subr.bf16.mxu0 %v506
    %720 = vmatpush1.bf16.msra.mxu0 %v505
    %721 = vmatprep.subr.bf16.mxu0 %v498
    %722 = vmatpush1.bf16.msra.mxu0 %v497
    %723 = vmatprep.subr.bf16.mxu0 0
    %724 = vmatpush2.bf16.msra.mxu0 0
    %725 = vmatprep.subr.bf16.mxu0 0
    %726 = vmatpush2.bf16.msra.mxu0 0
    %727 = vmatprep.subr.bf16.mxu0 0
    %728 = vmatpush2.bf16.msra.mxu0 0
    %729 = vmatprep.subr.bf16.mxu0 0
    %730 = vmatpush2.bf16.msra.mxu0 0
    %731 = vmatprep.subr.bf16.mxu0 0
    %732 = vmatpush2.bf16.msra.mxu0 0
    %733 = vmatprep.subr.bf16.mxu0 0
    %734 = vmatpush2.bf16.msra.mxu0 0
    %735 = vmatprep.subr.bf16.mxu0 0
    %736 = vmatpush2.bf16.msra.mxu0 0
    %737 = vmatprep.subr.bf16.mxu0 0
    %738 = vmatpush2.bf16.msra.mxu0 0
    %739 = vmatprep.mubr.bf16.mxu0 0
    %740 = vmatmul.mubr.bf16.gmra.mxu0 %v194
    %v741 = vpop.f32.mrf.mxu0
    %v742 = vadd.f32 %v280, %v741
    %v743 = vpop.f32.mrf.mxu0
    %v744 = vadd.f32 %v284, %v743
    %v745 = vpop.f32.mrf.mxu0
    %v746 = vadd.f32 %v280, %v745
    %v747 = vpop.f32.mrf.mxu0
    %v748 = vadd.f32 %v284, %v747
    %749 = vdwg.mxu0
    %750 = vmatprep.subr.bf16.mxu0 %v556
    %751 = vmatpush1.bf16.msra.mxu0 %v555
    %752 = vmatprep.subr.bf16.mxu0 %v548
    %753 = vmatpush1.bf16.msra.mxu0 %v547
    %754 = vmatprep.subr.bf16.mxu0 %v540
    %755 = vmatpush1.bf16.msra.mxu0 %v539
    %756 = vmatprep.subr.bf16.mxu0 %v532
    %757 = vmatpush1.bf16.msra.mxu0 %v531
    %758 = vmatprep.subr.bf16.mxu0 %v524
    %759 = vmatpush1.bf16.msra.mxu0 %v523
    %760 = vmatprep.subr.bf16.mxu0 %v516
    %761 = vmatpush1.bf16.msra.mxu0 %v515
    %762 = vmatprep.subr.bf16.mxu0 %v508
    %763 = vmatpush1.bf16.msra.mxu0 %v507
    %764 = vmatprep.subr.bf16.mxu0 %v500
    %765 = vmatpush1.bf16.msra.mxu0 %v499
    %766 = vmatprep.subr.bf16.mxu0 0
    %767 = vmatpush2.bf16.msra.mxu0 0
    %768 = vmatprep.subr.bf16.mxu0 0
    %769 = vmatpush2.bf16.msra.mxu0 0
    %770 = vmatprep.subr.bf16.mxu0 0
    %771 = vmatpush2.bf16.msra.mxu0 0
    %772 = vmatprep.subr.bf16.mxu0 0
    %773 = vmatpush2.bf16.msra.mxu0 0
    %774 = vmatprep.subr.bf16.mxu0 0
    %775 = vmatpush2.bf16.msra.mxu0 0
    %776 = vmatprep.subr.bf16.mxu0 0
    %777 = vmatpush2.bf16.msra.mxu0 0
    %778 = vmatprep.subr.bf16.mxu0 0
    %779 = vmatpush2.bf16.msra.mxu0 0
    %780 = vmatprep.subr.bf16.mxu0 0
    %781 = vmatpush2.bf16.msra.mxu0 0
    %782 = vmatprep.mubr.bf16.mxu0 0
    %783 = vmatmul.mubr.bf16.gmra.mxu0 %v194
    %v784 = vpop.f32.mrf.mxu0
    %v785 = vadd.f32 %v288, %v784
    %v786 = vpop.f32.mrf.mxu0
    %v787 = vadd.f32 %v292, %v786
    %v788 = vpop.f32.mrf.mxu0
    %v789 = vadd.f32 %v288, %v788
    %v790 = vpop.f32.mrf.mxu0
    %v791 = vadd.f32 %v292, %v790
    %792 = vdwg.mxu0
    %v793 = vmax.f32 %v656, 0.0
    %v794 = vmax.f32 %v658, 0.0
    %v795 = vmax.f32 %v699, 0.0
    %v796 = vmax.f32 %v701, 0.0
    %v797 = vmax.f32 %v742, 0.0
    %v798 = vmax.f32 %v744, 0.0
    %v799 = vmax.f32 %v785, 0.0
    %v800 = vmax.f32 %v787, 0.0
    %v801 = vmax.f32 %v660, 0.0
    %v802 = vmax.f32 %v662, 0.0
    %v803 = vmax.f32 %v703, 0.0
    %v804 = vmax.f32 %v705, 0.0
    %v805 = vmax.f32 %v746, 0.0
    %v806 = vmax.f32 %v748, 0.0
    %v807 = vmax.f32 %v789, 0.0
    %v808 = vmax.f32 %v791, 0.0
    %v809 = vpack.c.bf16 %v801, %v793
    %v810 = vpack.c.bf16 %v802, %v794
    %v811 = vpack.c.bf16 %v803, %v795
    %v812 = vpack.c.bf16 %v804, %v796
    %v813 = vpack.c.bf16 %v805, %v797
    %v814 = vpack.c.bf16 %v806, %v798
    %v815 = vpack.c.bf16 %v807, %v799
    %v816 = vpack.c.bf16 %v808, %v800
    %v817 = vld [vmem:[#allocation8] sm:$0xff]
    %v818 = vld [vmem:[#allocation8 + $0x8] sm:$0xff]
    %v819 = vld [vmem:[#allocation8 + $0x10] sm:$0xff]
    %v820 = vld [vmem:[#allocation8 + $0x18] sm:$0xff]
    %v821 = vld [vmem:[#allocation8 + $0x20] sm:$0xff]
    %v822 = vld [vmem:[#allocation8 + $0x28] sm:$0xff]
    %v823 = vld [vmem:[#allocation8 + $0x30] sm:$0xff]
    %v824 = vld [vmem:[#allocation8 + $0x38] sm:$0xff]
    %v825 = vld [vmem:[#allocation8 + $0x40] sm:$0xff]
    %v826 = vld [vmem:[#allocation8 + $0x48] sm:$0xff]
    %v827 = vld [vmem:[#allocation8 + $0x50] sm:$0xff]
    %v828 = vld [vmem:[#allocation8 + $0x58] sm:$0xff]
    %v829 = vld [vmem:[#allocation8 + $0x60] sm:$0xff]
    %v830 = vld [vmem:[#allocation8 + $0x68] sm:$0xff]
    %v831 = vld [vmem:[#allocation8 + $0x70] sm:$0xff]
    %v832 = vld [vmem:[#allocation8 + $0x78] sm:$0xff]
    %v833 = vld [vmem:[#allocation8 + $0x80] sm:$0xff]
    %v834 = vld [vmem:[#allocation8 + $0x88] sm:$0xff]
    %v835 = vld [vmem:[#allocation8 + $0x90] sm:$0xff]
    %v836 = vld [vmem:[#allocation8 + $0x98] sm:$0xff]
    %v837 = vld [vmem:[#allocation8 + $0xa0] sm:$0xff]
    %v838 = vld [vmem:[#allocation8 + $0xa8] sm:$0xff]
    %v839 = vld [vmem:[#allocation8 + $0xb0] sm:$0xff]
    %v840 = vld [vmem:[#allocation8 + $0xb8] sm:$0xff]
    %v841 = vld [vmem:[#allocation8 + $0xc0] sm:$0xff]
    %v842 = vld [vmem:[#allocation8 + $0xc8] sm:$0xff]
    %v843 = vld [vmem:[#allocation8 + $0xd0] sm:$0xff]
    %v844 = vld [vmem:[#allocation8 + $0xd8] sm:$0xff]
    %v845 = vld [vmem:[#allocation8 + $0xe0] sm:$0xff]
    %v846 = vld [vmem:[#allocation8 + $0xe8] sm:$0xff]
    %v847 = vld [vmem:[#allocation8 + $0xf0] sm:$0xff]
    %v848 = vld [vmem:[#allocation8 + $0xf8] sm:$0xff]
    %v849 = vld [vmem:[#allocation8 + $0x100] sm:$0xff]
    %v850 = vld [vmem:[#allocation8 + $0x108] sm:$0xff]
    %v851 = vld [vmem:[#allocation8 + $0x110] sm:$0xff]
    %v852 = vld [vmem:[#allocation8 + $0x118] sm:$0xff]
    %v853 = vld [vmem:[#allocation8 + $0x120] sm:$0xff]
    %v854 = vld [vmem:[#allocation8 + $0x128] sm:$0xff]
    %v855 = vld [vmem:[#allocation8 + $0x130] sm:$0xff]
    %v856 = vld [vmem:[#allocation8 + $0x138] sm:$0xff]
    %v857 = vld [vmem:[#allocation8 + $0x140] sm:$0xff]
    %v858 = vld [vmem:[#allocation8 + $0x148] sm:$0xff]
    %v859 = vld [vmem:[#allocation8 + $0x150] sm:$0xff]
    %v860 = vld [vmem:[#allocation8 + $0x158] sm:$0xff]
    %v861 = vld [vmem:[#allocation8 + $0x160] sm:$0xff]
    %v862 = vld [vmem:[#allocation8 + $0x168] sm:$0xff]
    %v863 = vld [vmem:[#allocation8 + $0x170] sm:$0xff]
    %v864 = vld [vmem:[#allocation8 + $0x178] sm:$0xff]
    %v865 = vld [vmem:[#allocation8 + $0x180] sm:$0xff]
    %v866 = vld [vmem:[#allocation8 + $0x188] sm:$0xff]
    %v867 = vld [vmem:[#allocation8 + $0x190] sm:$0xff]
    %v868 = vld [vmem:[#allocation8 + $0x198] sm:$0xff]
    %v869 = vld [vmem:[#allocation8 + $0x1a0] sm:$0xff]
    %v870 = vld [vmem:[#allocation8 + $0x1a8] sm:$0xff]
    %v871 = vld [vmem:[#allocation8 + $0x1b0] sm:$0xff]
    %v872 = vld [vmem:[#allocation8 + $0x1b8] sm:$0xff]
    %v873 = vld [vmem:[#allocation8 + $0x1c0] sm:$0xff]
    %v874 = vld [vmem:[#allocation8 + $0x1c8] sm:$0xff]
    %v875 = vld [vmem:[#allocation8 + $0x1d0] sm:$0xff]
    %v876 = vld [vmem:[#allocation8 + $0x1d8] sm:$0xff]
    %v877 = vld [vmem:[#allocation8 + $0x1e0] sm:$0xff]
    %v878 = vld [vmem:[#allocation8 + $0x1e8] sm:$0xff]
    %v879 = vld [vmem:[#allocation8 + $0x1f0] sm:$0xff]
    %v880 = vld [vmem:[#allocation8 + $0x1f8] sm:$0xff]
    %v881 = vld [vmem:[#allocation8 + $0x200] sm:$0xff]
    %v882 = vld [vmem:[#allocation8 + $0x208] sm:$0xff]
    %v883 = vld [vmem:[#allocation8 + $0x210] sm:$0xff]
    %v884 = vld [vmem:[#allocation8 + $0x218] sm:$0xff]
    %v885 = vld [vmem:[#allocation8 + $0x220] sm:$0xff]
    %v886 = vld [vmem:[#allocation8 + $0x228] sm:$0xff]
    %v887 = vld [vmem:[#allocation8 + $0x230] sm:$0xff]
    %v888 = vld [vmem:[#allocation8 + $0x238] sm:$0xff]
    %v889 = vld [vmem:[#allocation8 + $0x240] sm:$0xff]
    %v890 = vld [vmem:[#allocation8 + $0x248] sm:$0xff]
    %v891 = vld [vmem:[#allocation8 + $0x250] sm:$0xff]
    %v892 = vld [vmem:[#allocation8 + $0x258] sm:$0xff]
    %v893 = vld [vmem:[#allocation8 + $0x260] sm:$0xff]
    %v894 = vld [vmem:[#allocation8 + $0x268] sm:$0xff]
    %v895 = vld [vmem:[#allocation8 + $0x270] sm:$0xff]
    %v896 = vld [vmem:[#allocation8 + $0x278] sm:$0xff]
    %v897 = vld [vmem:[#allocation8 + $0x280] sm:$0xff]
    %v898 = vld [vmem:[#allocation8 + $0x288] sm:$0xff]
    %v899 = vld [vmem:[#allocation8 + $0x290] sm:$0xff]
    %v900 = vld [vmem:[#allocation8 + $0x298] sm:$0xff]
    %v901 = vld [vmem:[#allocation8 + $0x2a0] sm:$0xff]
    %v902 = vld [vmem:[#allocation8 + $0x2a8] sm:$0xff]
    %v903 = vld [vmem:[#allocation8 + $0x2b0] sm:$0xff]
    %v904 = vld [vmem:[#allocation8 + $0x2b8] sm:$0xff]
    %v905 = vld [vmem:[#allocation8 + $0x2c0] sm:$0xff]
    %v906 = vld [vmem:[#allocation8 + $0x2c8] sm:$0xff]
    %v907 = vld [vmem:[#allocation8 + $0x2d0] sm:$0xff]
    %v908 = vld [vmem:[#allocation8 + $0x2d8] sm:$0xff]
    %v909 = vld [vmem:[#allocation8 + $0x2e0] sm:$0xff]
    %v910 = vld [vmem:[#allocation8 + $0x2e8] sm:$0xff]
    %v911 = vld [vmem:[#allocation8 + $0x2f0] sm:$0xff]
    %v912 = vld [vmem:[#allocation8 + $0x2f8] sm:$0xff]
    %v913 = vld [vmem:[#allocation8 + $0x300] sm:$0xff]
    %v914 = vld [vmem:[#allocation8 + $0x308] sm:$0xff]
    %v915 = vld [vmem:[#allocation8 + $0x310] sm:$0xff]
    %v916 = vld [vmem:[#allocation8 + $0x318] sm:$0xff]
    %v917 = vld [vmem:[#allocation8 + $0x320] sm:$0xff]
    %v918 = vld [vmem:[#allocation8 + $0x328] sm:$0xff]
    %v919 = vld [vmem:[#allocation8 + $0x330] sm:$0xff]
    %v920 = vld [vmem:[#allocation8 + $0x338] sm:$0xff]
    %v921 = vld [vmem:[#allocation8 + $0x340] sm:$0xff]
    %v922 = vld [vmem:[#allocation8 + $0x348] sm:$0xff]
    %v923 = vld [vmem:[#allocation8 + $0x350] sm:$0xff]
    %v924 = vld [vmem:[#allocation8 + $0x358] sm:$0xff]
    %v925 = vld [vmem:[#allocation8 + $0x360] sm:$0xff]
    %v926 = vld [vmem:[#allocation8 + $0x368] sm:$0xff]
    %v927 = vld [vmem:[#allocation8 + $0x370] sm:$0xff]
    %v928 = vld [vmem:[#allocation8 + $0x378] sm:$0xff]
    %v929 = vld [vmem:[#allocation8 + $0x380] sm:$0xff]
    %v930 = vld [vmem:[#allocation8 + $0x388] sm:$0xff]
    %v931 = vld [vmem:[#allocation8 + $0x390] sm:$0xff]
    %v932 = vld [vmem:[#allocation8 + $0x398] sm:$0xff]
    %v933 = vld [vmem:[#allocation8 + $0x3a0] sm:$0xff]
    %v934 = vld [vmem:[#allocation8 + $0x3a8] sm:$0xff]
    %v935 = vld [vmem:[#allocation8 + $0x3b0] sm:$0xff]
    %v936 = vld [vmem:[#allocation8 + $0x3b8] sm:$0xff]
    %v937 = vld [vmem:[#allocation8 + $0x3c0] sm:$0xff]
    %v938 = vld [vmem:[#allocation8 + $0x3c8] sm:$0xff]
    %v939 = vld [vmem:[#allocation8 + $0x3d0] sm:$0xff]
    %v940 = vld [vmem:[#allocation8 + $0x3d8] sm:$0xff]
    %v941 = vld [vmem:[#allocation8 + $0x3e0] sm:$0xff]
    %v942 = vld [vmem:[#allocation8 + $0x3e8] sm:$0xff]
    %v943 = vld [vmem:[#allocation8 + $0x3f0] sm:$0xff]
    %v944 = vld [vmem:[#allocation8 + $0x3f8] sm:$0xff]
    %v945 = vld [vmem:[#allocation8 + $0x400] sm:$0xff]
    %v946 = vld [vmem:[#allocation8 + $0x408] sm:$0xff]
    %v947 = vld [vmem:[#allocation8 + $0x410] sm:$0xff]
    %v948 = vld [vmem:[#allocation8 + $0x418] sm:$0xff]
    %v949 = vld [vmem:[#allocation8 + $0x420] sm:$0xff]
    %v950 = vld [vmem:[#allocation8 + $0x428] sm:$0xff]
    %v951 = vld [vmem:[#allocation8 + $0x430] sm:$0xff]
    %v952 = vld [vmem:[#allocation8 + $0x438] sm:$0xff]
    %v953 = vld [vmem:[#allocation8 + $0x440] sm:$0xff]
    %v954 = vld [vmem:[#allocation8 + $0x448] sm:$0xff]
    %v955 = vld [vmem:[#allocation8 + $0x450] sm:$0xff]
    %v956 = vld [vmem:[#allocation8 + $0x458] sm:$0xff]
    %v957 = vld [vmem:[#allocation8 + $0x460] sm:$0xff]
    %v958 = vld [vmem:[#allocation8 + $0x468] sm:$0xff]
    %v959 = vld [vmem:[#allocation8 + $0x470] sm:$0xff]
    %v960 = vld [vmem:[#allocation8 + $0x478] sm:$0xff]
    %v961 = vld [vmem:[#allocation8 + $0x480] sm:$0xff]
    %v962 = vld [vmem:[#allocation8 + $0x488] sm:$0xff]
    %v963 = vld [vmem:[#allocation8 + $0x490] sm:$0xff]
    %v964 = vld [vmem:[#allocation8 + $0x498] sm:$0xff]
    %v965 = vld [vmem:[#allocation8 + $0x4a0] sm:$0xff]
    %v966 = vld [vmem:[#allocation8 + $0x4a8] sm:$0xff]
    %v967 = vld [vmem:[#allocation8 + $0x4b0] sm:$0xff]
    %v968 = vld [vmem:[#allocation8 + $0x4b8] sm:$0xff]
    %v969 = vld [vmem:[#allocation8 + $0x4c0] sm:$0xff]
    %v970 = vld [vmem:[#allocation8 + $0x4c8] sm:$0xff]
    %v971 = vld [vmem:[#allocation8 + $0x4d0] sm:$0xff]
    %v972 = vld [vmem:[#allocation8 + $0x4d8] sm:$0xff]
    %v973 = vld [vmem:[#allocation8 + $0x4e0] sm:$0xff]
    %v974 = vld [vmem:[#allocation8 + $0x4e8] sm:$0xff]
    %v975 = vld [vmem:[#allocation8 + $0x4f0] sm:$0xff]
    %v976 = vld [vmem:[#allocation8 + $0x4f8] sm:$0xff]
    %v977 = vld [vmem:[#allocation8 + $0x500] sm:$0xff]
    %v978 = vld [vmem:[#allocation8 + $0x508] sm:$0xff]
    %v979 = vld [vmem:[#allocation8 + $0x510] sm:$0xff]
    %v980 = vld [vmem:[#allocation8 + $0x518] sm:$0xff]
    %v981 = vld [vmem:[#allocation8 + $0x520] sm:$0xff]
    %v982 = vld [vmem:[#allocation8 + $0x528] sm:$0xff]
    %v983 = vld [vmem:[#allocation8 + $0x530] sm:$0xff]
    %v984 = vld [vmem:[#allocation8 + $0x538] sm:$0xff]
    %v985 = vld [vmem:[#allocation8 + $0x540] sm:$0xff]
    %v986 = vld [vmem:[#allocation8 + $0x548] sm:$0xff]
    %v987 = vld [vmem:[#allocation8 + $0x550] sm:$0xff]
    %v988 = vld [vmem:[#allocation8 + $0x558] sm:$0xff]
    %v989 = vld [vmem:[#allocation8 + $0x560] sm:$0xff]
    %v990 = vld [vmem:[#allocation8 + $0x568] sm:$0xff]
    %v991 = vld [vmem:[#allocation8 + $0x570] sm:$0xff]
    %v992 = vld [vmem:[#allocation8 + $0x578] sm:$0xff]
    %v993 = vld [vmem:[#allocation8 + $0x580] sm:$0xff]
    %v994 = vld [vmem:[#allocation8 + $0x588] sm:$0xff]
    %v995 = vld [vmem:[#allocation8 + $0x590] sm:$0xff]
    %v996 = vld [vmem:[#allocation8 + $0x598] sm:$0xff]
    %v997 = vld [vmem:[#allocation8 + $0x5a0] sm:$0xff]
    %v998 = vld [vmem:[#allocation8 + $0x5a8] sm:$0xff]
    %v999 = vld [vmem:[#allocation8 + $0x5b0] sm:$0xff]
    %v1000 = vld [vmem:[#allocation8 + $0x5b8] sm:$0xff]
    %v1001 = vld [vmem:[#allocation8 + $0x5c0] sm:$0xff]
    %v1002 = vld [vmem:[#allocation8 + $0x5c8] sm:$0xff]
    %v1003 = vld [vmem:[#allocation8 + $0x5d0] sm:$0xff]
    %v1004 = vld [vmem:[#allocation8 + $0x5d8] sm:$0xff]
    %v1005 = vld [vmem:[#allocation8 + $0x5e0] sm:$0xff]
    %v1006 = vld [vmem:[#allocation8 + $0x5e8] sm:$0xff]
    %v1007 = vld [vmem:[#allocation8 + $0x5f0] sm:$0xff]
    %v1008 = vld [vmem:[#allocation8 + $0x5f8] sm:$0xff]
    %v1009 = vld [vmem:[#allocation8 + $0x600] sm:$0xff]
    %v1010 = vld [vmem:[#allocation8 + $0x608] sm:$0xff]
    %v1011 = vld [vmem:[#allocation8 + $0x610] sm:$0xff]
    %v1012 = vld [vmem:[#allocation8 + $0x618] sm:$0xff]
    %v1013 = vld [vmem:[#allocation8 + $0x620] sm:$0xff]
    %v1014 = vld [vmem:[#allocation8 + $0x628] sm:$0xff]
    %v1015 = vld [vmem:[#allocation8 + $0x630] sm:$0xff]
    %v1016 = vld [vmem:[#allocation8 + $0x638] sm:$0xff]
    %v1017 = vld [vmem:[#allocation8 + $0x640] sm:$0xff]
    %v1018 = vld [vmem:[#allocation8 + $0x648] sm:$0xff]
    %v1019 = vld [vmem:[#allocation8 + $0x650] sm:$0xff]
    %v1020 = vld [vmem:[#allocation8 + $0x658] sm:$0xff]
    %v1021 = vld [vmem:[#allocation8 + $0x660] sm:$0xff]
    %v1022 = vld [vmem:[#allocation8 + $0x668] sm:$0xff]
    %v1023 = vld [vmem:[#allocation8 + $0x670] sm:$0xff]
    %v1024 = vld [vmem:[#allocation8 + $0x678] sm:$0xff]
    %v1025 = vld [vmem:[#allocation8 + $0x680] sm:$0xff]
    %v1026 = vld [vmem:[#allocation8 + $0x688] sm:$0xff]
    %v1027 = vld [vmem:[#allocation8 + $0x690] sm:$0xff]
    %v1028 = vld [vmem:[#allocation8 + $0x698] sm:$0xff]
    %v1029 = vld [vmem:[#allocation8 + $0x6a0] sm:$0xff]
    %v1030 = vld [vmem:[#allocation8 + $0x6a8] sm:$0xff]
    %v1031 = vld [vmem:[#allocation8 + $0x6b0] sm:$0xff]
    %v1032 = vld [vmem:[#allocation8 + $0x6b8] sm:$0xff]
    %v1033 = vld [vmem:[#allocation8 + $0x6c0] sm:$0xff]
    %v1034 = vld [vmem:[#allocation8 + $0x6c8] sm:$0xff]
    %v1035 = vld [vmem:[#allocation8 + $0x6d0] sm:$0xff]
    %v1036 = vld [vmem:[#allocation8 + $0x6d8] sm:$0xff]
    %v1037 = vld [vmem:[#allocation8 + $0x6e0] sm:$0xff]
    %v1038 = vld [vmem:[#allocation8 + $0x6e8] sm:$0xff]
    %v1039 = vld [vmem:[#allocation8 + $0x6f0] sm:$0xff]
    %v1040 = vld [vmem:[#allocation8 + $0x6f8] sm:$0xff]
    %v1041 = vld [vmem:[#allocation8 + $0x700] sm:$0xff]
    %v1042 = vld [vmem:[#allocation8 + $0x708] sm:$0xff]
    %v1043 = vld [vmem:[#allocation8 + $0x710] sm:$0xff]
    %v1044 = vld [vmem:[#allocation8 + $0x718] sm:$0xff]
    %v1045 = vld [vmem:[#allocation8 + $0x720] sm:$0xff]
    %v1046 = vld [vmem:[#allocation8 + $0x728] sm:$0xff]
    %v1047 = vld [vmem:[#allocation8 + $0x730] sm:$0xff]
    %v1048 = vld [vmem:[#allocation8 + $0x738] sm:$0xff]
    %v1049 = vld [vmem:[#allocation8 + $0x740] sm:$0xff]
    %v1050 = vld [vmem:[#allocation8 + $0x748] sm:$0xff]
    %v1051 = vld [vmem:[#allocation8 + $0x750] sm:$0xff]
    %v1052 = vld [vmem:[#allocation8 + $0x758] sm:$0xff]
    %v1053 = vld [vmem:[#allocation8 + $0x760] sm:$0xff]
    %v1054 = vld [vmem:[#allocation8 + $0x768] sm:$0xff]
    %v1055 = vld [vmem:[#allocation8 + $0x770] sm:$0xff]
    %v1056 = vld [vmem:[#allocation8 + $0x778] sm:$0xff]
    %v1057 = vld [vmem:[#allocation8 + $0x780] sm:$0xff]
    %v1058 = vld [vmem:[#allocation8 + $0x788] sm:$0xff]
    %v1059 = vld [vmem:[#allocation8 + $0x790] sm:$0xff]
    %v1060 = vld [vmem:[#allocation8 + $0x798] sm:$0xff]
    %v1061 = vld [vmem:[#allocation8 + $0x7a0] sm:$0xff]
    %v1062 = vld [vmem:[#allocation8 + $0x7a8] sm:$0xff]
    %v1063 = vld [vmem:[#allocation8 + $0x7b0] sm:$0xff]
    %v1064 = vld [vmem:[#allocation8 + $0x7b8] sm:$0xff]
    %v1065 = vld [vmem:[#allocation8 + $0x7c0] sm:$0xff]
    %v1066 = vld [vmem:[#allocation8 + $0x7c8] sm:$0xff]
    %v1067 = vld [vmem:[#allocation8 + $0x7d0] sm:$0xff]
    %v1068 = vld [vmem:[#allocation8 + $0x7d8] sm:$0xff]
    %v1069 = vld [vmem:[#allocation8 + $0x7e0] sm:$0xff]
    %v1070 = vld [vmem:[#allocation8 + $0x7e8] sm:$0xff]
    %v1071 = vld [vmem:[#allocation8 + $0x7f0] sm:$0xff]
    %v1072 = vld [vmem:[#allocation8 + $0x7f8] sm:$0xff]
    %v1073 = vld [vmem:[%s4] sm:$0xf]
    %v1075 = vlaneseq
    %v1076 = vshrl.u32 %v1075, 7
    %v1077 = vsub.s32 0, %v1076
    %v1078 = vrot.slane %v1073, %v1077
    %v1079 = vlaneseq
    %v1080 = vshrl.u32 %v1079, 7
    %v1081 = vsub.s32 1, %v1080
    %v1082 = vrot.slane %v1073, %v1081
    %v1083 = vlaneseq
    %v1084 = vshrl.u32 %v1083, 7
    %v1085 = vsub.s32 2, %v1084
    %v1086 = vrot.slane %v1073, %v1085
    %v1087 = vlaneseq
    %v1088 = vshrl.u32 %v1087, 7
    %v1089 = vsub.s32 3, %v1088
    %v1090 = vrot.slane %v1073, %v1089
    %v1351 = vunpack.c.l.b16 %v817
    %v1352 = vunpack.c.h.b16 %v817
    %v1353 = vunpack.c.l.b16 %v818
    %v1354 = vunpack.c.h.b16 %v818
    %v1355 = vunpack.c.l.b16 %v819
    %v1356 = vunpack.c.h.b16 %v819
    %v1357 = vunpack.c.l.b16 %v820
    %v1358 = vunpack.c.h.b16 %v820
    %v1359 = vunpack.c.l.b16 %v821
    %v1360 = vunpack.c.h.b16 %v821
    %v1361 = vunpack.c.l.b16 %v822
    %v1362 = vunpack.c.h.b16 %v822
    %v1363 = vunpack.c.l.b16 %v823
    %v1364 = vunpack.c.h.b16 %v823
    %v1365 = vunpack.c.l.b16 %v824
    %v1366 = vunpack.c.h.b16 %v824
    %v1367 = vunpack.c.l.b16 %v825
    %v1368 = vunpack.c.h.b16 %v825
    %v1369 = vunpack.c.l.b16 %v826
    %v1370 = vunpack.c.h.b16 %v826
    %v1371 = vunpack.c.l.b16 %v827
    %v1372 = vunpack.c.h.b16 %v827
    %v1373 = vunpack.c.l.b16 %v828
    %v1374 = vunpack.c.h.b16 %v828
    %v1375 = vunpack.c.l.b16 %v829
    %v1376 = vunpack.c.h.b16 %v829
    %v1377 = vunpack.c.l.b16 %v830
    %v1378 = vunpack.c.h.b16 %v830
    %v1379 = vunpack.c.l.b16 %v831
    %v1380 = vunpack.c.h.b16 %v831
    %v1381 = vunpack.c.l.b16 %v832
    %v1382 = vunpack.c.h.b16 %v832
    %v1383 = vunpack.c.l.b16 %v833
    %v1384 = vunpack.c.h.b16 %v833
    %v1385 = vunpack.c.l.b16 %v834
    %v1386 = vunpack.c.h.b16 %v834
    %v1387 = vunpack.c.l.b16 %v835
    %v1388 = vunpack.c.h.b16 %v835
    %v1389 = vunpack.c.l.b16 %v836
    %v1390 = vunpack.c.h.b16 %v836
    %v1391 = vunpack.c.l.b16 %v837
    %v1392 = vunpack.c.h.b16 %v837
    %v1393 = vunpack.c.l.b16 %v838
    %v1394 = vunpack.c.h.b16 %v838
    %v1395 = vunpack.c.l.b16 %v839
    %v1396 = vunpack.c.h.b16 %v839
    %v1397 = vunpack.c.l.b16 %v840
    %v1398 = vunpack.c.h.b16 %v840
    %v1399 = vunpack.c.l.b16 %v841
    %v1400 = vunpack.c.h.b16 %v841
    %v1401 = vunpack.c.l.b16 %v842
    %v1402 = vunpack.c.h.b16 %v842
    %v1403 = vunpack.c.l.b16 %v843
    %v1404 = vunpack.c.h.b16 %v843
    %v1405 = vunpack.c.l.b16 %v844
    %v1406 = vunpack.c.h.b16 %v844
    %v1407 = vunpack.c.l.b16 %v845
    %v1408 = vunpack.c.h.b16 %v845
    %v1409 = vunpack.c.l.b16 %v846
    %v1410 = vunpack.c.h.b16 %v846
    %v1411 = vunpack.c.l.b16 %v847
    %v1412 = vunpack.c.h.b16 %v847
    %v1413 = vunpack.c.l.b16 %v848
    %v1414 = vunpack.c.h.b16 %v848
    %v1415 = vunpack.c.l.b16 %v849
    %v1416 = vunpack.c.h.b16 %v849
    %v1417 = vunpack.c.l.b16 %v850
    %v1418 = vunpack.c.h.b16 %v850
    %v1419 = vunpack.c.l.b16 %v851
    %v1420 = vunpack.c.h.b16 %v851
    %v1421 = vunpack.c.l.b16 %v852
    %v1422 = vunpack.c.h.b16 %v852
    %v1423 = vunpack.c.l.b16 %v853
    %v1424 = vunpack.c.h.b16 %v853
    %v1425 = vunpack.c.l.b16 %v854
    %v1426 = vunpack.c.h.b16 %v854
    %v1427 = vunpack.c.l.b16 %v855
    %v1428 = vunpack.c.h.b16 %v855
    %v1429 = vunpack.c.l.b16 %v856
    %v1430 = vunpack.c.h.b16 %v856
    %v1431 = vunpack.c.l.b16 %v857
    %v1432 = vunpack.c.h.b16 %v857
    %v1433 = vunpack.c.l.b16 %v858
    %v1434 = vunpack.c.h.b16 %v858
    %v1435 = vunpack.c.l.b16 %v859
    %v1436 = vunpack.c.h.b16 %v859
    %v1437 = vunpack.c.l.b16 %v860
    %v1438 = vunpack.c.h.b16 %v860
    %v1439 = vunpack.c.l.b16 %v861
    %v1440 = vunpack.c.h.b16 %v861
    %v1441 = vunpack.c.l.b16 %v862
    %v1442 = vunpack.c.h.b16 %v862
    %v1443 = vunpack.c.l.b16 %v863
    %v1444 = vunpack.c.h.b16 %v863
    %v1445 = vunpack.c.l.b16 %v864
    %v1446 = vunpack.c.h.b16 %v864
    %v1447 = vunpack.c.l.b16 %v865
    %v1448 = vunpack.c.h.b16 %v865
    %v1449 = vunpack.c.l.b16 %v866
    %v1450 = vunpack.c.h.b16 %v866
    %v1451 = vunpack.c.l.b16 %v867
    %v1452 = vunpack.c.h.b16 %v867
    %v1453 = vunpack.c.l.b16 %v868
    %v1454 = vunpack.c.h.b16 %v868
    %v1455 = vunpack.c.l.b16 %v869
    %v1456 = vunpack.c.h.b16 %v869
    %v1457 = vunpack.c.l.b16 %v870
    %v1458 = vunpack.c.h.b16 %v870
    %v1459 = vunpack.c.l.b16 %v871
    %v1460 = vunpack.c.h.b16 %v871
    %v1461 = vunpack.c.l.b16 %v872
    %v1462 = vunpack.c.h.b16 %v872
    %v1463 = vunpack.c.l.b16 %v873
    %v1464 = vunpack.c.h.b16 %v873
    %v1465 = vunpack.c.l.b16 %v874
    %v1466 = vunpack.c.h.b16 %v874
    %v1467 = vunpack.c.l.b16 %v875
    %v1468 = vunpack.c.h.b16 %v875
    %v1469 = vunpack.c.l.b16 %v876
    %v1470 = vunpack.c.h.b16 %v876
    %v1471 = vunpack.c.l.b16 %v877
    %v1472 = vunpack.c.h.b16 %v877
    %v1473 = vunpack.c.l.b16 %v878
    %v1474 = vunpack.c.h.b16 %v878
    %v1475 = vunpack.c.l.b16 %v879
    %v1476 = vunpack.c.h.b16 %v879
    %v1477 = vunpack.c.l.b16 %v880
    %v1478 = vunpack.c.h.b16 %v880
    %v1479 = vunpack.c.l.b16 %v881
    %v1480 = vunpack.c.h.b16 %v881
    %v1481 = vunpack.c.l.b16 %v882
    %v1482 = vunpack.c.h.b16 %v882
    %v1483 = vunpack.c.l.b16 %v883
    %v1484 = vunpack.c.h.b16 %v883
    %v1485 = vunpack.c.l.b16 %v884
    %v1486 = vunpack.c.h.b16 %v884
    %v1487 = vunpack.c.l.b16 %v885
    %v1488 = vunpack.c.h.b16 %v885
    %v1489 = vunpack.c.l.b16 %v886
    %v1490 = vunpack.c.h.b16 %v886
    %v1491 = vunpack.c.l.b16 %v887
    %v1492 = vunpack.c.h.b16 %v887
    %v1493 = vunpack.c.l.b16 %v888
    %v1494 = vunpack.c.h.b16 %v888
    %v1495 = vunpack.c.l.b16 %v889
    %v1496 = vunpack.c.h.b16 %v889
    %v1497 = vunpack.c.l.b16 %v890
    %v1498 = vunpack.c.h.b16 %v890
    %v1499 = vunpack.c.l.b16 %v891
    %v1500 = vunpack.c.h.b16 %v891
    %v1501 = vunpack.c.l.b16 %v892
    %v1502 = vunpack.c.h.b16 %v892
    %v1503 = vunpack.c.l.b16 %v893
    %v1504 = vunpack.c.h.b16 %v893
    %v1505 = vunpack.c.l.b16 %v894
    %v1506 = vunpack.c.h.b16 %v894
    %v1507 = vunpack.c.l.b16 %v895
    %v1508 = vunpack.c.h.b16 %v895
    %v1509 = vunpack.c.l.b16 %v896
    %v1510 = vunpack.c.h.b16 %v896
    %v1511 = vunpack.c.l.b16 %v897
    %v1512 = vunpack.c.h.b16 %v897
    %v1513 = vunpack.c.l.b16 %v898
    %v1514 = vunpack.c.h.b16 %v898
    %v1515 = vunpack.c.l.b16 %v899
    %v1516 = vunpack.c.h.b16 %v899
    %v1517 = vunpack.c.l.b16 %v900
    %v1518 = vunpack.c.h.b16 %v900
    %v1519 = vunpack.c.l.b16 %v901
    %v1520 = vunpack.c.h.b16 %v901
    %v1521 = vunpack.c.l.b16 %v902
    %v1522 = vunpack.c.h.b16 %v902
    %v1523 = vunpack.c.l.b16 %v903
    %v1524 = vunpack.c.h.b16 %v903
    %v1525 = vunpack.c.l.b16 %v904
    %v1526 = vunpack.c.h.b16 %v904
    %v1527 = vunpack.c.l.b16 %v905
    %v1528 = vunpack.c.h.b16 %v905
    %v1529 = vunpack.c.l.b16 %v906
    %v1530 = vunpack.c.h.b16 %v906
    %v1531 = vunpack.c.l.b16 %v907
    %v1532 = vunpack.c.h.b16 %v907
    %v1533 = vunpack.c.l.b16 %v908
    %v1534 = vunpack.c.h.b16 %v908
    %v1535 = vunpack.c.l.b16 %v909
    %v1536 = vunpack.c.h.b16 %v909
    %v1537 = vunpack.c.l.b16 %v910
    %v1538 = vunpack.c.h.b16 %v910
    %v1539 = vunpack.c.l.b16 %v911
    %v1540 = vunpack.c.h.b16 %v911
    %v1541 = vunpack.c.l.b16 %v912
    %v1542 = vunpack.c.h.b16 %v912
    %v1543 = vunpack.c.l.b16 %v913
    %v1544 = vunpack.c.h.b16 %v913
    %v1545 = vunpack.c.l.b16 %v914
    %v1546 = vunpack.c.h.b16 %v914
    %v1547 = vunpack.c.l.b16 %v915
    %v1548 = vunpack.c.h.b16 %v915
    %v1549 = vunpack.c.l.b16 %v916
    %v1550 = vunpack.c.h.b16 %v916
    %v1551 = vunpack.c.l.b16 %v917
    %v1552 = vunpack.c.h.b16 %v917
    %v1553 = vunpack.c.l.b16 %v918
    %v1554 = vunpack.c.h.b16 %v918
    %v1555 = vunpack.c.l.b16 %v919
    %v1556 = vunpack.c.h.b16 %v919
    %v1557 = vunpack.c.l.b16 %v920
    %v1558 = vunpack.c.h.b16 %v920
    %v1559 = vunpack.c.l.b16 %v921
    %v1560 = vunpack.c.h.b16 %v921
    %v1561 = vunpack.c.l.b16 %v922
    %v1562 = vunpack.c.h.b16 %v922
    %v1563 = vunpack.c.l.b16 %v923
    %v1564 = vunpack.c.h.b16 %v923
    %v1565 = vunpack.c.l.b16 %v924
    %v1566 = vunpack.c.h.b16 %v924
    %v1567 = vunpack.c.l.b16 %v925
    %v1568 = vunpack.c.h.b16 %v925
    %v1569 = vunpack.c.l.b16 %v926
    %v1570 = vunpack.c.h.b16 %v926
    %v1571 = vunpack.c.l.b16 %v927
    %v1572 = vunpack.c.h.b16 %v927
    %v1573 = vunpack.c.l.b16 %v928
    %v1574 = vunpack.c.h.b16 %v928
    %v1575 = vunpack.c.l.b16 %v929
    %v1576 = vunpack.c.h.b16 %v929
    %v1577 = vunpack.c.l.b16 %v930
    %v1578 = vunpack.c.h.b16 %v930
    %v1579 = vunpack.c.l.b16 %v931
    %v1580 = vunpack.c.h.b16 %v931
    %v1581 = vunpack.c.l.b16 %v932
    %v1582 = vunpack.c.h.b16 %v932
    %v1583 = vunpack.c.l.b16 %v933
    %v1584 = vunpack.c.h.b16 %v933
    %v1585 = vunpack.c.l.b16 %v934
    %v1586 = vunpack.c.h.b16 %v934
    %v1587 = vunpack.c.l.b16 %v935
    %v1588 = vunpack.c.h.b16 %v935
    %v1589 = vunpack.c.l.b16 %v936
    %v1590 = vunpack.c.h.b16 %v936
    %v1591 = vunpack.c.l.b16 %v937
    %v1592 = vunpack.c.h.b16 %v937
    %v1593 = vunpack.c.l.b16 %v938
    %v1594 = vunpack.c.h.b16 %v938
    %v1595 = vunpack.c.l.b16 %v939
    %v1596 = vunpack.c.h.b16 %v939
    %v1597 = vunpack.c.l.b16 %v940
    %v1598 = vunpack.c.h.b16 %v940
    %v1599 = vunpack.c.l.b16 %v941
    %v1600 = vunpack.c.h.b16 %v941
    %v1601 = vunpack.c.l.b16 %v942
    %v1602 = vunpack.c.h.b16 %v942
    %v1603 = vunpack.c.l.b16 %v943
    %v1604 = vunpack.c.h.b16 %v943
    %v1605 = vunpack.c.l.b16 %v944
    %v1606 = vunpack.c.h.b16 %v944
    %v1607 = vunpack.c.l.b16 %v945
    %v1608 = vunpack.c.h.b16 %v945
    %v1609 = vunpack.c.l.b16 %v946
    %v1610 = vunpack.c.h.b16 %v946
    %v1611 = vunpack.c.l.b16 %v947
    %v1612 = vunpack.c.h.b16 %v947
    %v1613 = vunpack.c.l.b16 %v948
    %v1614 = vunpack.c.h.b16 %v948
    %v1615 = vunpack.c.l.b16 %v949
    %v1616 = vunpack.c.h.b16 %v949
    %v1617 = vunpack.c.l.b16 %v950
    %v1618 = vunpack.c.h.b16 %v950
    %v1619 = vunpack.c.l.b16 %v951
    %v1620 = vunpack.c.h.b16 %v951
    %v1621 = vunpack.c.l.b16 %v952
    %v1622 = vunpack.c.h.b16 %v952
    %v1623 = vunpack.c.l.b16 %v953
    %v1624 = vunpack.c.h.b16 %v953
    %v1625 = vunpack.c.l.b16 %v954
    %v1626 = vunpack.c.h.b16 %v954
    %v1627 = vunpack.c.l.b16 %v955
    %v1628 = vunpack.c.h.b16 %v955
    %v1629 = vunpack.c.l.b16 %v956
    %v1630 = vunpack.c.h.b16 %v956
    %v1631 = vunpack.c.l.b16 %v957
    %v1632 = vunpack.c.h.b16 %v957
    %v1633 = vunpack.c.l.b16 %v958
    %v1634 = vunpack.c.h.b16 %v958
    %v1635 = vunpack.c.l.b16 %v959
    %v1636 = vunpack.c.h.b16 %v959
    %v1637 = vunpack.c.l.b16 %v960
    %v1638 = vunpack.c.h.b16 %v960
    %v1639 = vunpack.c.l.b16 %v961
    %v1640 = vunpack.c.h.b16 %v961
    %v1641 = vunpack.c.l.b16 %v962
    %v1642 = vunpack.c.h.b16 %v962
    %v1643 = vunpack.c.l.b16 %v963
    %v1644 = vunpack.c.h.b16 %v963
    %v1645 = vunpack.c.l.b16 %v964
    %v1646 = vunpack.c.h.b16 %v964
    %v1647 = vunpack.c.l.b16 %v965
    %v1648 = vunpack.c.h.b16 %v965
    %v1649 = vunpack.c.l.b16 %v966
    %v1650 = vunpack.c.h.b16 %v966
    %v1651 = vunpack.c.l.b16 %v967
    %v1652 = vunpack.c.h.b16 %v967
    %v1653 = vunpack.c.l.b16 %v968
    %v1654 = vunpack.c.h.b16 %v968
    %v1655 = vunpack.c.l.b16 %v969
    %v1656 = vunpack.c.h.b16 %v969
    %v1657 = vunpack.c.l.b16 %v970
    %v1658 = vunpack.c.h.b16 %v970
    %v1659 = vunpack.c.l.b16 %v971
    %v1660 = vunpack.c.h.b16 %v971
    %v1661 = vunpack.c.l.b16 %v972
    %v1662 = vunpack.c.h.b16 %v972
    %v1663 = vunpack.c.l.b16 %v973
    %v1664 = vunpack.c.h.b16 %v973
    %v1665 = vunpack.c.l.b16 %v974
    %v1666 = vunpack.c.h.b16 %v974
    %v1667 = vunpack.c.l.b16 %v975
    %v1668 = vunpack.c.h.b16 %v975
    %v1669 = vunpack.c.l.b16 %v976
    %v1670 = vunpack.c.h.b16 %v976
    %v1671 = vunpack.c.l.b16 %v977
    %v1672 = vunpack.c.h.b16 %v977
    %v1673 = vunpack.c.l.b16 %v978
    %v1674 = vunpack.c.h.b16 %v978
    %v1675 = vunpack.c.l.b16 %v979
    %v1676 = vunpack.c.h.b16 %v979
    %v1677 = vunpack.c.l.b16 %v980
    %v1678 = vunpack.c.h.b16 %v980
    %v1679 = vunpack.c.l.b16 %v981
    %v1680 = vunpack.c.h.b16 %v981
    %v1681 = vunpack.c.l.b16 %v982
    %v1682 = vunpack.c.h.b16 %v982
    %v1683 = vunpack.c.l.b16 %v983
    %v1684 = vunpack.c.h.b16 %v983
    %v1685 = vunpack.c.l.b16 %v984
    %v1686 = vunpack.c.h.b16 %v984
    %v1687 = vunpack.c.l.b16 %v985
    %v1688 = vunpack.c.h.b16 %v985
    %v1689 = vunpack.c.l.b16 %v986
    %v1690 = vunpack.c.h.b16 %v986
    %v1691 = vunpack.c.l.b16 %v987
    %v1692 = vunpack.c.h.b16 %v987
    %v1693 = vunpack.c.l.b16 %v988
    %v1694 = vunpack.c.h.b16 %v988
    %v1695 = vunpack.c.l.b16 %v989
    %v1696 = vunpack.c.h.b16 %v989
    %v1697 = vunpack.c.l.b16 %v990
    %v1698 = vunpack.c.h.b16 %v990
    %v1699 = vunpack.c.l.b16 %v991
    %v1700 = vunpack.c.h.b16 %v991
    %v1701 = vunpack.c.l.b16 %v992
    %v1702 = vunpack.c.h.b16 %v992
    %v1703 = vunpack.c.l.b16 %v993
    %v1704 = vunpack.c.h.b16 %v993
    %v1705 = vunpack.c.l.b16 %v994
    %v1706 = vunpack.c.h.b16 %v994
    %v1707 = vunpack.c.l.b16 %v995
    %v1708 = vunpack.c.h.b16 %v995
    %v1709 = vunpack.c.l.b16 %v996
    %v1710 = vunpack.c.h.b16 %v996
    %v1711 = vunpack.c.l.b16 %v997
    %v1712 = vunpack.c.h.b16 %v997
    %v1713 = vunpack.c.l.b16 %v998
    %v1714 = vunpack.c.h.b16 %v998
    %v1715 = vunpack.c.l.b16 %v999
    %v1716 = vunpack.c.h.b16 %v999
    %v1717 = vunpack.c.l.b16 %v1000
    %v1718 = vunpack.c.h.b16 %v1000
    %v1719 = vunpack.c.l.b16 %v1001
    %v1720 = vunpack.c.h.b16 %v1001
    %v1721 = vunpack.c.l.b16 %v1002
    %v1722 = vunpack.c.h.b16 %v1002
    %v1723 = vunpack.c.l.b16 %v1003
    %v1724 = vunpack.c.h.b16 %v1003
    %v1725 = vunpack.c.l.b16 %v1004
    %v1726 = vunpack.c.h.b16 %v1004
    %v1727 = vunpack.c.l.b16 %v1005
    %v1728 = vunpack.c.h.b16 %v1005
    %v1729 = vunpack.c.l.b16 %v1006
    %v1730 = vunpack.c.h.b16 %v1006
    %v1731 = vunpack.c.l.b16 %v1007
    %v1732 = vunpack.c.h.b16 %v1007
    %v1733 = vunpack.c.l.b16 %v1008
    %v1734 = vunpack.c.h.b16 %v1008
    %v1735 = vunpack.c.l.b16 %v1009
    %v1736 = vunpack.c.h.b16 %v1009
    %v1737 = vunpack.c.l.b16 %v1010
    %v1738 = vunpack.c.h.b16 %v1010
    %v1739 = vunpack.c.l.b16 %v1011
    %v1740 = vunpack.c.h.b16 %v1011
    %v1741 = vunpack.c.l.b16 %v1012
    %v1742 = vunpack.c.h.b16 %v1012
    %v1743 = vunpack.c.l.b16 %v1013
    %v1744 = vunpack.c.h.b16 %v1013
    %v1745 = vunpack.c.l.b16 %v1014
    %v1746 = vunpack.c.h.b16 %v1014
    %v1747 = vunpack.c.l.b16 %v1015
    %v1748 = vunpack.c.h.b16 %v1015
    %v1749 = vunpack.c.l.b16 %v1016
    %v1750 = vunpack.c.h.b16 %v1016
    %v1751 = vunpack.c.l.b16 %v1017
    %v1752 = vunpack.c.h.b16 %v1017
    %v1753 = vunpack.c.l.b16 %v1018
    %v1754 = vunpack.c.h.b16 %v1018
    %v1755 = vunpack.c.l.b16 %v1019
    %v1756 = vunpack.c.h.b16 %v1019
    %v1757 = vunpack.c.l.b16 %v1020
    %v1758 = vunpack.c.h.b16 %v1020
    %v1759 = vunpack.c.l.b16 %v1021
    %v1760 = vunpack.c.h.b16 %v1021
    %v1761 = vunpack.c.l.b16 %v1022
    %v1762 = vunpack.c.h.b16 %v1022
    %v1763 = vunpack.c.l.b16 %v1023
    %v1764 = vunpack.c.h.b16 %v1023
    %v1765 = vunpack.c.l.b16 %v1024
    %v1766 = vunpack.c.h.b16 %v1024
    %v1767 = vunpack.c.l.b16 %v1025
    %v1768 = vunpack.c.h.b16 %v1025
    %v1769 = vunpack.c.l.b16 %v1026
    %v1770 = vunpack.c.h.b16 %v1026
    %v1771 = vunpack.c.l.b16 %v1027
    %v1772 = vunpack.c.h.b16 %v1027
    %v1773 = vunpack.c.l.b16 %v1028
    %v1774 = vunpack.c.h.b16 %v1028
    %v1775 = vunpack.c.l.b16 %v1029
    %v1776 = vunpack.c.h.b16 %v1029
    %v1777 = vunpack.c.l.b16 %v1030
    %v1778 = vunpack.c.h.b16 %v1030
    %v1779 = vunpack.c.l.b16 %v1031
    %v1780 = vunpack.c.h.b16 %v1031
    %v1781 = vunpack.c.l.b16 %v1032
    %v1782 = vunpack.c.h.b16 %v1032
    %v1783 = vunpack.c.l.b16 %v1033
    %v1784 = vunpack.c.h.b16 %v1033
    %v1785 = vunpack.c.l.b16 %v1034
    %v1786 = vunpack.c.h.b16 %v1034
    %v1787 = vunpack.c.l.b16 %v1035
    %v1788 = vunpack.c.h.b16 %v1035
    %v1789 = vunpack.c.l.b16 %v1036
    %v1790 = vunpack.c.h.b16 %v1036
    %v1791 = vunpack.c.l.b16 %v1037
    %v1792 = vunpack.c.h.b16 %v1037
    %v1793 = vunpack.c.l.b16 %v1038
    %v1794 = vunpack.c.h.b16 %v1038
    %v1795 = vunpack.c.l.b16 %v1039
    %v1796 = vunpack.c.h.b16 %v1039
    %v1797 = vunpack.c.l.b16 %v1040
    %v1798 = vunpack.c.h.b16 %v1040
    %v1799 = vunpack.c.l.b16 %v1041
    %v1800 = vunpack.c.h.b16 %v1041
    %v1801 = vunpack.c.l.b16 %v1042
    %v1802 = vunpack.c.h.b16 %v1042
    %v1803 = vunpack.c.l.b16 %v1043
    %v1804 = vunpack.c.h.b16 %v1043
    %v1805 = vunpack.c.l.b16 %v1044
    %v1806 = vunpack.c.h.b16 %v1044
    %v1807 = vunpack.c.l.b16 %v1045
    %v1808 = vunpack.c.h.b16 %v1045
    %v1809 = vunpack.c.l.b16 %v1046
    %v1810 = vunpack.c.h.b16 %v1046
    %v1811 = vunpack.c.l.b16 %v1047
    %v1812 = vunpack.c.h.b16 %v1047
    %v1813 = vunpack.c.l.b16 %v1048
    %v1814 = vunpack.c.h.b16 %v1048
    %v1815 = vunpack.c.l.b16 %v1049
    %v1816 = vunpack.c.h.b16 %v1049
    %v1817 = vunpack.c.l.b16 %v1050
    %v1818 = vunpack.c.h.b16 %v1050
    %v1819 = vunpack.c.l.b16 %v1051
    %v1820 = vunpack.c.h.b16 %v1051
    %v1821 = vunpack.c.l.b16 %v1052
    %v1822 = vunpack.c.h.b16 %v1052
    %v1823 = vunpack.c.l.b16 %v1053
    %v1824 = vunpack.c.h.b16 %v1053
    %v1825 = vunpack.c.l.b16 %v1054
    %v1826 = vunpack.c.h.b16 %v1054
    %v1827 = vunpack.c.l.b16 %v1055
    %v1828 = vunpack.c.h.b16 %v1055
    %v1829 = vunpack.c.l.b16 %v1056
    %v1830 = vunpack.c.h.b16 %v1056
    %v1831 = vunpack.c.l.b16 %v1057
    %v1832 = vunpack.c.h.b16 %v1057
    %v1833 = vunpack.c.l.b16 %v1058
    %v1834 = vunpack.c.h.b16 %v1058
    %v1835 = vunpack.c.l.b16 %v1059
    %v1836 = vunpack.c.h.b16 %v1059
    %v1837 = vunpack.c.l.b16 %v1060
    %v1838 = vunpack.c.h.b16 %v1060
    %v1839 = vunpack.c.l.b16 %v1061
    %v1840 = vunpack.c.h.b16 %v1061
    %v1841 = vunpack.c.l.b16 %v1062
    %v1842 = vunpack.c.h.b16 %v1062
    %v1843 = vunpack.c.l.b16 %v1063
    %v1844 = vunpack.c.h.b16 %v1063
    %v1845 = vunpack.c.l.b16 %v1064
    %v1846 = vunpack.c.h.b16 %v1064
    %v1847 = vunpack.c.l.b16 %v1065
    %v1848 = vunpack.c.h.b16 %v1065
    %v1849 = vunpack.c.l.b16 %v1066
    %v1850 = vunpack.c.h.b16 %v1066
    %v1851 = vunpack.c.l.b16 %v1067
    %v1852 = vunpack.c.h.b16 %v1067
    %v1853 = vunpack.c.l.b16 %v1068
    %v1854 = vunpack.c.h.b16 %v1068
    %v1855 = vunpack.c.l.b16 %v1069
    %v1856 = vunpack.c.h.b16 %v1069
    %v1857 = vunpack.c.l.b16 %v1070
    %v1858 = vunpack.c.h.b16 %v1070
    %v1859 = vunpack.c.l.b16 %v1071
    %v1860 = vunpack.c.h.b16 %v1071
    %v1861 = vunpack.c.l.b16 %v1072
    %v1862 = vunpack.c.h.b16 %v1072
    %v1863 = vpack.c.b16 %v1355, %v1351
    %v1864 = vpack.c.b16 %v1356, %v1352
    %v1865 = vpack.c.b16 %v1357, %v1353
    %v1866 = vpack.c.b16 %v1358, %v1354
    %v1867 = vpack.c.b16 %v1363, %v1359
    %v1868 = vpack.c.b16 %v1364, %v1360
    %v1869 = vpack.c.b16 %v1365, %v1361
    %v1870 = vpack.c.b16 %v1366, %v1362
    %v1871 = vpack.c.b16 %v1371, %v1367
    %v1872 = vpack.c.b16 %v1372, %v1368
    %v1873 = vpack.c.b16 %v1373, %v1369
    %v1874 = vpack.c.b16 %v1374, %v1370
    %v1875 = vpack.c.b16 %v1379, %v1375
    %v1876 = vpack.c.b16 %v1380, %v1376
    %v1877 = vpack.c.b16 %v1381, %v1377
    %v1878 = vpack.c.b16 %v1382, %v1378
    %v1879 = vpack.c.b16 %v1387, %v1383
    %v1880 = vpack.c.b16 %v1388, %v1384
    %v1881 = vpack.c.b16 %v1389, %v1385
    %v1882 = vpack.c.b16 %v1390, %v1386
    %v1883 = vpack.c.b16 %v1395, %v1391
    %v1884 = vpack.c.b16 %v1396, %v1392
    %v1885 = vpack.c.b16 %v1397, %v1393
    %v1886 = vpack.c.b16 %v1398, %v1394
    %v1887 = vpack.c.b16 %v1403, %v1399
    %v1888 = vpack.c.b16 %v1404, %v1400
    %v1889 = vpack.c.b16 %v1405, %v1401
    %v1890 = vpack.c.b16 %v1406, %v1402
    %v1891 = vpack.c.b16 %v1411, %v1407
    %v1892 = vpack.c.b16 %v1412, %v1408
    %v1893 = vpack.c.b16 %v1413, %v1409
    %v1894 = vpack.c.b16 %v1414, %v1410
    %v1895 = vpack.c.b16 %v1419, %v1415
    %v1896 = vpack.c.b16 %v1420, %v1416
    %v1897 = vpack.c.b16 %v1421, %v1417
    %v1898 = vpack.c.b16 %v1422, %v1418
    %v1899 = vpack.c.b16 %v1427, %v1423
    %v1900 = vpack.c.b16 %v1428, %v1424
    %v1901 = vpack.c.b16 %v1429, %v1425
    %v1902 = vpack.c.b16 %v1430, %v1426
    %v1903 = vpack.c.b16 %v1435, %v1431
    %v1904 = vpack.c.b16 %v1436, %v1432
    %v1905 = vpack.c.b16 %v1437, %v1433
    %v1906 = vpack.c.b16 %v1438, %v1434
    %v1907 = vpack.c.b16 %v1443, %v1439
    %v1908 = vpack.c.b16 %v1444, %v1440
    %v1909 = vpack.c.b16 %v1445, %v1441
    %v1910 = vpack.c.b16 %v1446, %v1442
    %v1911 = vpack.c.b16 %v1451, %v1447
    %v1912 = vpack.c.b16 %v1452, %v1448
    %v1913 = vpack.c.b16 %v1453, %v1449
    %v1914 = vpack.c.b16 %v1454, %v1450
    %v1915 = vpack.c.b16 %v1459, %v1455
    %v1916 = vpack.c.b16 %v1460, %v1456
    %v1917 = vpack.c.b16 %v1461, %v1457
    %v1918 = vpack.c.b16 %v1462, %v1458
    %v1919 = vpack.c.b16 %v1467, %v1463
    %v1920 = vpack.c.b16 %v1468, %v1464
    %v1921 = vpack.c.b16 %v1469, %v1465
    %v1922 = vpack.c.b16 %v1470, %v1466
    %v1923 = vpack.c.b16 %v1475, %v1471
    %v1924 = vpack.c.b16 %v1476, %v1472
    %v1925 = vpack.c.b16 %v1477, %v1473
    %v1926 = vpack.c.b16 %v1478, %v1474
    %v1927 = vpack.c.b16 %v1483, %v1479
    %v1928 = vpack.c.b16 %v1484, %v1480
    %v1929 = vpack.c.b16 %v1485, %v1481
    %v1930 = vpack.c.b16 %v1486, %v1482
    %v1931 = vpack.c.b16 %v1491, %v1487
    %v1932 = vpack.c.b16 %v1492, %v1488
    %v1933 = vpack.c.b16 %v1493, %v1489
    %v1934 = vpack.c.b16 %v1494, %v1490
    %v1935 = vpack.c.b16 %v1499, %v1495
    %v1936 = vpack.c.b16 %v1500, %v1496
    %v1937 = vpack.c.b16 %v1501, %v1497
    %v1938 = vpack.c.b16 %v1502, %v1498
    %v1939 = vpack.c.b16 %v1507, %v1503
    %v1940 = vpack.c.b16 %v1508, %v1504
    %v1941 = vpack.c.b16 %v1509, %v1505
    %v1942 = vpack.c.b16 %v1510, %v1506
    %v1943 = vpack.c.b16 %v1515, %v1511
    %v1944 = vpack.c.b16 %v1516, %v1512
    %v1945 = vpack.c.b16 %v1517, %v1513
    %v1946 = vpack.c.b16 %v1518, %v1514
    %v1947 = vpack.c.b16 %v1523, %v1519
    %v1948 = vpack.c.b16 %v1524, %v1520
    %v1949 = vpack.c.b16 %v1525, %v1521
    %v1950 = vpack.c.b16 %v1526, %v1522
    %v1951 = vpack.c.b16 %v1531, %v1527
    %v1952 = vpack.c.b16 %v1532, %v1528
    %v1953 = vpack.c.b16 %v1533, %v1529
    %v1954 = vpack.c.b16 %v1534, %v1530
    %v1955 = vpack.c.b16 %v1539, %v1535
    %v1956 = vpack.c.b16 %v1540, %v1536
    %v1957 = vpack.c.b16 %v1541, %v1537
    %v1958 = vpack.c.b16 %v1542, %v1538
    %v1959 = vpack.c.b16 %v1547, %v1543
    %v1960 = vpack.c.b16 %v1548, %v1544
    %v1961 = vpack.c.b16 %v1549, %v1545
    %v1962 = vpack.c.b16 %v1550, %v1546
    %v1963 = vpack.c.b16 %v1555, %v1551
    %v1964 = vpack.c.b16 %v1556, %v1552
    %v1965 = vpack.c.b16 %v1557, %v1553
    %v1966 = vpack.c.b16 %v1558, %v1554
    %v1967 = vpack.c.b16 %v1563, %v1559
    %v1968 = vpack.c.b16 %v1564, %v1560
    %v1969 = vpack.c.b16 %v1565, %v1561
    %v1970 = vpack.c.b16 %v1566, %v1562
    %v1971 = vpack.c.b16 %v1571, %v1567
    %v1972 = vpack.c.b16 %v1572, %v1568
    %v1973 = vpack.c.b16 %v1573, %v1569
    %v1974 = vpack.c.b16 %v1574, %v1570
    %v1975 = vpack.c.b16 %v1579, %v1575
    %v1976 = vpack.c.b16 %v1580, %v1576
    %v1977 = vpack.c.b16 %v1581, %v1577
    %v1978 = vpack.c.b16 %v1582, %v1578
    %v1979 = vpack.c.b16 %v1587, %v1583
    %v1980 = vpack.c.b16 %v1588, %v1584
    %v1981 = vpack.c.b16 %v1589, %v1585
    %v1982 = vpack.c.b16 %v1590, %v1586
    %v1983 = vpack.c.b16 %v1595, %v1591
    %v1984 = vpack.c.b16 %v1596, %v1592
    %v1985 = vpack.c.b16 %v1597, %v1593
    %v1986 = vpack.c.b16 %v1598, %v1594
    %v1987 = vpack.c.b16 %v1603, %v1599
    %v1988 = vpack.c.b16 %v1604, %v1600
    %v1989 = vpack.c.b16 %v1605, %v1601
    %v1990 = vpack.c.b16 %v1606, %v1602
    %v1991 = vpack.c.b16 %v1611, %v1607
    %v1992 = vpack.c.b16 %v1612, %v1608
    %v1993 = vpack.c.b16 %v1613, %v1609
    %v1994 = vpack.c.b16 %v1614, %v1610
    %v1995 = vpack.c.b16 %v1619, %v1615
    %v1996 = vpack.c.b16 %v1620, %v1616
    %v1997 = vpack.c.b16 %v1621, %v1617
    %v1998 = vpack.c.b16 %v1622, %v1618
    %v1999 = vpack.c.b16 %v1627, %v1623
    %v2000 = vpack.c.b16 %v1628, %v1624
    %v2001 = vpack.c.b16 %v1629, %v1625
    %v2002 = vpack.c.b16 %v1630, %v1626
    %v2003 = vpack.c.b16 %v1635, %v1631
    %v2004 = vpack.c.b16 %v1636, %v1632
    %v2005 = vpack.c.b16 %v1637, %v1633
    %v2006 = vpack.c.b16 %v1638, %v1634
    %v2007 = vpack.c.b16 %v1643, %v1639
    %v2008 = vpack.c.b16 %v1644, %v1640
    %v2009 = vpack.c.b16 %v1645, %v1641
    %v2010 = vpack.c.b16 %v1646, %v1642
    %v2011 = vpack.c.b16 %v1651, %v1647
    %v2012 = vpack.c.b16 %v1652, %v1648
    %v2013 = vpack.c.b16 %v1653, %v1649
    %v2014 = vpack.c.b16 %v1654, %v1650
    %v2015 = vpack.c.b16 %v1659, %v1655
    %v2016 = vpack.c.b16 %v1660, %v1656
    %v2017 = vpack.c.b16 %v1661, %v1657
    %v2018 = vpack.c.b16 %v1662, %v1658
    %v2019 = vpack.c.b16 %v1667, %v1663
    %v2020 = vpack.c.b16 %v1668, %v1664
    %v2021 = vpack.c.b16 %v1669, %v1665
    %v2022 = vpack.c.b16 %v1670, %v1666
    %v2023 = vpack.c.b16 %v1675, %v1671
    %v2024 = vpack.c.b16 %v1676, %v1672
    %v2025 = vpack.c.b16 %v1677, %v1673
    %v2026 = vpack.c.b16 %v1678, %v1674
    %v2027 = vpack.c.b16 %v1683, %v1679
    %v2028 = vpack.c.b16 %v1684, %v1680
    %v2029 = vpack.c.b16 %v1685, %v1681
    %v2030 = vpack.c.b16 %v1686, %v1682
    %v2031 = vpack.c.b16 %v1691, %v1687
    %v2032 = vpack.c.b16 %v1692, %v1688
    %v2033 = vpack.c.b16 %v1693, %v1689
    %v2034 = vpack.c.b16 %v1694, %v1690
    %v2035 = vpack.c.b16 %v1699, %v1695
    %v2036 = vpack.c.b16 %v1700, %v1696
    %v2037 = vpack.c.b16 %v1701, %v1697
    %v2038 = vpack.c.b16 %v1702, %v1698
    %v2039 = vpack.c.b16 %v1707, %v1703
    %v2040 = vpack.c.b16 %v1708, %v1704
    %v2041 = vpack.c.b16 %v1709, %v1705
    %v2042 = vpack.c.b16 %v1710, %v1706
    %v2043 = vpack.c.b16 %v1715, %v1711
    %v2044 = vpack.c.b16 %v1716, %v1712
    %v2045 = vpack.c.b16 %v1717, %v1713
    %v2046 = vpack.c.b16 %v1718, %v1714
    %v2047 = vpack.c.b16 %v1723, %v1719
    %v2048 = vpack.c.b16 %v1724, %v1720
    %v2049 = vpack.c.b16 %v1725, %v1721
    %v2050 = vpack.c.b16 %v1726, %v1722
    %v2051 = vpack.c.b16 %v1731, %v1727
    %v2052 = vpack.c.b16 %v1732, %v1728
    %v2053 = vpack.c.b16 %v1733, %v1729
    %v2054 = vpack.c.b16 %v1734, %v1730
    %v2055 = vpack.c.b16 %v1739, %v1735
    %v2056 = vpack.c.b16 %v1740, %v1736
    %v2057 = vpack.c.b16 %v1741, %v1737
    %v2058 = vpack.c.b16 %v1742, %v1738
    %v2059 = vpack.c.b16 %v1747, %v1743
    %v2060 = vpack.c.b16 %v1748, %v1744
    %v2061 = vpack.c.b16 %v1749, %v1745
    %v2062 = vpack.c.b16 %v1750, %v1746
    %v2063 = vpack.c.b16 %v1755, %v1751
    %v2064 = vpack.c.b16 %v1756, %v1752
    %v2065 = vpack.c.b16 %v1757, %v1753
    %v2066 = vpack.c.b16 %v1758, %v1754
    %v2067 = vpack.c.b16 %v1763, %v1759
    %v2068 = vpack.c.b16 %v1764, %v1760
    %v2069 = vpack.c.b16 %v1765, %v1761
    %v2070 = vpack.c.b16 %v1766, %v1762
    %v2071 = vpack.c.b16 %v1771, %v1767
    %v2072 = vpack.c.b16 %v1772, %v1768
    %v2073 = vpack.c.b16 %v1773, %v1769
    %v2074 = vpack.c.b16 %v1774, %v1770
    %v2075 = vpack.c.b16 %v1779, %v1775
    %v2076 = vpack.c.b16 %v1780, %v1776
    %v2077 = vpack.c.b16 %v1781, %v1777
    %v2078 = vpack.c.b16 %v1782, %v1778
    %v2079 = vpack.c.b16 %v1787, %v1783
    %v2080 = vpack.c.b16 %v1788, %v1784
    %v2081 = vpack.c.b16 %v1789, %v1785
    %v2082 = vpack.c.b16 %v1790, %v1786
    %v2083 = vpack.c.b16 %v1795, %v1791
    %v2084 = vpack.c.b16 %v1796, %v1792
    %v2085 = vpack.c.b16 %v1797, %v1793
    %v2086 = vpack.c.b16 %v1798, %v1794
    %v2087 = vpack.c.b16 %v1803, %v1799
    %v2088 = vpack.c.b16 %v1804, %v1800
    %v2089 = vpack.c.b16 %v1805, %v1801
    %v2090 = vpack.c.b16 %v1806, %v1802
    %v2091 = vpack.c.b16 %v1811, %v1807
    %v2092 = vpack.c.b16 %v1812, %v1808
    %v2093 = vpack.c.b16 %v1813, %v1809
    %v2094 = vpack.c.b16 %v1814, %v1810
    %v2095 = vpack.c.b16 %v1819, %v1815
    %v2096 = vpack.c.b16 %v1820, %v1816
    %v2097 = vpack.c.b16 %v1821, %v1817
    %v2098 = vpack.c.b16 %v1822, %v1818
    %v2099 = vpack.c.b16 %v1827, %v1823
    %v2100 = vpack.c.b16 %v1828, %v1824
    %v2101 = vpack.c.b16 %v1829, %v1825
    %v2102 = vpack.c.b16 %v1830, %v1826
    %v2103 = vpack.c.b16 %v1835, %v1831
    %v2104 = vpack.c.b16 %v1836, %v1832
    %v2105 = vpack.c.b16 %v1837, %v1833
    %v2106 = vpack.c.b16 %v1838, %v1834
    %v2107 = vpack.c.b16 %v1843, %v1839
    %v2108 = vpack.c.b16 %v1844, %v1840
    %v2109 = vpack.c.b16 %v1845, %v1841
    %v2110 = vpack.c.b16 %v1846, %v1842
    %v2111 = vpack.c.b16 %v1851, %v1847
    %v2112 = vpack.c.b16 %v1852, %v1848
    %v2113 = vpack.c.b16 %v1853, %v1849
    %v2114 = vpack.c.b16 %v1854, %v1850
    %v2115 = vpack.c.b16 %v1859, %v1855
    %v2116 = vpack.c.b16 %v1860, %v1856
    %v2117 = vpack.c.b16 %v1861, %v1857
    %v2118 = vpack.c.b16 %v1862, %v1858
    %2375 = vmatprep.subr.bf16.mxu0 %v1892
    %2376 = vmatpush1.bf16.msra.mxu0 %v1891
    %2377 = vmatprep.subr.bf16.mxu0 %v1888
    %2378 = vmatpush1.bf16.msra.mxu0 %v1887
    %2379 = vmatprep.subr.bf16.mxu0 %v1884
    %2380 = vmatpush1.bf16.msra.mxu0 %v1883
    %2381 = vmatprep.subr.bf16.mxu0 %v1880
    %2382 = vmatpush1.bf16.msra.mxu0 %v1879
    %2383 = vmatprep.subr.bf16.mxu0 %v1876
    %2384 = vmatpush1.bf16.msra.mxu0 %v1875
    %2385 = vmatprep.subr.bf16.mxu0 %v1872
    %2386 = vmatpush1.bf16.msra.mxu0 %v1871
    %2387 = vmatprep.subr.bf16.mxu0 %v1868
    %2388 = vmatpush1.bf16.msra.mxu0 %v1867
    %2389 = vmatprep.subr.bf16.mxu0 %v1864
    %2390 = vmatpush1.bf16.msra.mxu0 %v1863
    %2391 = vmatprep.subr.bf16.mxu0 %v1924
    %2392 = vmatpush2.bf16.msra.mxu0 %v1923
    %2393 = vmatprep.subr.bf16.mxu0 %v1920
    %2394 = vmatpush2.bf16.msra.mxu0 %v1919
    %2395 = vmatprep.subr.bf16.mxu0 %v1916
    %2396 = vmatpush2.bf16.msra.mxu0 %v1915
    %2397 = vmatprep.subr.bf16.mxu0 %v1912
    %2398 = vmatpush2.bf16.msra.mxu0 %v1911
    %2399 = vmatprep.subr.bf16.mxu0 %v1908
    %2400 = vmatpush2.bf16.msra.mxu0 %v1907
    %2401 = vmatprep.subr.bf16.mxu0 %v1904
    %2402 = vmatpush2.bf16.msra.mxu0 %v1903
    %2403 = vmatprep.subr.bf16.mxu0 %v1900
    %2404 = vmatpush2.bf16.msra.mxu0 %v1899
    %2405 = vmatprep.subr.bf16.mxu0 %v1896
    %2406 = vmatpush2.bf16.msra.mxu0 %v1895
    %2407 = vmatprep.mubr.bf16.mxu0 %v810
    %2408 = vmatmul.mubr.bf16.gmra.mxu0 %v809
    %v2409 = vpop.f32.mrf.mxu0
    %v2410 = vadd.f32 %v1078, %v2409
    %v2411 = vpop.f32.mrf.mxu0
    %v2412 = vadd.f32 %v1082, %v2411
    %v2413 = vpop.f32.mrf.mxu0
    %v2414 = vadd.f32 %v1078, %v2413
    %v2415 = vpop.f32.mrf.mxu0
    %v2416 = vadd.f32 %v1082, %v2415
    %2417 = vdwg.mxu0
    %2418 = vmatprep.subr.bf16.mxu0 %v1956
    %2419 = vmatpush1.bf16.msra.mxu0 %v1955
    %2420 = vmatprep.subr.bf16.mxu0 %v1952
    %2421 = vmatpush1.bf16.msra.mxu0 %v1951
    %2422 = vmatprep.subr.bf16.mxu0 %v1948
    %2423 = vmatpush1.bf16.msra.mxu0 %v1947
    %2424 = vmatprep.subr.bf16.mxu0 %v1944
    %2425 = vmatpush1.bf16.msra.mxu0 %v1943
    %2426 = vmatprep.subr.bf16.mxu0 %v1940
    %2427 = vmatpush1.bf16.msra.mxu0 %v1939
    %2428 = vmatprep.subr.bf16.mxu0 %v1936
    %2429 = vmatpush1.bf16.msra.mxu0 %v1935
    %2430 = vmatprep.subr.bf16.mxu0 %v1932
    %2431 = vmatpush1.bf16.msra.mxu0 %v1931
    %2432 = vmatprep.subr.bf16.mxu0 %v1928
    %2433 = vmatpush1.bf16.msra.mxu0 %v1927
    %2434 = vmatprep.subr.bf16.mxu0 %v1988
    %2435 = vmatpush2.bf16.msra.mxu0 %v1987
    %2436 = vmatprep.subr.bf16.mxu0 %v1984
    %2437 = vmatpush2.bf16.msra.mxu0 %v1983
    %2438 = vmatprep.subr.bf16.mxu0 %v1980
    %2439 = vmatpush2.bf16.msra.mxu0 %v1979
    %2440 = vmatprep.subr.bf16.mxu0 %v1976
    %2441 = vmatpush2.bf16.msra.mxu0 %v1975
    %2442 = vmatprep.subr.bf16.mxu0 %v1972
    %2443 = vmatpush2.bf16.msra.mxu0 %v1971
    %2444 = vmatprep.subr.bf16.mxu0 %v1968
    %2445 = vmatpush2.bf16.msra.mxu0 %v1967
    %2446 = vmatprep.subr.bf16.mxu0 %v1964
    %2447 = vmatpush2.bf16.msra.mxu0 %v1963
    %2448 = vmatprep.subr.bf16.mxu0 %v1960
    %2449 = vmatpush2.bf16.msra.mxu0 %v1959
    %2450 = vmatprep.mubr.bf16.mxu0 %v812
    %2451 = vmatmul.mubr.bf16.gmra.mxu0 %v811
    %v2452 = vpop.f32.mrf.mxu0
    %v2453 = vadd.f32 %v2410, %v2452
    %v2454 = vpop.f32.mrf.mxu0
    %v2455 = vadd.f32 %v2412, %v2454
    %v2456 = vpop.f32.mrf.mxu0
    %v2457 = vadd.f32 %v2414, %v2456
    %v2458 = vpop.f32.mrf.mxu0
    %v2459 = vadd.f32 %v2416, %v2458
    %2460 = vdwg.mxu0
    %2461 = vmatprep.subr.bf16.mxu0 %v2020
    %2462 = vmatpush1.bf16.msra.mxu0 %v2019
    %2463 = vmatprep.subr.bf16.mxu0 %v2016
    %2464 = vmatpush1.bf16.msra.mxu0 %v2015
    %2465 = vmatprep.subr.bf16.mxu0 %v2012
    %2466 = vmatpush1.bf16.msra.mxu0 %v2011
    %2467 = vmatprep.subr.bf16.mxu0 %v2008
    %2468 = vmatpush1.bf16.msra.mxu0 %v2007
    %2469 = vmatprep.subr.bf16.mxu0 %v2004
    %2470 = vmatpush1.bf16.msra.mxu0 %v2003
    %2471 = vmatprep.subr.bf16.mxu0 %v2000
    %2472 = vmatpush1.bf16.msra.mxu0 %v1999
    %2473 = vmatprep.subr.bf16.mxu0 %v1996
    %2474 = vmatpush1.bf16.msra.mxu0 %v1995
    %2475 = vmatprep.subr.bf16.mxu0 %v1992
    %2476 = vmatpush1.bf16.msra.mxu0 %v1991
    %2477 = vmatprep.subr.bf16.mxu0 %v2052
    %2478 = vmatpush2.bf16.msra.mxu0 %v2051
    %2479 = vmatprep.subr.bf16.mxu0 %v2048
    %2480 = vmatpush2.bf16.msra.mxu0 %v2047
    %2481 = vmatprep.subr.bf16.mxu0 %v2044
    %2482 = vmatpush2.bf16.msra.mxu0 %v2043
    %2483 = vmatprep.subr.bf16.mxu0 %v2040
    %2484 = vmatpush2.bf16.msra.mxu0 %v2039
    %2485 = vmatprep.subr.bf16.mxu0 %v2036
    %2486 = vmatpush2.bf16.msra.mxu0 %v2035
    %2487 = vmatprep.subr.bf16.mxu0 %v2032
    %2488 = vmatpush2.bf16.msra.mxu0 %v2031
    %2489 = vmatprep.subr.bf16.mxu0 %v2028
    %2490 = vmatpush2.bf16.msra.mxu0 %v2027
    %2491 = vmatprep.subr.bf16.mxu0 %v2024
    %2492 = vmatpush2.bf16.msra.mxu0 %v2023
    %2493 = vmatprep.mubr.bf16.mxu0 %v814
    %2494 = vmatmul.mubr.bf16.gmra.mxu0 %v813
    %v2495 = vpop.f32.mrf.mxu0
    %v2496 = vadd.f32 %v2453, %v2495
    %v2497 = vpop.f32.mrf.mxu0
    %v2498 = vadd.f32 %v2455, %v2497
    %v2499 = vpop.f32.mrf.mxu0
    %v2500 = vadd.f32 %v2457, %v2499
    %v2501 = vpop.f32.mrf.mxu0
    %v2502 = vadd.f32 %v2459, %v2501
    %2503 = vdwg.mxu0
    %2504 = vmatprep.subr.bf16.mxu0 %v2084
    %2505 = vmatpush1.bf16.msra.mxu0 %v2083
    %2506 = vmatprep.subr.bf16.mxu0 %v2080
    %2507 = vmatpush1.bf16.msra.mxu0 %v2079
    %2508 = vmatprep.subr.bf16.mxu0 %v2076
    %2509 = vmatpush1.bf16.msra.mxu0 %v2075
    %2510 = vmatprep.subr.bf16.mxu0 %v2072
    %2511 = vmatpush1.bf16.msra.mxu0 %v2071
    %2512 = vmatprep.subr.bf16.mxu0 %v2068
    %2513 = vmatpush1.bf16.msra.mxu0 %v2067
    %2514 = vmatprep.subr.bf16.mxu0 %v2064
    %2515 = vmatpush1.bf16.msra.mxu0 %v2063
    %2516 = vmatprep.subr.bf16.mxu0 %v2060
    %2517 = vmatpush1.bf16.msra.mxu0 %v2059
    %2518 = vmatprep.subr.bf16.mxu0 %v2056
    %2519 = vmatpush1.bf16.msra.mxu0 %v2055
    %2520 = vmatprep.subr.bf16.mxu0 %v2116
    %2521 = vmatpush2.bf16.msra.mxu0 %v2115
    %2522 = vmatprep.subr.bf16.mxu0 %v2112
    %2523 = vmatpush2.bf16.msra.mxu0 %v2111
    %2524 = vmatprep.subr.bf16.mxu0 %v2108
    %2525 = vmatpush2.bf16.msra.mxu0 %v2107
    %2526 = vmatprep.subr.bf16.mxu0 %v2104
    %2527 = vmatpush2.bf16.msra.mxu0 %v2103
    %2528 = vmatprep.subr.bf16.mxu0 %v2100
    %2529 = vmatpush2.bf16.msra.mxu0 %v2099
    %2530 = vmatprep.subr.bf16.mxu0 %v2096
    %2531 = vmatpush2.bf16.msra.mxu0 %v2095
    %2532 = vmatprep.subr.bf16.mxu0 %v2092
    %2533 = vmatpush2.bf16.msra.mxu0 %v2091
    %2534 = vmatprep.subr.bf16.mxu0 %v2088
    %2535 = vmatpush2.bf16.msra.mxu0 %v2087
    %2536 = vmatprep.mubr.bf16.mxu0 %v816
    %2537 = vmatmul.mubr.bf16.gmra.mxu0 %v815
    %v2538 = vpop.f32.mrf.mxu0
    %v2539 = vadd.f32 %v2496, %v2538
    %v2540 = vpop.f32.mrf.mxu0
    %v2541 = vadd.f32 %v2498, %v2540
    %v2542 = vpop.f32.mrf.mxu0
    %v2543 = vadd.f32 %v2500, %v2542
    %v2544 = vpop.f32.mrf.mxu0
    %v2545 = vadd.f32 %v2502, %v2544
    %2546 = vdwg.mxu0
    %2547 = vmatprep.subr.bf16.mxu0 %v1894
    %2548 = vmatpush1.bf16.msra.mxu0 %v1893
    %2549 = vmatprep.subr.bf16.mxu0 %v1890
    %2550 = vmatpush1.bf16.msra.mxu0 %v1889
    %2551 = vmatprep.subr.bf16.mxu0 %v1886
    %2552 = vmatpush1.bf16.msra.mxu0 %v1885
    %2553 = vmatprep.subr.bf16.mxu0 %v1882
    %2554 = vmatpush1.bf16.msra.mxu0 %v1881
    %2555 = vmatprep.subr.bf16.mxu0 %v1878
    %2556 = vmatpush1.bf16.msra.mxu0 %v1877
    %2557 = vmatprep.subr.bf16.mxu0 %v1874
    %2558 = vmatpush1.bf16.msra.mxu0 %v1873
    %2559 = vmatprep.subr.bf16.mxu0 %v1870
    %2560 = vmatpush1.bf16.msra.mxu0 %v1869
    %2561 = vmatprep.subr.bf16.mxu0 %v1866
    %2562 = vmatpush1.bf16.msra.mxu0 %v1865
    %2563 = vmatprep.subr.bf16.mxu0 %v1926
    %2564 = vmatpush2.bf16.msra.mxu0 %v1925
    %2565 = vmatprep.subr.bf16.mxu0 %v1922
    %2566 = vmatpush2.bf16.msra.mxu0 %v1921
    %2567 = vmatprep.subr.bf16.mxu0 %v1918
    %2568 = vmatpush2.bf16.msra.mxu0 %v1917
    %2569 = vmatprep.subr.bf16.mxu0 %v1914
    %2570 = vmatpush2.bf16.msra.mxu0 %v1913
    %2571 = vmatprep.subr.bf16.mxu0 %v1910
    %2572 = vmatpush2.bf16.msra.mxu0 %v1909
    %2573 = vmatprep.subr.bf16.mxu0 %v1906
    %2574 = vmatpush2.bf16.msra.mxu0 %v1905
    %2575 = vmatprep.subr.bf16.mxu0 %v1902
    %2576 = vmatpush2.bf16.msra.mxu0 %v1901
    %2577 = vmatprep.subr.bf16.mxu0 %v1898
    %2578 = vmatpush2.bf16.msra.mxu0 %v1897
    %2579 = vmatprep.mubr.bf16.mxu0 %v810
    %2580 = vmatmul.mubr.bf16.gmra.mxu0 %v809
    %v2581 = vpop.f32.mrf.mxu0
    %v2582 = vadd.f32 %v1086, %v2581
    %v2583 = vpop.f32.mrf.mxu0
    %v2584 = vadd.f32 %v1090, %v2583
    %v2585 = vpop.f32.mrf.mxu0
    %v2586 = vadd.f32 %v1086, %v2585
    %v2587 = vpop.f32.mrf.mxu0
    %v2588 = vadd.f32 %v1090, %v2587
    %2589 = vdwg.mxu0
    %2590 = vmatprep.subr.bf16.mxu0 %v1958
    %2591 = vmatpush1.bf16.msra.mxu0 %v1957
    %2592 = vmatprep.subr.bf16.mxu0 %v1954
    %2593 = vmatpush1.bf16.msra.mxu0 %v1953
    %2594 = vmatprep.subr.bf16.mxu0 %v1950
    %2595 = vmatpush1.bf16.msra.mxu0 %v1949
    %2596 = vmatprep.subr.bf16.mxu0 %v1946
    %2597 = vmatpush1.bf16.msra.mxu0 %v1945
    %2598 = vmatprep.subr.bf16.mxu0 %v1942
    %2599 = vmatpush1.bf16.msra.mxu0 %v1941
    %2600 = vmatprep.subr.bf16.mxu0 %v1938
    %2601 = vmatpush1.bf16.msra.mxu0 %v1937
    %2602 = vmatprep.subr.bf16.mxu0 %v1934
    %2603 = vmatpush1.bf16.msra.mxu0 %v1933
    %2604 = vmatprep.subr.bf16.mxu0 %v1930
    %2605 = vmatpush1.bf16.msra.mxu0 %v1929
    %2606 = vmatprep.subr.bf16.mxu0 %v1990
    %2607 = vmatpush2.bf16.msra.mxu0 %v1989
    %2608 = vmatprep.subr.bf16.mxu0 %v1986
    %2609 = vmatpush2.bf16.msra.mxu0 %v1985
    %2610 = vmatprep.subr.bf16.mxu0 %v1982
    %2611 = vmatpush2.bf16.msra.mxu0 %v1981
    %2612 = vmatprep.subr.bf16.mxu0 %v1978
    %2613 = vmatpush2.bf16.msra.mxu0 %v1977
    %2614 = vmatprep.subr.bf16.mxu0 %v1974
    %2615 = vmatpush2.bf16.msra.mxu0 %v1973
    %2616 = vmatprep.subr.bf16.mxu0 %v1970
    %2617 = vmatpush2.bf16.msra.mxu0 %v1969
    %2618 = vmatprep.subr.bf16.mxu0 %v1966
    %2619 = vmatpush2.bf16.msra.mxu0 %v1965
    %2620 = vmatprep.subr.bf16.mxu0 %v1962
    %2621 = vmatpush2.bf16.msra.mxu0 %v1961
    %2622 = vmatprep.mubr.bf16.mxu0 %v812
    %2623 = vmatmul.mubr.bf16.gmra.mxu0 %v811
    %v2624 = vpop.f32.mrf.mxu0
    %v2625 = vadd.f32 %v2582, %v2624
    %v2626 = vpop.f32.mrf.mxu0
    %v2627 = vadd.f32 %v2584, %v2626
    %v2628 = vpop.f32.mrf.mxu0
    %v2629 = vadd.f32 %v2586, %v2628
    %v2630 = vpop.f32.mrf.mxu0
    %v2631 = vadd.f32 %v2588, %v2630
    %2632 = vdwg.mxu0
    %2633 = vmatprep.subr.bf16.mxu0 %v2022
    %2634 = vmatpush1.bf16.msra.mxu0 %v2021
    %2635 = vmatprep.subr.bf16.mxu0 %v2018
    %2636 = vmatpush1.bf16.msra.mxu0 %v2017
    %2637 = vmatprep.subr.bf16.mxu0 %v2014
    %2638 = vmatpush1.bf16.msra.mxu0 %v2013
    %2639 = vmatprep.subr.bf16.mxu0 %v2010
    %2640 = vmatpush1.bf16.msra.mxu0 %v2009
    %2641 = vmatprep.subr.bf16.mxu0 %v2006
    %2642 = vmatpush1.bf16.msra.mxu0 %v2005
    %2643 = vmatprep.subr.bf16.mxu0 %v2002
    %2644 = vmatpush1.bf16.msra.mxu0 %v2001
    %2645 = vmatprep.subr.bf16.mxu0 %v1998
    %2646 = vmatpush1.bf16.msra.mxu0 %v1997
    %2647 = vmatprep.subr.bf16.mxu0 %v1994
    %2648 = vmatpush1.bf16.msra.mxu0 %v1993
    %2649 = vmatprep.subr.bf16.mxu0 %v2054
    %2650 = vmatpush2.bf16.msra.mxu0 %v2053
    %2651 = vmatprep.subr.bf16.mxu0 %v2050
    %2652 = vmatpush2.bf16.msra.mxu0 %v2049
    %2653 = vmatprep.subr.bf16.mxu0 %v2046
    %2654 = vmatpush2.bf16.msra.mxu0 %v2045
    %2655 = vmatprep.subr.bf16.mxu0 %v2042
    %2656 = vmatpush2.bf16.msra.mxu0 %v2041
    %2657 = vmatprep.subr.bf16.mxu0 %v2038
    %2658 = vmatpush2.bf16.msra.mxu0 %v2037
    %2659 = vmatprep.subr.bf16.mxu0 %v2034
    %2660 = vmatpush2.bf16.msra.mxu0 %v2033
    %2661 = vmatprep.subr.bf16.mxu0 %v2030
    %2662 = vmatpush2.bf16.msra.mxu0 %v2029
    %2663 = vmatprep.subr.bf16.mxu0 %v2026
    %2664 = vmatpush2.bf16.msra.mxu0 %v2025
    %2665 = vmatprep.mubr.bf16.mxu0 %v814
    %2666 = vmatmul.mubr.bf16.gmra.mxu0 %v813
    %v2667 = vpop.f32.mrf.mxu0
    %v2668 = vadd.f32 %v2625, %v2667
    %v2669 = vpop.f32.mrf.mxu0
    %v2670 = vadd.f32 %v2627, %v2669
    %v2671 = vpop.f32.mrf.mxu0
    %v2672 = vadd.f32 %v2629, %v2671
    %v2673 = vpop.f32.mrf.mxu0
    %v2674 = vadd.f32 %v2631, %v2673
    %2675 = vdwg.mxu0
    %2676 = vmatprep.subr.bf16.mxu0 %v2086
    %2677 = vmatpush1.bf16.msra.mxu0 %v2085
    %2678 = vmatprep.subr.bf16.mxu0 %v2082
    %2679 = vmatpush1.bf16.msra.mxu0 %v2081
    %2680 = vmatprep.subr.bf16.mxu0 %v2078
    %2681 = vmatpush1.bf16.msra.mxu0 %v2077
    %2682 = vmatprep.subr.bf16.mxu0 %v2074
    %2683 = vmatpush1.bf16.msra.mxu0 %v2073
    %2684 = vmatprep.subr.bf16.mxu0 %v2070
    %2685 = vmatpush1.bf16.msra.mxu0 %v2069
    %2686 = vmatprep.subr.bf16.mxu0 %v2066
    %2687 = vmatpush1.bf16.msra.mxu0 %v2065
    %2688 = vmatprep.subr.bf16.mxu0 %v2062
    %2689 = vmatpush1.bf16.msra.mxu0 %v2061
    %2690 = vmatprep.subr.bf16.mxu0 %v2058
    %2691 = vmatpush1.bf16.msra.mxu0 %v2057
    %2692 = vmatprep.subr.bf16.mxu0 %v2118
    %2693 = vmatpush2.bf16.msra.mxu0 %v2117
    %2694 = vmatprep.subr.bf16.mxu0 %v2114
    %2695 = vmatpush2.bf16.msra.mxu0 %v2113
    %2696 = vmatprep.subr.bf16.mxu0 %v2110
    %2697 = vmatpush2.bf16.msra.mxu0 %v2109
    %2698 = vmatprep.subr.bf16.mxu0 %v2106
    %2699 = vmatpush2.bf16.msra.mxu0 %v2105
    %2700 = vmatprep.subr.bf16.mxu0 %v2102
    %2701 = vmatpush2.bf16.msra.mxu0 %v2101
    %2702 = vmatprep.subr.bf16.mxu0 %v2098
    %2703 = vmatpush2.bf16.msra.mxu0 %v2097
    %2704 = vmatprep.subr.bf16.mxu0 %v2094
    %2705 = vmatpush2.bf16.msra.mxu0 %v2093
    %2706 = vmatprep.subr.bf16.mxu0 %v2090
    %2707 = vmatpush2.bf16.msra.mxu0 %v2089
    %2708 = vmatprep.mubr.bf16.mxu0 %v816
    %2709 = vmatmul.mubr.bf16.gmra.mxu0 %v815
    %v2710 = vpop.f32.mrf.mxu0
    %v2711 = vadd.f32 %v2668, %v2710
    %v2712 = vpop.f32.mrf.mxu0
    %v2713 = vadd.f32 %v2670, %v2712
    %v2714 = vpop.f32.mrf.mxu0
    %v2715 = vadd.f32 %v2672, %v2714
    %v2716 = vpop.f32.mrf.mxu0
    %v2717 = vadd.f32 %v2674, %v2716
    %2718 = vdwg.mxu0
    %v2719 = vmax.f32 %v2539, 0.0
    %v2720 = vmax.f32 %v2541, 0.0
    %v2721 = vmax.f32 %v2711, 0.0
    %v2722 = vmax.f32 %v2713, 0.0
    %v2723 = vmax.f32 %v2543, 0.0
    %v2724 = vmax.f32 %v2545, 0.0
    %v2725 = vmax.f32 %v2715, 0.0
    %v2726 = vmax.f32 %v2717, 0.0
    %v2727 = vpack.c.bf16 %v2723, %v2719
    %v2728 = vpack.c.bf16 %v2724, %v2720
    %v2729 = vpack.c.bf16 %v2725, %v2721
    %v2730 = vpack.c.bf16 %v2726, %v2722
    %v2731 = vld [vmem:[#allocation10] sm:$0xf]
    %v2732 = vld [vmem:[#allocation10 + $0x4] sm:$0xf]
    %v2733 = vld [vmem:[#allocation10 + $0x8] sm:$0xf]
    %v2734 = vld [vmem:[#allocation10 + $0xc] sm:$0xf]
    %v2735 = vld [vmem:[#allocation10 + $0x10] sm:$0xf]
    %v2736 = vld [vmem:[#allocation10 + $0x14] sm:$0xf]
    %v2737 = vld [vmem:[#allocation10 + $0x18] sm:$0xf]
    %v2738 = vld [vmem:[#allocation10 + $0x1c] sm:$0xf]
    %v2739 = vld [vmem:[#allocation10 + $0x20] sm:$0xf]
    %v2740 = vld [vmem:[#allocation10 + $0x24] sm:$0xf]
    %v2741 = vld [vmem:[#allocation10 + $0x28] sm:$0xf]
    %v2742 = vld [vmem:[#allocation10 + $0x2c] sm:$0xf]
    %v2743 = vld [vmem:[#allocation10 + $0x30] sm:$0xf]
    %v2744 = vld [vmem:[#allocation10 + $0x34] sm:$0xf]
    %v2745 = vld [vmem:[#allocation10 + $0x38] sm:$0xf]
    %v2746 = vld [vmem:[#allocation10 + $0x3c] sm:$0xf]
    %v2747 = vld [vmem:[#allocation10 + $0x40] sm:$0xf]
    %v2748 = vld [vmem:[#allocation10 + $0x44] sm:$0xf]
    %v2749 = vld [vmem:[#allocation10 + $0x48] sm:$0xf]
    %v2750 = vld [vmem:[#allocation10 + $0x4c] sm:$0xf]
    %v2751 = vld [vmem:[#allocation10 + $0x50] sm:$0xf]
    %v2752 = vld [vmem:[#allocation10 + $0x54] sm:$0xf]
    %v2753 = vld [vmem:[#allocation10 + $0x58] sm:$0xf]
    %v2754 = vld [vmem:[#allocation10 + $0x5c] sm:$0xf]
    %v2755 = vld [vmem:[#allocation10 + $0x60] sm:$0xf]
    %v2756 = vld [vmem:[#allocation10 + $0x64] sm:$0xf]
    %v2757 = vld [vmem:[#allocation10 + $0x68] sm:$0xf]
    %v2758 = vld [vmem:[#allocation10 + $0x6c] sm:$0xf]
    %v2759 = vld [vmem:[#allocation10 + $0x70] sm:$0xf]
    %v2760 = vld [vmem:[#allocation10 + $0x74] sm:$0xf]
    %v2761 = vld [vmem:[#allocation10 + $0x78] sm:$0xf]
    %v2762 = vld [vmem:[#allocation10 + $0x7c] sm:$0xf]
    %v2763 = vld [vmem:[#allocation10 + $0x80] sm:$0xf]
    %v2764 = vld [vmem:[#allocation10 + $0x84] sm:$0xf]
    %v2765 = vld [vmem:[#allocation10 + $0x88] sm:$0xf]
    %v2766 = vld [vmem:[#allocation10 + $0x8c] sm:$0xf]
    %v2767 = vld [vmem:[#allocation10 + $0x90] sm:$0xf]
    %v2768 = vld [vmem:[#allocation10 + $0x94] sm:$0xf]
    %v2769 = vld [vmem:[#allocation10 + $0x98] sm:$0xf]
    %v2770 = vld [vmem:[#allocation10 + $0x9c] sm:$0xf]
    %v2771 = vld [vmem:[#allocation10 + $0xa0] sm:$0xf]
    %v2772 = vld [vmem:[#allocation10 + $0xa4] sm:$0xf]
    %v2773 = vld [vmem:[#allocation10 + $0xa8] sm:$0xf]
    %v2774 = vld [vmem:[#allocation10 + $0xac] sm:$0xf]
    %v2775 = vld [vmem:[#allocation10 + $0xb0] sm:$0xf]
    %v2776 = vld [vmem:[#allocation10 + $0xb4] sm:$0xf]
    %v2777 = vld [vmem:[#allocation10 + $0xb8] sm:$0xf]
    %v2778 = vld [vmem:[#allocation10 + $0xbc] sm:$0xf]
    %v2779 = vld [vmem:[#allocation10 + $0xc0] sm:$0xf]
    %v2780 = vld [vmem:[#allocation10 + $0xc4] sm:$0xf]
    %v2781 = vld [vmem:[#allocation10 + $0xc8] sm:$0xf]
    %v2782 = vld [vmem:[#allocation10 + $0xcc] sm:$0xf]
    %v2783 = vld [vmem:[#allocation10 + $0xd0] sm:$0xf]
    %v2784 = vld [vmem:[#allocation10 + $0xd4] sm:$0xf]
    %v2785 = vld [vmem:[#allocation10 + $0xd8] sm:$0xf]
    %v2786 = vld [vmem:[#allocation10 + $0xdc] sm:$0xf]
    %v2787 = vld [vmem:[#allocation10 + $0xe0] sm:$0xf]
    %v2788 = vld [vmem:[#allocation10 + $0xe4] sm:$0xf]
    %v2789 = vld [vmem:[#allocation10 + $0xe8] sm:$0xf]
    %v2790 = vld [vmem:[#allocation10 + $0xec] sm:$0xf]
    %v2791 = vld [vmem:[#allocation10 + $0xf0] sm:$0xf]
    %v2792 = vld [vmem:[#allocation10 + $0xf4] sm:$0xf]
    %v2793 = vld [vmem:[#allocation10 + $0xf8] sm:$0xf]
    %v2794 = vld [vmem:[#allocation10 + $0xfc] sm:$0xf]
    %v2795 = vld [vmem:[%s6] sm:$0x1]
    %v2797 = vlaneseq
    %v2798 = vshrl.u32 %v2797, 7
    %v2799 = vsub.s32 0, %v2798
    %v2800 = vrot.slane %v2795, %v2799
    %v2866 = vunpack.c.l.b16 %v2731
    %v2867 = vunpack.c.l.b16 %v2732
    %v2868 = vunpack.c.l.b16 %v2733
    %v2869 = vunpack.c.l.b16 %v2734
    %v2870 = vunpack.c.l.b16 %v2735
    %v2871 = vunpack.c.l.b16 %v2736
    %v2872 = vunpack.c.l.b16 %v2737
    %v2873 = vunpack.c.l.b16 %v2738
    %v2874 = vunpack.c.l.b16 %v2739
    %v2875 = vunpack.c.l.b16 %v2740
    %v2876 = vunpack.c.l.b16 %v2741
    %v2877 = vunpack.c.l.b16 %v2742
    %v2878 = vunpack.c.l.b16 %v2743
    %v2879 = vunpack.c.l.b16 %v2744
    %v2880 = vunpack.c.l.b16 %v2745
    %v2881 = vunpack.c.l.b16 %v2746
    %v2882 = vunpack.c.l.b16 %v2747
    %v2883 = vunpack.c.l.b16 %v2748
    %v2884 = vunpack.c.l.b16 %v2749
    %v2885 = vunpack.c.l.b16 %v2750
    %v2886 = vunpack.c.l.b16 %v2751
    %v2887 = vunpack.c.l.b16 %v2752
    %v2888 = vunpack.c.l.b16 %v2753
    %v2889 = vunpack.c.l.b16 %v2754
    %v2890 = vunpack.c.l.b16 %v2755
    %v2891 = vunpack.c.l.b16 %v2756
    %v2892 = vunpack.c.l.b16 %v2757
    %v2893 = vunpack.c.l.b16 %v2758
    %v2894 = vunpack.c.l.b16 %v2759
    %v2895 = vunpack.c.l.b16 %v2760
    %v2896 = vunpack.c.l.b16 %v2761
    %v2897 = vunpack.c.l.b16 %v2762
    %v2898 = vunpack.c.l.b16 %v2763
    %v2899 = vunpack.c.l.b16 %v2764
    %v2900 = vunpack.c.l.b16 %v2765
    %v2901 = vunpack.c.l.b16 %v2766
    %v2902 = vunpack.c.l.b16 %v2767
    %v2903 = vunpack.c.l.b16 %v2768
    %v2904 = vunpack.c.l.b16 %v2769
    %v2905 = vunpack.c.l.b16 %v2770
    %v2906 = vunpack.c.l.b16 %v2771
    %v2907 = vunpack.c.l.b16 %v2772
    %v2908 = vunpack.c.l.b16 %v2773
    %v2909 = vunpack.c.l.b16 %v2774
    %v2910 = vunpack.c.l.b16 %v2775
    %v2911 = vunpack.c.l.b16 %v2776
    %v2912 = vunpack.c.l.b16 %v2777
    %v2913 = vunpack.c.l.b16 %v2778
    %v2914 = vunpack.c.l.b16 %v2779
    %v2915 = vunpack.c.l.b16 %v2780
    %v2916 = vunpack.c.l.b16 %v2781
    %v2917 = vunpack.c.l.b16 %v2782
    %v2918 = vunpack.c.l.b16 %v2783
    %v2919 = vunpack.c.l.b16 %v2784
    %v2920 = vunpack.c.l.b16 %v2785
    %v2921 = vunpack.c.l.b16 %v2786
    %v2922 = vunpack.c.l.b16 %v2787
    %v2923 = vunpack.c.l.b16 %v2788
    %v2924 = vunpack.c.l.b16 %v2789
    %v2925 = vunpack.c.l.b16 %v2790
    %v2926 = vunpack.c.l.b16 %v2791
    %v2927 = vunpack.c.l.b16 %v2792
    %v2928 = vunpack.c.l.b16 %v2793
    %v2929 = vunpack.c.l.b16 %v2794
    %v2930 = vpack.c.b16 %v2867, %v2866
    %v2931 = vpack.c.b16 %v2869, %v2868
    %v2932 = vpack.c.b16 %v2871, %v2870
    %v2933 = vpack.c.b16 %v2873, %v2872
    %v2934 = vpack.c.b16 %v2875, %v2874
    %v2935 = vpack.c.b16 %v2877, %v2876
    %v2936 = vpack.c.b16 %v2879, %v2878
    %v2937 = vpack.c.b16 %v2881, %v2880
    %v2938 = vpack.c.b16 %v2883, %v2882
    %v2939 = vpack.c.b16 %v2885, %v2884
    %v2940 = vpack.c.b16 %v2887, %v2886
    %v2941 = vpack.c.b16 %v2889, %v2888
    %v2942 = vpack.c.b16 %v2891, %v2890
    %v2943 = vpack.c.b16 %v2893, %v2892
    %v2944 = vpack.c.b16 %v2895, %v2894
    %v2945 = vpack.c.b16 %v2897, %v2896
    %v2946 = vpack.c.b16 %v2899, %v2898
    %v2947 = vpack.c.b16 %v2901, %v2900
    %v2948 = vpack.c.b16 %v2903, %v2902
    %v2949 = vpack.c.b16 %v2905, %v2904
    %v2950 = vpack.c.b16 %v2907, %v2906
    %v2951 = vpack.c.b16 %v2909, %v2908
    %v2952 = vpack.c.b16 %v2911, %v2910
    %v2953 = vpack.c.b16 %v2913, %v2912
    %v2954 = vpack.c.b16 %v2915, %v2914
    %v2955 = vpack.c.b16 %v2917, %v2916
    %v2956 = vpack.c.b16 %v2919, %v2918
    %v2957 = vpack.c.b16 %v2921, %v2920
    %v2958 = vpack.c.b16 %v2923, %v2922
    %v2959 = vpack.c.b16 %v2925, %v2924
    %v2960 = vpack.c.b16 %v2927, %v2926
    %v2961 = vpack.c.b16 %v2929, %v2928
    %2994 = vmatprep.subr.bf16.mxu0 0
    %2995 = vmatpush1.bf16.msra.mxu0 %v2937
    %2996 = vmatprep.subr.bf16.mxu0 0
    %2997 = vmatpush1.bf16.msra.mxu0 %v2936
    %2998 = vmatprep.subr.bf16.mxu0 0
    %2999 = vmatpush1.bf16.msra.mxu0 %v2935
    %3000 = vmatprep.subr.bf16.mxu0 0
    %3001 = vmatpush1.bf16.msra.mxu0 %v2934
    %3002 = vmatprep.subr.bf16.mxu0 0
    %3003 = vmatpush1.bf16.msra.mxu0 %v2933
    %3004 = vmatprep.subr.bf16.mxu0 0
    %3005 = vmatpush1.bf16.msra.mxu0 %v2932
    %3006 = vmatprep.subr.bf16.mxu0 0
    %3007 = vmatpush1.bf16.msra.mxu0 %v2931
    %3008 = vmatprep.subr.bf16.mxu0 0
    %3009 = vmatpush1.bf16.msra.mxu0 %v2930
    %3010 = vmatprep.subr.bf16.mxu0 0
    %3011 = vmatpush2.bf16.msra.mxu0 %v2945
    %3012 = vmatprep.subr.bf16.mxu0 0
    %3013 = vmatpush2.bf16.msra.mxu0 %v2944
    %3014 = vmatprep.subr.bf16.mxu0 0
    %3015 = vmatpush2.bf16.msra.mxu0 %v2943
    %3016 = vmatprep.subr.bf16.mxu0 0
    %3017 = vmatpush2.bf16.msra.mxu0 %v2942
    %3018 = vmatprep.subr.bf16.mxu0 0
    %3019 = vmatpush2.bf16.msra.mxu0 %v2941
    %3020 = vmatprep.subr.bf16.mxu0 0
    %3021 = vmatpush2.bf16.msra.mxu0 %v2940
    %3022 = vmatprep.subr.bf16.mxu0 0
    %3023 = vmatpush2.bf16.msra.mxu0 %v2939
    %3024 = vmatprep.subr.bf16.mxu0 0
    %3025 = vmatpush2.bf16.msra.mxu0 %v2938
    %3026 = vmatprep.mubr.bf16.mxu0 %v2728
    %3027 = vmatmul.mubr.bf16.gmra.mxu0 %v2727
    %v3028 = vpop.f32.mrf.mxu0
    %v3029 = vadd.f32 %v2800, %v3028
    %v3030 = vpop.f32.mrf.mxu0
    %v3031 = vpop.f32.mrf.mxu0
    %v3032 = vadd.f32 %v2800, %v3031
    %v3033 = vpop.f32.mrf.mxu0
    %3034 = vdwg.mxu0
    %3035 = vmatprep.subr.bf16.mxu0 0
    %3036 = vmatpush1.bf16.msra.mxu0 %v2953
    %3037 = vmatprep.subr.bf16.mxu0 0
    %3038 = vmatpush1.bf16.msra.mxu0 %v2952
    %3039 = vmatprep.subr.bf16.mxu0 0
    %3040 = vmatpush1.bf16.msra.mxu0 %v2951
    %3041 = vmatprep.subr.bf16.mxu0 0
    %3042 = vmatpush1.bf16.msra.mxu0 %v2950
    %3043 = vmatprep.subr.bf16.mxu0 0
    %3044 = vmatpush1.bf16.msra.mxu0 %v2949
    %3045 = vmatprep.subr.bf16.mxu0 0
    %3046 = vmatpush1.bf16.msra.mxu0 %v2948
    %3047 = vmatprep.subr.bf16.mxu0 0
    %3048 = vmatpush1.bf16.msra.mxu0 %v2947
    %3049 = vmatprep.subr.bf16.mxu0 0
    %3050 = vmatpush1.bf16.msra.mxu0 %v2946
    %3051 = vmatprep.subr.bf16.mxu0 0
    %3052 = vmatpush2.bf16.msra.mxu0 %v2961
    %3053 = vmatprep.subr.bf16.mxu0 0
    %3054 = vmatpush2.bf16.msra.mxu0 %v2960
    %3055 = vmatprep.subr.bf16.mxu0 0
    %3056 = vmatpush2.bf16.msra.mxu0 %v2959
    %3057 = vmatprep.subr.bf16.mxu0 0
    %3058 = vmatpush2.bf16.msra.mxu0 %v2958
    %3059 = vmatprep.subr.bf16.mxu0 0
    %3060 = vmatpush2.bf16.msra.mxu0 %v2957
    %3061 = vmatprep.subr.bf16.mxu0 0
    %3062 = vmatpush2.bf16.msra.mxu0 %v2956
    %3063 = vmatprep.subr.bf16.mxu0 0
    %3064 = vmatpush2.bf16.msra.mxu0 %v2955
    %3065 = vmatprep.subr.bf16.mxu0 0
    %3066 = vmatpush2.bf16.msra.mxu0 %v2954
    %3067 = vmatprep.mubr.bf16.mxu0 %v2730
    %3068 = vmatmul.mubr.bf16.gmra.mxu0 %v2729
    %v3069 = vpop.f32.mrf.mxu0
    %v3070 = vadd.f32 %v3029, %v3069
    %v3071 = vpop.f32.mrf.mxu0
    %v3072 = vpop.f32.mrf.mxu0
    %v3073 = vadd.f32 %v3032, %v3072
    %v3074 = vpop.f32.mrf.mxu0
    %3075 = vdwg.mxu0
    %v3076 = vmax.f32 %v3070, 0.0
    %v3077 = vmax.f32 %v3073, 0.0
    %v3078 = vpack.c.bf16 %v3077, %v3076
    %v3079 = vld [vmem:[#allocation11] sm:$0xf]
    %v3080 = vld [vmem:[#allocation11 + $0x4] sm:$0xf]
    %v3081 = vld [vmem:[#allocation11 + $0x8] sm:$0xf]
    %v3082 = vld [vmem:[#allocation11 + $0xc] sm:$0xf]
    %v3083 = vld [vmem:[#allocation11 + $0x10] sm:$0xf]
    %v3084 = vld [vmem:[#allocation11 + $0x14] sm:$0xf]
    %v3085 = vld [vmem:[#allocation11 + $0x18] sm:$0xf]
    %v3086 = vld [vmem:[#allocation11 + $0x1c] sm:$0xf]
    %v3087 = vld [vmem:[#allocation11 + $0x20] sm:$0xf]
    %v3088 = vld [vmem:[#allocation11 + $0x24] sm:$0xf]
    %v3089 = vld [vmem:[#allocation11 + $0x28] sm:$0xf]
    %v3090 = vld [vmem:[#allocation11 + $0x2c] sm:$0xf]
    %v3091 = vld [vmem:[#allocation11 + $0x30] sm:$0xf]
    %v3092 = vld [vmem:[#allocation11 + $0x34] sm:$0xf]
    %v3093 = vld [vmem:[#allocation11 + $0x38] sm:$0xf]
    %v3094 = vld [vmem:[#allocation11 + $0x3c] sm:$0xf]
    %v3095 = vld [vmem:[%s8] sm:$0x1]
    %v3097 = vlaneseq
    %v3098 = vshrl.u32 %v3097, 7
    %v3099 = vsub.s32 0, %v3098
    %v3100 = vrot.slane %v3095, %v3099
    %v3118 = vunpack.c.l.b16 %v3079
    %v3119 = vunpack.c.l.b16 %v3080
    %v3120 = vunpack.c.l.b16 %v3081
    %v3121 = vunpack.c.l.b16 %v3082
    %v3122 = vunpack.c.l.b16 %v3083
    %v3123 = vunpack.c.l.b16 %v3084
    %v3124 = vunpack.c.l.b16 %v3085
    %v3125 = vunpack.c.l.b16 %v3086
    %v3126 = vunpack.c.l.b16 %v3087
    %v3127 = vunpack.c.l.b16 %v3088
    %v3128 = vunpack.c.l.b16 %v3089
    %v3129 = vunpack.c.l.b16 %v3090
    %v3130 = vunpack.c.l.b16 %v3091
    %v3131 = vunpack.c.l.b16 %v3092
    %v3132 = vunpack.c.l.b16 %v3093
    %v3133 = vunpack.c.l.b16 %v3094
    %v3134 = vpack.c.b16 %v3119, %v3118
    %v3135 = vpack.c.b16 %v3121, %v3120
    %v3136 = vpack.c.b16 %v3123, %v3122
    %v3137 = vpack.c.b16 %v3125, %v3124
    %v3138 = vpack.c.b16 %v3127, %v3126
    %v3139 = vpack.c.b16 %v3129, %v3128
    %v3140 = vpack.c.b16 %v3131, %v3130
    %v3141 = vpack.c.b16 %v3133, %v3132
    %3150 = vmatprep.subr.bf16.mxu0 0
    %3151 = vmatpush1.bf16.msra.mxu0 %v3141
    %3152 = vmatprep.subr.bf16.mxu0 0
    %3153 = vmatpush1.bf16.msra.mxu0 %v3140
    %3154 = vmatprep.subr.bf16.mxu0 0
    %3155 = vmatpush1.bf16.msra.mxu0 %v3139
    %3156 = vmatprep.subr.bf16.mxu0 0
    %3157 = vmatpush1.bf16.msra.mxu0 %v3138
    %3158 = vmatprep.subr.bf16.mxu0 0
    %3159 = vmatpush1.bf16.msra.mxu0 %v3137
    %3160 = vmatprep.subr.bf16.mxu0 0
    %3161 = vmatpush1.bf16.msra.mxu0 %v3136
    %3162 = vmatprep.subr.bf16.mxu0 0
    %3163 = vmatpush1.bf16.msra.mxu0 %v3135
    %3164 = vmatprep.subr.bf16.mxu0 0
    %3165 = vmatpush1.bf16.msra.mxu0 %v3134
    %3166 = vmatprep.subr.bf16.mxu0 0
    %3167 = vmatpush2.bf16.msra.mxu0 0
    %3168 = vmatprep.subr.bf16.mxu0 0
    %3169 = vmatpush2.bf16.msra.mxu0 0
    %3170 = vmatprep.subr.bf16.mxu0 0
    %3171 = vmatpush2.bf16.msra.mxu0 0
    %3172 = vmatprep.subr.bf16.mxu0 0
    %3173 = vmatpush2.bf16.msra.mxu0 0
    %3174 = vmatprep.subr.bf16.mxu0 0
    %3175 = vmatpush2.bf16.msra.mxu0 0
    %3176 = vmatprep.subr.bf16.mxu0 0
    %3177 = vmatpush2.bf16.msra.mxu0 0
    %3178 = vmatprep.subr.bf16.mxu0 0
    %3179 = vmatpush2.bf16.msra.mxu0 0
    %3180 = vmatprep.subr.bf16.mxu0 0
    %3181 = vmatpush2.bf16.msra.mxu0 0
    %3182 = vmatprep.mubr.bf16.mxu0 0
    %3183 = vmatmul.mubr.bf16.gmra.mxu0 %v3078
    %v3184 = vpop.f32.mrf.mxu0
    %v3185 = vadd.f32 %v3100, %v3184
    %v3186 = vpop.f32.mrf.mxu0
    %v3187 = vpop.f32.mrf.mxu0
    %v3188 = vadd.f32 %v3100, %v3187
    %v3189 = vpop.f32.mrf.mxu0
    %3190 = vdwg.mxu0
    %v3191 = vmax.f32 %v3185, 0.0
    %v3192 = vmax.f32 %v3188, 0.0
    %v3193 = vpack.c.bf16 %v3192, %v3191
    %v3194 = vld [vmem:[#allocation13] sm:$0xf]
    %v3195 = vld [vmem:[#allocation13 + $0x4] sm:$0xf]
    %v3196 = vld [vmem:[#allocation13 + $0x8] sm:$0xf]
    %v3197 = vld [vmem:[#allocation13 + $0xc] sm:$0xf]
    %v3198 = vld [vmem:[#allocation13 + $0x10] sm:$0xf]
    %v3199 = vld [vmem:[#allocation13 + $0x14] sm:$0xf]
    %v3200 = vld [vmem:[#allocation13 + $0x18] sm:$0xf]
    %v3201 = vld [vmem:[#allocation13 + $0x1c] sm:$0xf]
    %v3202 = vld [vmem:[#allocation13 + $0x20] sm:$0xf]
    %v3203 = vld [vmem:[#allocation13 + $0x24] sm:$0xf]
    %v3204 = vld [vmem:[#allocation13 + $0x28] sm:$0xf]
    %v3205 = vld [vmem:[#allocation13 + $0x2c] sm:$0xf]
    %v3206 = vld [vmem:[#allocation13 + $0x30] sm:$0xf]
    %v3207 = vld [vmem:[#allocation13 + $0x34] sm:$0xf]
    %v3208 = vld [vmem:[#allocation13 + $0x38] sm:$0xf]
    %v3209 = vld [vmem:[#allocation13 + $0x3c] sm:$0xf]
    %v3210 = vld [vmem:[%s10] sm:$0x1]
    %v3212 = vlaneseq
    %v3213 = vshrl.u32 %v3212, 7
    %v3214 = vsub.s32 0, %v3213
    %v3215 = vrot.slane %v3210, %v3214
    %v3233 = vunpack.c.l.b16 %v3194
    %v3234 = vunpack.c.l.b16 %v3195
    %v3235 = vunpack.c.l.b16 %v3196
    %v3236 = vunpack.c.l.b16 %v3197
    %v3237 = vunpack.c.l.b16 %v3198
    %v3238 = vunpack.c.l.b16 %v3199
    %v3239 = vunpack.c.l.b16 %v3200
    %v3240 = vunpack.c.l.b16 %v3201
    %v3241 = vunpack.c.l.b16 %v3202
    %v3242 = vunpack.c.l.b16 %v3203
    %v3243 = vunpack.c.l.b16 %v3204
    %v3244 = vunpack.c.l.b16 %v3205
    %v3245 = vunpack.c.l.b16 %v3206
    %v3246 = vunpack.c.l.b16 %v3207
    %v3247 = vunpack.c.l.b16 %v3208
    %v3248 = vunpack.c.l.b16 %v3209
    %v3249 = vpack.c.b16 %v3234, %v3233
    %v3250 = vpack.c.b16 %v3236, %v3235
    %v3251 = vpack.c.b16 %v3238, %v3237
    %v3252 = vpack.c.b16 %v3240, %v3239
    %v3253 = vpack.c.b16 %v3242, %v3241
    %v3254 = vpack.c.b16 %v3244, %v3243
    %v3255 = vpack.c.b16 %v3246, %v3245
    %v3256 = vpack.c.b16 %v3248, %v3247
    %3265 = vmatprep.subr.bf16.mxu0 0
    %3266 = vmatpush1.bf16.msra.mxu0 %v3256
    %3267 = vmatprep.subr.bf16.mxu0 0
    %3268 = vmatpush1.bf16.msra.mxu0 %v3255
    %3269 = vmatprep.subr.bf16.mxu0 0
    %3270 = vmatpush1.bf16.msra.mxu0 %v3254
    %3271 = vmatprep.subr.bf16.mxu0 0
    %3272 = vmatpush1.bf16.msra.mxu0 %v3253
    %3273 = vmatprep.subr.bf16.mxu0 0
    %3274 = vmatpush1.bf16.msra.mxu0 %v3252
    %3275 = vmatprep.subr.bf16.mxu0 0
    %3276 = vmatpush1.bf16.msra.mxu0 %v3251
    %3277 = vmatprep.subr.bf16.mxu0 0
    %3278 = vmatpush1.bf16.msra.mxu0 %v3250
    %3279 = vmatprep.subr.bf16.mxu0 0
    %3280 = vmatpush1.bf16.msra.mxu0 %v3249
    %3281 = vmatprep.subr.bf16.mxu0 0
    %3282 = vmatpush2.bf16.msra.mxu0 0
    %3283 = vmatprep.subr.bf16.mxu0 0
    %3284 = vmatpush2.bf16.msra.mxu0 0
    %3285 = vmatprep.subr.bf16.mxu0 0
    %3286 = vmatpush2.bf16.msra.mxu0 0
    %3287 = vmatprep.subr.bf16.mxu0 0
    %3288 = vmatpush2.bf16.msra.mxu0 0
    %3289 = vmatprep.subr.bf16.mxu0 0
    %3290 = vmatpush2.bf16.msra.mxu0 0
    %3291 = vmatprep.subr.bf16.mxu0 0
    %3292 = vmatpush2.bf16.msra.mxu0 0
    %3293 = vmatprep.subr.bf16.mxu0 0
    %3294 = vmatpush2.bf16.msra.mxu0 0
    %3295 = vmatprep.subr.bf16.mxu0 0
    %3296 = vmatpush2.bf16.msra.mxu0 0
    %3297 = vmatprep.mubr.bf16.mxu0 0
    %3298 = vmatmul.mubr.bf16.gmra.mxu0 %v3193
    %v3299 = vpop.f32.mrf.mxu0
    %v3300 = vadd.f32 %v3215, %v3299
    %v3301 = vpop.f32.mrf.mxu0
    %v3302 = vpop.f32.mrf.mxu0
    %v3303 = vadd.f32 %v3215, %v3302
    %v3304 = vpop.f32.mrf.mxu0
    %3305 = vdwg.mxu0
    %v3306 = vmax.f32 %v3300, 0.0
    %v3307 = vmax.f32 %v3303, 0.0
    %v3308 = vpack.c.bf16 %v3307, %v3306
    %v3309 = vld [vmem:[#allocation14] sm:$0xf]
    %v3310 = vld [vmem:[#allocation14 + $0x4] sm:$0xf]
    %v3311 = vld [vmem:[#allocation14 + $0x8] sm:$0xf]
    %v3312 = vld [vmem:[#allocation14 + $0xc] sm:$0xf]
    %v3313 = vld [vmem:[#allocation14 + $0x10] sm:$0xf]
    %v3314 = vld [vmem:[#allocation14 + $0x14] sm:$0xf]
    %v3315 = vld [vmem:[#allocation14 + $0x18] sm:$0xf]
    %v3316 = vld [vmem:[#allocation14 + $0x1c] sm:$0xf]
    %v3317 = vld [vmem:[#allocation14 + $0x20] sm:$0xf]
    %v3318 = vld [vmem:[#allocation14 + $0x24] sm:$0xf]
    %v3319 = vld [vmem:[#allocation14 + $0x28] sm:$0xf]
    %v3320 = vld [vmem:[#allocation14 + $0x2c] sm:$0xf]
    %v3321 = vld [vmem:[#allocation14 + $0x30] sm:$0xf]
    %v3322 = vld [vmem:[#allocation14 + $0x34] sm:$0xf]
    %v3323 = vld [vmem:[#allocation14 + $0x38] sm:$0xf]
    %v3324 = vld [vmem:[#allocation14 + $0x3c] sm:$0xf]
    %v3325 = vld [vmem:[%s12] sm:$0x1]
    %v3327 = vlaneseq
    %v3328 = vshrl.u32 %v3327, 7
    %v3329 = vsub.s32 0, %v3328
    %v3330 = vrot.slane %v3325, %v3329
    %v3348 = vunpack.c.l.b16 %v3309
    %v3349 = vunpack.c.l.b16 %v3310
    %v3350 = vunpack.c.l.b16 %v3311
    %v3351 = vunpack.c.l.b16 %v3312
    %v3352 = vunpack.c.l.b16 %v3313
    %v3353 = vunpack.c.l.b16 %v3314
    %v3354 = vunpack.c.l.b16 %v3315
    %v3355 = vunpack.c.l.b16 %v3316
    %v3356 = vunpack.c.l.b16 %v3317
    %v3357 = vunpack.c.l.b16 %v3318
    %v3358 = vunpack.c.l.b16 %v3319
    %v3359 = vunpack.c.l.b16 %v3320
    %v3360 = vunpack.c.l.b16 %v3321
    %v3361 = vunpack.c.l.b16 %v3322
    %v3362 = vunpack.c.l.b16 %v3323
    %v3363 = vunpack.c.l.b16 %v3324
    %v3364 = vpack.c.b16 %v3349, %v3348
    %v3365 = vpack.c.b16 %v3351, %v3350
    %v3366 = vpack.c.b16 %v3353, %v3352
    %v3367 = vpack.c.b16 %v3355, %v3354
    %v3368 = vpack.c.b16 %v3357, %v3356
    %v3369 = vpack.c.b16 %v3359, %v3358
    %v3370 = vpack.c.b16 %v3361, %v3360
    %v3371 = vpack.c.b16 %v3363, %v3362
    %3380 = vmatprep.subr.bf16.mxu0 0
    %3381 = vmatpush1.bf16.msra.mxu0 %v3371
    %3382 = vmatprep.subr.bf16.mxu0 0
    %3383 = vmatpush1.bf16.msra.mxu0 %v3370
    %3384 = vmatprep.subr.bf16.mxu0 0
    %3385 = vmatpush1.bf16.msra.mxu0 %v3369
    %3386 = vmatprep.subr.bf16.mxu0 0
    %3387 = vmatpush1.bf16.msra.mxu0 %v3368
    %3388 = vmatprep.subr.bf16.mxu0 0
    %3389 = vmatpush1.bf16.msra.mxu0 %v3367
    %3390 = vmatprep.subr.bf16.mxu0 0
    %3391 = vmatpush1.bf16.msra.mxu0 %v3366
    %3392 = vmatprep.subr.bf16.mxu0 0
    %3393 = vmatpush1.bf16.msra.mxu0 %v3365
    %3394 = vmatprep.subr.bf16.mxu0 0
    %3395 = vmatpush1.bf16.msra.mxu0 %v3364
    %3396 = vmatprep.subr.bf16.mxu0 0
    %3397 = vmatpush2.bf16.msra.mxu0 0
    %3398 = vmatprep.subr.bf16.mxu0 0
    %3399 = vmatpush2.bf16.msra.mxu0 0
    %3400 = vmatprep.subr.bf16.mxu0 0
    %3401 = vmatpush2.bf16.msra.mxu0 0
    %3402 = vmatprep.subr.bf16.mxu0 0
    %3403 = vmatpush2.bf16.msra.mxu0 0
    %3404 = vmatprep.subr.bf16.mxu0 0
    %3405 = vmatpush2.bf16.msra.mxu0 0
    %3406 = vmatprep.subr.bf16.mxu0 0
    %3407 = vmatpush2.bf16.msra.mxu0 0
    %3408 = vmatprep.subr.bf16.mxu0 0
    %3409 = vmatpush2.bf16.msra.mxu0 0
    %3410 = vmatprep.subr.bf16.mxu0 0
    %3411 = vmatpush2.bf16.msra.mxu0 0
    %3412 = vmatprep.mubr.bf16.mxu0 0
    %3413 = vmatmul.mubr.bf16.gmra.mxu0 %v3308
    %v3414 = vpop.f32.mrf.mxu0
    %v3415 = vadd.f32 %v3330, %v3414
    %v3416 = vpop.f32.mrf.mxu0
    %v3417 = vpop.f32.mrf.mxu0
    %v3418 = vadd.f32 %v3330, %v3417
    %v3419 = vpop.f32.mrf.mxu0
    %3420 = vdwg.mxu0
    %v3421 = vmax.f32 %v3415, 0.0
    %v3422 = vmax.f32 %v3418, 0.0
    %v3423 = vpack.c.bf16 %v3422, %v3421
    %v3424 = vld [vmem:[#allocation16] sm:$0xf]
    %v3425 = vld [vmem:[#allocation16 + $0x4] sm:$0xf]
    %v3426 = vld [vmem:[#allocation16 + $0x8] sm:$0xf]
    %v3427 = vld [vmem:[#allocation16 + $0xc] sm:$0xf]
    %v3428 = vld [vmem:[#allocation16 + $0x10] sm:$0xf]
    %v3429 = vld [vmem:[#allocation16 + $0x14] sm:$0xf]
    %v3430 = vld [vmem:[#allocation16 + $0x18] sm:$0xf]
    %v3431 = vld [vmem:[#allocation16 + $0x1c] sm:$0xf]
    %v3432 = vld [vmem:[#allocation16 + $0x20] sm:$0xf]
    %v3433 = vld [vmem:[#allocation16 + $0x24] sm:$0xf]
    %v3434 = vld [vmem:[#allocation16 + $0x28] sm:$0xf]
    %v3435 = vld [vmem:[#allocation16 + $0x2c] sm:$0xf]
    %v3436 = vld [vmem:[#allocation16 + $0x30] sm:$0xf]
    %v3437 = vld [vmem:[#allocation16 + $0x34] sm:$0xf]
    %v3438 = vld [vmem:[#allocation16 + $0x38] sm:$0xf]
    %v3439 = vld [vmem:[#allocation16 + $0x3c] sm:$0xf]
    %v3440 = vld [vmem:[%s14] sm:$0x1]
    %v3442 = vlaneseq
    %v3443 = vshrl.u32 %v3442, 7
    %v3444 = vsub.s32 0, %v3443
    %v3445 = vrot.slane %v3440, %v3444
    %v3463 = vunpack.c.l.b16 %v3424
    %v3464 = vunpack.c.l.b16 %v3425
    %v3465 = vunpack.c.l.b16 %v3426
    %v3466 = vunpack.c.l.b16 %v3427
    %v3467 = vunpack.c.l.b16 %v3428
    %v3468 = vunpack.c.l.b16 %v3429
    %v3469 = vunpack.c.l.b16 %v3430
    %v3470 = vunpack.c.l.b16 %v3431
    %v3471 = vunpack.c.l.b16 %v3432
    %v3472 = vunpack.c.l.b16 %v3433
    %v3473 = vunpack.c.l.b16 %v3434
    %v3474 = vunpack.c.l.b16 %v3435
    %v3475 = vunpack.c.l.b16 %v3436
    %v3476 = vunpack.c.l.b16 %v3437
    %v3477 = vunpack.c.l.b16 %v3438
    %v3478 = vunpack.c.l.b16 %v3439
    %v3479 = vpack.c.b16 %v3464, %v3463
    %v3480 = vpack.c.b16 %v3466, %v3465
    %v3481 = vpack.c.b16 %v3468, %v3467
    %v3482 = vpack.c.b16 %v3470, %v3469
    %v3483 = vpack.c.b16 %v3472, %v3471
    %v3484 = vpack.c.b16 %v3474, %v3473
    %v3485 = vpack.c.b16 %v3476, %v3475
    %v3486 = vpack.c.b16 %v3478, %v3477
    %3495 = vmatprep.subr.bf16.mxu0 0
    %3496 = vmatpush1.bf16.msra.mxu0 %v3486
    %3497 = vmatprep.subr.bf16.mxu0 0
    %3498 = vmatpush1.bf16.msra.mxu0 %v3485
    %3499 = vmatprep.subr.bf16.mxu0 0
    %3500 = vmatpush1.bf16.msra.mxu0 %v3484
    %3501 = vmatprep.subr.bf16.mxu0 0
    %3502 = vmatpush1.bf16.msra.mxu0 %v3483
    %3503 = vmatprep.subr.bf16.mxu0 0
    %3504 = vmatpush1.bf16.msra.mxu0 %v3482
    %3505 = vmatprep.subr.bf16.mxu0 0
    %3506 = vmatpush1.bf16.msra.mxu0 %v3481
    %3507 = vmatprep.subr.bf16.mxu0 0
    %3508 = vmatpush1.bf16.msra.mxu0 %v3480
    %3509 = vmatprep.subr.bf16.mxu0 0
    %3510 = vmatpush1.bf16.msra.mxu0 %v3479
    %3511 = vmatprep.subr.bf16.mxu0 0
    %3512 = vmatpush2.bf16.msra.mxu0 0
    %3513 = vmatprep.subr.bf16.mxu0 0
    %3514 = vmatpush2.bf16.msra.mxu0 0
    %3515 = vmatprep.subr.bf16.mxu0 0
    %3516 = vmatpush2.bf16.msra.mxu0 0
    %3517 = vmatprep.subr.bf16.mxu0 0
    %3518 = vmatpush2.bf16.msra.mxu0 0
    %3519 = vmatprep.subr.bf16.mxu0 0
    %3520 = vmatpush2.bf16.msra.mxu0 0
    %3521 = vmatprep.subr.bf16.mxu0 0
    %3522 = vmatpush2.bf16.msra.mxu0 0
    %3523 = vmatprep.subr.bf16.mxu0 0
    %3524 = vmatpush2.bf16.msra.mxu0 0
    %3525 = vmatprep.subr.bf16.mxu0 0
    %3526 = vmatpush2.bf16.msra.mxu0 0
    %3527 = vmatprep.mubr.bf16.mxu0 0
    %3528 = vmatmul.mubr.bf16.gmra.mxu0 %v3423
    %v3529 = vpop.f32.mrf.mxu0
    %v3530 = vadd.f32 %v3445, %v3529
    %v3531 = vpop.f32.mrf.mxu0
    %v3532 = vpop.f32.mrf.mxu0
    %v3533 = vadd.f32 %v3445, %v3532
    %v3534 = vpop.f32.mrf.mxu0
    %3535 = vdwg.mxu0
    %v3536 = vmax.f32 %v3530, 0.0
    %v3537 = vmax.f32 %v3533, 0.0
    %v3538 = vpack.c.bf16 %v3537, %v3536
    %v3539 = vld [vmem:[#allocation17] sm:$0xf]
    %v3540 = vld [vmem:[#allocation17 + $0x4] sm:$0xf]
    %v3541 = vld [vmem:[#allocation17 + $0x8] sm:$0xf]
    %v3542 = vld [vmem:[#allocation17 + $0xc] sm:$0xf]
    %v3543 = vld [vmem:[#allocation17 + $0x10] sm:$0xf]
    %v3544 = vld [vmem:[#allocation17 + $0x14] sm:$0xf]
    %v3545 = vld [vmem:[#allocation17 + $0x18] sm:$0xf]
    %v3546 = vld [vmem:[#allocation17 + $0x1c] sm:$0xf]
    %v3547 = vld [vmem:[#allocation17 + $0x20] sm:$0xf]
    %v3548 = vld [vmem:[#allocation17 + $0x24] sm:$0xf]
    %v3549 = vld [vmem:[#allocation17 + $0x28] sm:$0xf]
    %v3550 = vld [vmem:[#allocation17 + $0x2c] sm:$0xf]
    %v3551 = vld [vmem:[#allocation17 + $0x30] sm:$0xf]
    %v3552 = vld [vmem:[#allocation17 + $0x34] sm:$0xf]
    %v3553 = vld [vmem:[#allocation17 + $0x38] sm:$0xf]
    %v3554 = vld [vmem:[#allocation17 + $0x3c] sm:$0xf]
    %v3555 = vld [vmem:[%s16] sm:$0x1]
    %v3557 = vlaneseq
    %v3558 = vshrl.u32 %v3557, 7
    %v3559 = vsub.s32 0, %v3558
    %v3560 = vrot.slane %v3555, %v3559
    %v3578 = vunpack.c.l.b16 %v3539
    %v3579 = vunpack.c.l.b16 %v3540
    %v3580 = vunpack.c.l.b16 %v3541
    %v3581 = vunpack.c.l.b16 %v3542
    %v3582 = vunpack.c.l.b16 %v3543
    %v3583 = vunpack.c.l.b16 %v3544
    %v3584 = vunpack.c.l.b16 %v3545
    %v3585 = vunpack.c.l.b16 %v3546
    %v3586 = vunpack.c.l.b16 %v3547
    %v3587 = vunpack.c.l.b16 %v3548
    %v3588 = vunpack.c.l.b16 %v3549
    %v3589 = vunpack.c.l.b16 %v3550
    %v3590 = vunpack.c.l.b16 %v3551
    %v3591 = vunpack.c.l.b16 %v3552
    %v3592 = vunpack.c.l.b16 %v3553
    %v3593 = vunpack.c.l.b16 %v3554
    %v3594 = vpack.c.b16 %v3579, %v3578
    %v3595 = vpack.c.b16 %v3581, %v3580
    %v3596 = vpack.c.b16 %v3583, %v3582
    %v3597 = vpack.c.b16 %v3585, %v3584
    %v3598 = vpack.c.b16 %v3587, %v3586
    %v3599 = vpack.c.b16 %v3589, %v3588
    %v3600 = vpack.c.b16 %v3591, %v3590
    %v3601 = vpack.c.b16 %v3593, %v3592
    %3610 = vmatprep.subr.bf16.mxu0 0
    %3611 = vmatpush1.bf16.msra.mxu0 %v3601
    %3612 = vmatprep.subr.bf16.mxu0 0
    %3613 = vmatpush1.bf16.msra.mxu0 %v3600
    %3614 = vmatprep.subr.bf16.mxu0 0
    %3615 = vmatpush1.bf16.msra.mxu0 %v3599
    %3616 = vmatprep.subr.bf16.mxu0 0
    %3617 = vmatpush1.bf16.msra.mxu0 %v3598
    %3618 = vmatprep.subr.bf16.mxu0 0
    %3619 = vmatpush1.bf16.msra.mxu0 %v3597
    %3620 = vmatprep.subr.bf16.mxu0 0
    %3621 = vmatpush1.bf16.msra.mxu0 %v3596
    %3622 = vmatprep.subr.bf16.mxu0 0
    %3623 = vmatpush1.bf16.msra.mxu0 %v3595
    %3624 = vmatprep.subr.bf16.mxu0 0
    %3625 = vmatpush1.bf16.msra.mxu0 %v3594
    %3626 = vmatprep.subr.bf16.mxu0 0
    %3627 = vmatpush2.bf16.msra.mxu0 0
    %3628 = vmatprep.subr.bf16.mxu0 0
    %3629 = vmatpush2.bf16.msra.mxu0 0
    %3630 = vmatprep.subr.bf16.mxu0 0
    %3631 = vmatpush2.bf16.msra.mxu0 0
    %3632 = vmatprep.subr.bf16.mxu0 0
    %3633 = vmatpush2.bf16.msra.mxu0 0
    %3634 = vmatprep.subr.bf16.mxu0 0
    %3635 = vmatpush2.bf16.msra.mxu0 0
    %3636 = vmatprep.subr.bf16.mxu0 0
    %3637 = vmatpush2.bf16.msra.mxu0 0
    %3638 = vmatprep.subr.bf16.mxu0 0
    %3639 = vmatpush2.bf16.msra.mxu0 0
    %3640 = vmatprep.subr.bf16.mxu0 0
    %3641 = vmatpush2.bf16.msra.mxu0 0
    %3642 = vmatprep.mubr.bf16.mxu0 0
    %3643 = vmatmul.mubr.bf16.gmra.mxu0 %v3538
    %v3644 = vpop.f32.mrf.mxu0
    %v3645 = vadd.f32 %v3560, %v3644
    %v3646 = vpop.f32.mrf.mxu0
    %v3647 = vpop.f32.mrf.mxu0
    %v3648 = vadd.f32 %v3560, %v3647
    %v3649 = vpop.f32.mrf.mxu0
    %3650 = vdwg.mxu0
    %3651 = vst [vmem:[#allocation19] sm:$0xff] %v3645
    %3652 = vst [vmem:[#allocation19 + $0x8] sm:$0xff] %v3648
    // Predicated region
    $region110: #{tpu_custom_call.1} parent=1 // pred_check
      _
    $region111: #{tpu_custom_call.1} parent=1 // pred_check_branch
      %3654 = sbr.rel (0) target = $region113
    $region112: #{tpu_custom_call.1} parent=1 // pred_region
      %s3656 = ssub.s32 256, 256
      %3657 = vsyncadd [#allocation4], %s3656
      %s3658 = sshll.u32 [#allocation19], 4
      %s3659 = int_to_ptr.vmem [resolvable:$true] %s3658
      %3664 = dma.vmem_to_hbm [thread:$0]  %s3659, 256, %s17, [#allocation4], 128, 128, 8
    $region113: #{tpu_custom_call.1} parent=1 // pred_fallthru
      _
    // Predicated region
    $region114: #{tpu_custom_call.1} parent=1 // pred_check
      _
    $region115: #{tpu_custom_call.1} parent=1 // pred_check_branch
      %3666 = sbr.rel (0) target = $region117
    $region116: #{tpu_custom_call.1} parent=1 // pred_region
      %3667 = dma.done [#allocation4], 256
    $region117: #{tpu_custom_call.1} parent=1 // pred_fallthru
      _
    %3668 = vsyncpa [#allocation3], 1
    %3669 = vsyncpa [#allocation6], 1
    %3670 = vsyncpa [#allocation9], 1
    %3671 = vsyncpa [#allocation12], 1
    %3672 = vsyncpa [#allocation15], 1
    %3673 = vsyncpa [#allocation18], 1
    %3674 = vsyncpa [#allocation4], 1

</llo_original>
